<compile_context>
chip_gen: v7x
topology: tpu7x:2x2x1
jax: 0.10.0
libtpu: 0.0.40
codegen_flags: <defaults>
</compile_context>

<pallas_src>
import math

import jax
import jax.numpy as jnp
from jax.experimental import pallas as pl
from jax.experimental.pallas import tpu as pltpu

LEAKY_SLOPE = 0.01
LN_EPS = 1e-6
MASK_FILL = -1e9
_VMEM_LIMIT = 64 * 1024 * 1024     # <= physical VMEM on every generation (v7x = 64 MiB)


def _ln(x, gamma, beta):
    # PyTorch LayerNorm (biased variance, eps inside sqrt).  One-pass stats:
    # var = E[x^2] - E[x]^2 (clamped) so the f32 tile is swept once, not twice.
    mu = jnp.mean(x, axis=-1, keepdims=True)
    ms = jnp.mean(x * x, axis=-1, keepdims=True)
    var = jnp.maximum(ms - mu * mu, 0.0)
    return (x - mu) * jax.lax.rsqrt(var + LN_EPS) * gamma + beta


def _leaky(x):
    return jnp.where(x > 0, x, LEAKY_SLOPE * x)


def _bf16(x):
    return x.astype(jnp.bfloat16)


def _sigmoid(x):
    # Exact, overflow-safe sigmoid: exp argument is always <= 0.
    ex = jnp.exp(-jnp.abs(x))
    return jnp.where(x >= 0, 1.0, ex) / (1.0 + ex)


# ------------- K1: token encoder + online-softmax attention pooling ----------

def _encoder_pool_kernel(h_ref, m_ref,
                         g0_ref, be0_ref, w1_ref, b1_ref,
                         g1_ref, be1_ref, w2_ref, b2_ref, g2_ref, be2_ref,
                         wa1_ref, ba1_ref, ga_ref, bea_ref, wa2_ref, ba2_ref,
                         pooled_ref, m_sc, l_sc, acc_sc):
    li = pl.program_id(1)

    @pl.when(li == 0)
    def _():
        m_sc[...] = jnp.full_like(m_sc, -jnp.inf)
        l_sc[...] = jnp.zeros_like(l_sc)
        acc_sc[...] = jnp.zeros_like(acc_sc)

    # NOTE: h_V arrives as bf16 (halves HBM traffic); LN stats are f32.
    x = h_ref[0].astype(jnp.float32)                      # [TL, F]
    msk = m_ref[0]                                        # [1, TL]

    # input block: LN(F) -> Linear(F->H) -> LeakyReLU
    x = _ln(x, g0_ref[...], be0_ref[...])
    x = _leaky(jnp.dot(_bf16(x), w1_ref[...],
                       preferred_element_type=jnp.float32) + b1_ref[...])

    # hidden block: LN(H) -> (Dropout = id) -> Linear(H->H) -> LeakyReLU -> LN(H)
    x = _ln(x, g1_ref[...], be1_ref[...])
    x = _leaky(jnp.dot(_bf16(x), w2_ref[...],
                       preferred_element_type=jnp.float32) + b2_ref[...])
    x = _ln(x, g2_ref[...], be2_ref[...])                 # [TL, H] f32
    x_bf = _bf16(x)

    # ATFC (token-wise): Linear(H->64) -> LeakyReLU -> LN(64) -> Linear(64->heads)
    a = _leaky(jnp.dot(x_bf, wa1_ref[...],
                       preferred_element_type=jnp.float32) + ba1_ref[...])
    a = _ln(a, ga_ref[...], bea_ref[...])                 # [TL, 64]

    # transposed masked logits [heads, TL]: sequence on the 128-lane axis
    att_t = jax.lax.dot_general(
        wa2_ref[...], _bf16(a), (((0,), (1,)), ((), ())),
        preferred_element_type=jnp.float32) + ba2_ref[...]
    att_t = jnp.where(msk == 0.0, jnp.float32(MASK_FILL), att_t)

    # online softmax over the sequence + pooling accumulation
    m_prev = m_sc[...]                                    # [heads, 1]
    m_new = jnp.maximum(m_prev, jnp.max(att_t, axis=-1, keepdims=True))
    alpha = jnp.exp(m_prev - m_new)
    p = jnp.exp(att_t - m_new)                            # [heads, TL]
    l_sc[...] = alpha * l_sc[...] + jnp.sum(p, axis=-1, keepdims=True)
    acc_sc[...] = alpha * acc_sc[...] + jnp.dot(
        _bf16(p), x_bf, preferred_element_type=jnp.float32)
    m_sc[...] = m_new

    @pl.when(li == pl.num_programs(1) - 1)
    def _():
        pooled_ref[0] = (acc_sc[...] / l_sc[...]).astype(pooled_ref.dtype)


# ---------------------------- K2: head MLP (D -> D) --------------------------

def _head_mlp_kernel(v_ref, wo1_ref, bo1_ref, go_ref, beo_ref, z_ref):
    z = _leaky(jnp.dot(v_ref[...], wo1_ref[...],
                       preferred_element_type=jnp.float32) + bo1_ref[...])
    z_ref[...] = _bf16(_ln(z, go_ref[...], beo_ref[...]))


# ------------------- K3: label projection -> probabilities -------------------

def _label_proj_kernel(z_ref, wo2_ref, bo2_ref, p_ref):
    logits = jnp.dot(z_ref[...], wo2_ref[...],
                     preferred_element_type=jnp.float32) + bo2_ref[...]
    p_ref[...] = _sigmoid(logits)


# ---------------------- K4: hierarchical max over int8 CM --------------------

def _cm_max_kernel(p_ref, cm_ref, out_ref, acc_ref):
    j = pl.program_id(1)

    @pl.when(j == 0)
    def _():
        acc_ref[...] = jnp.zeros_like(acc_ref)

    p = p_ref[...]                                        # [B, TJ] f32
    # int8 -> int32 widen is a cheap unpack (no int->float convert); CM is the
    # binary GO hierarchy, so selecting p where CM!=0 (else 0) equals
    # max_j p[b,j]*CM[i,j].  Only one [B, TI, TJ] tile is live at a time.
    cm_nz = cm_ref[...].astype(jnp.int32) != 0            # [TI, TJ]
    vals = jnp.where(cm_nz[None, :, :], p[:, None, :], 0.0)
    acc_ref[...] = jnp.maximum(acc_ref[...], jnp.max(vals, axis=-1))

    @pl.when(j == pl.num_programs(1) - 1)
    def _():
        out_ref[...] = acc_ref[...]


# ---------------------------------- wrapper -----------------------------------

def _round_up(x, m):
    return -(-x // m) * m


def sprof_go_forward(h_V, mask, params, cm, *, seq_tile=None,
                     label_tile=512, cm_tile=512):
    B, L, F = h_V.shape
    H = params["w1"].shape[1]
    heads = params["wa2"].shape[1]
    D = params["wo1"].shape[0]
    C = cm.shape[0]

    # ---- wrapper-side glue: dtype casts, padding, reshapes ----
    h_bf = h_V.astype(jnp.bfloat16)                       # half the HBM bytes into K1
    mask = mask.astype(jnp.float32)

    if seq_tile is None:
        seq_tile = L if L <= 512 else 512
    TL = int(seq_tile)
    L_pad = _round_up(L, TL)
    NL = L_pad // TL
    assert TL % 128 == 0 or NL == 1, "seq_tile must be a multiple of 128"
    if L_pad != L:
        h_bf = jnp.pad(h_bf, ((0, 0), (0, L_pad - L), (0, 0)))
        mask = jnp.pad(mask, ((0, 0), (0, L_pad - L)))    # padded tokens masked out
    mask3 = mask.reshape(B, 1, L_pad)                     # lane-dense mask layout

    # Label tiles: K3 (TC) and K4 (TCM) are decoupled; both lane multiples.
    assert label_tile % 128 == 0 and cm_tile % 128 == 0
    TC = min(int(label_tile), _round_up(C, 128))
    TCM = min(int(cm_tile), _round_up(C, 128))
    C_pad = _round_up(C, math.lcm(TC, TCM))
    NC = C_pad // TC
    NM = C_pad // TCM

    wo2 = _bf16(params["wo2"])
    bo2 = params["bo2"].astype(jnp.float32)
    cm_i8 = (cm != 0).astype(jnp.int8)                    # binary GO hierarchy, 1/4 HBM
    if C_pad != C:
        wo2 = jnp.pad(wo2, ((0, 0), (0, C_pad - C)))
        bo2 = jnp.pad(bo2, ((0, C_pad - C),))
        cm_i8 = jnp.pad(cm_i8, ((0, C_pad - C), (0, C_pad - C)))

    def r(v):      # 1-D param -> [1, dim]
        return v.reshape(1, -1).astype(jnp.float32)

    def rc(v):     # 1-D param -> [dim, 1]
        return v.reshape(-1, 1).astype(jnp.float32)

    def cparams(sem):
        return pltpu.CompilerParams(dimension_semantics=sem,
                                    vmem_limit_bytes=_VMEM_LIMIT)

    # ---------- K1: fused encoder + masked online-softmax pooling ----------
    enc_inputs = [
        h_bf, mask3,
        r(params["g0"]), r(params["be0"]), _bf16(params["w1"]), r(params["b1"]),
        r(params["g1"]), r(params["be1"]), _bf16(params["w2"]), r(params["b2"]),
        r(params["g2"]), r(params["be2"]),
        _bf16(params["wa1"]), r(params["ba1"]), r(params["ga"]), r(params["bea"]),
        _bf16(params["wa2"]), rc(params["ba2"]),
    ]
    weight_specs = [pl.BlockSpec(w.shape, lambda b, l: (0, 0))
                    for w in enc_inputs[2:]]

    pooled = pl.pallas_call(
        _encoder_pool_kernel,
        out_shape=jax.ShapeDtypeStruct((B, heads, H), jnp.bfloat16),
        grid=(B, NL),
        in_specs=[pl.BlockSpec((1, TL, F), lambda b, l: (b, l, 0)),
                  pl.BlockSpec((1, 1, TL), lambda b, l: (b, 0, l))] + weight_specs,
        out_specs=pl.BlockSpec((1, heads, H), lambda b, l: (b, 0, 0)),
        scratch_shapes=[pltpu.VMEM((heads, 1), jnp.float32),   # running max
                        pltpu.VMEM((heads, 1), jnp.float32),   # running sum
                        pltpu.VMEM((heads, H), jnp.float32)],  # pooled accumulator
        compiler_params=cparams(("parallel", "arbitrary")),
    )(*enc_inputs)

    v = pooled.reshape(B, D)                 # torch.flatten(h_V, start_dim=1)

    # ---------- K2: D->D head MLP, computed exactly once ----------
    z = pl.pallas_call(
        _head_mlp_kernel,
        out_shape=jax.ShapeDtypeStruct((B, D), jnp.bfloat16),
        compiler_params=pltpu.CompilerParams(vmem_limit_bytes=_VMEM_LIMIT),
    )(v, _bf16(params["wo1"]), r(params["bo1"]), r(params["go"]), r(params["beo"]))

    # ---------- K3: label projection + sigmoid (label axis parallel) ----------
    p = pl.pallas_call(
        _label_proj_kernel,
        out_shape=jax.ShapeDtypeStruct((B, C_pad), jnp.float32),
        grid=(NC,),
        in_specs=[pl.BlockSpec((B, D), lambda c: (0, 0)),
                  pl.BlockSpec((D, TC), lambda c: (0, c)),
                  pl.BlockSpec((1, TC), lambda c: (0, c))],
        out_specs=pl.BlockSpec((B, TC), lambda c: (0, c)),
        compiler_params=cparams(("parallel",)),
    )(z, wo2, bo2.reshape(1, -1))

    # ---------- K4: hierarchical label propagation (max over CM) ----------
    out = pl.pallas_call(
        _cm_max_kernel,
        out_shape=jax.ShapeDtypeStruct((B, C_pad), jnp.float32),
        grid=(NM, NM),
        in_specs=[pl.BlockSpec((B, TCM), lambda i, j: (0, j)),
                  pl.BlockSpec((TCM, TCM), lambda i, j: (i, j))],
        out_specs=pl.BlockSpec((B, TCM), lambda i, j: (0, i)),
        scratch_shapes=[pltpu.VMEM((B, TCM), jnp.float32)],
        compiler_params=cparams(("parallel", "arbitrary")),
    )(p, cm_i8)

    return out[:, :C].astype(jnp.float32)


# ------------------------------ parameter setup -------------------------------

def _xavier_uniform(key, shape):
    fan_in, fan_out = shape
    bound = (6.0 / (fan_in + fan_out)) ** 0.5
    return jax.random.uniform(key, shape, jnp.float32, -bound, bound)


def init_params(key, feature_dim, hidden_dim, num_heads, label_size):
    D = num_heads * hidden_dim
    ks = jax.random.split(key, 8)
    p = {
        # input block
        "g0": jnp.ones((feature_dim,), jnp.float32),
        "be0": jnp.zeros((feature_dim,), jnp.float32),
        "w1": _xavier_uniform(ks[0], (feature_dim, hidden_dim)),
        "b1": jnp.zeros((hidden_dim,), jnp.float32),
        # hidden block
        "g1": jnp.ones((hidden_dim,), jnp.float32),
        "be1": jnp.zeros((hidden_dim,), jnp.float32),
        "w2": _xavier_uniform(ks[1], (hidden_dim, hidden_dim)),
        "b2": jnp.zeros((hidden_dim,), jnp.float32),
        "g2": jnp.ones((hidden_dim,), jnp.float32),
        "be2": jnp.zeros((hidden_dim,), jnp.float32),
        # ATFC
        "wa1": _xavier_uniform(ks[2], (hidden_dim, 64)),
        "ba1": jnp.zeros((64,), jnp.float32),
        "ga": jnp.ones((64,), jnp.float32),
        "bea": jnp.zeros((64,), jnp.float32),
        "wa2": _xavier_uniform(ks[3], (64, num_heads)),
        "ba2": jnp.zeros((num_heads,), jnp.float32),
        # output block
        "wo1": _xavier_uniform(ks[4], (D, D)),
        "bo1": jnp.zeros((D,), jnp.float32),
        "go": jnp.ones((D,), jnp.float32),
        "beo": jnp.zeros((D,), jnp.float32),
        "wo2": _xavier_uniform(ks[5], (D, label_size)),
        "bo2": jnp.zeros((label_size,), jnp.float32),
    }
    # TODO(synk): the real CM is the GO-hierarchy matrix loaded from
    # <task>_CM.npz; here a deterministic synthetic binary matrix with ones on
    # the diagonal stands in for it.
    cm = (jax.random.uniform(ks[6], (label_size, label_size)) < 0.05).astype(jnp.float32)
    cm = jnp.maximum(cm, jnp.eye(label_size, dtype=jnp.float32))
    return p, cm


if __name__ == "__main__":
    # Small shapes consistent with the module (defaults scaled down); chosen so
    # every tiled grid axis runs >1 tile (L: 2 tiles, K3: 2 tiles, K4: 2x2).
    B, L = 2, 256               # batch, sequence length
    FEATURE_DIM = 128           # module default 1024
    HIDDEN_DIM = 32             # module default 256
    NUM_HEADS = 8
    LABEL_SIZE = 256            # module: {'MF':790,'BP':4766,'CC':667}; scaled down

    key = jax.random.PRNGKey(0)
    k_p, k_x, k_m = jax.random.split(key, 3)

    params, cm = init_params(k_p, FEATURE_DIM, HIDDEN_DIM, NUM_HEADS, LABEL_SIZE)

    h_V = jax.random.normal(k_x, (B, L, FEATURE_DIM), jnp.float32)
    mask = (jax.random.uniform(k_m, (B, L)) > 0.25).astype(jnp.float32)
    mask = mask.at[:, 0].set(1.0)  # guarantee at least one valid token per sample

    out = sprof_go_forward(h_V, mask, params, cm,
                           seq_tile=128, label_tile=128, cm_tile=128)
    out = jax.block_until_ready(out)

    assert out.shape == (B, LABEL_SIZE), out.shape
    assert bool(jnp.all(jnp.isfinite(out)))
    assert bool(jnp.all(out >= 0.0)) and bool(jnp.all(out <= 1.0))
    print("KERNEL_OK")
</pallas_src>

<mosaic_0001>
module attributes {stable_mosaic.version = 11 : i64} {
  func.func @_encoder_pool_kernel(%arg0: i32, %arg1: i32, %arg2: memref<1x128x128xbf16, #tpu.memory_space<vmem>>, %arg3: memref<1x1x128xf32, #tpu.memory_space<vmem>>, %arg4: memref<1x128xf32, #tpu.memory_space<vmem>>, %arg5: memref<1x128xf32, #tpu.memory_space<vmem>>, %arg6: memref<128x32xbf16, #tpu.memory_space<vmem>>, %arg7: memref<1x32xf32, #tpu.memory_space<vmem>>, %arg8: memref<1x32xf32, #tpu.memory_space<vmem>>, %arg9: memref<1x32xf32, #tpu.memory_space<vmem>>, %arg10: memref<32x32xbf16, #tpu.memory_space<vmem>>, %arg11: memref<1x32xf32, #tpu.memory_space<vmem>>, %arg12: memref<1x32xf32, #tpu.memory_space<vmem>>, %arg13: memref<1x32xf32, #tpu.memory_space<vmem>>, %arg14: memref<32x64xbf16, #tpu.memory_space<vmem>>, %arg15: memref<1x64xf32, #tpu.memory_space<vmem>>, %arg16: memref<1x64xf32, #tpu.memory_space<vmem>>, %arg17: memref<1x64xf32, #tpu.memory_space<vmem>>, %arg18: memref<64x8xbf16, #tpu.memory_space<vmem>>, %arg19: memref<8x1xf32, #tpu.memory_space<vmem>>, %arg20: memref<1x8x32xbf16, #tpu.memory_space<vmem>>, %arg21: memref<8x1xf32, #tpu.memory_space<vmem>>, %arg22: memref<8x1xf32, #tpu.memory_space<vmem>>, %arg23: memref<8x32xf32, #tpu.memory_space<vmem>>) attributes {dimension_semantics = [#tpu.dimension_semantics<parallel>, #tpu.dimension_semantics<arbitrary>], iteration_bounds = array<i64: 2, 2>, scalar_prefetch = 0 : i64, scratch_operands = 3 : i64, tpu.core_type = #tpu.core_type<tc>, window_params = [{transform_indices = @transform_0, window_bounds = array<i64: 1, 128, 128>}, {transform_indices = @transform_1, window_bounds = array<i64: 1, 1, 128>}, {pipeline_mode = #tpu.pipeline_mode<synchronous>, transform_indices = @transform_2, window_bounds = array<i64: 1, 128>}, {pipeline_mode = #tpu.pipeline_mode<synchronous>, transform_indices = @transform_3, window_bounds = array<i64: 1, 128>}, {pipeline_mode = #tpu.pipeline_mode<synchronous>, transform_indices = @transform_4, window_bounds = array<i64: 128, 32>}, {pipeline_mode = #tpu.pipeline_mode<synchronous>, transform_indices = @transform_5, window_bounds = array<i64: 1, 32>}, {pipeline_mode = #tpu.pipeline_mode<synchronous>, transform_indices = @transform_6, window_bounds = array<i64: 1, 32>}, {pipeline_mode = #tpu.pipeline_mode<synchronous>, transform_indices = @transform_7, window_bounds = array<i64: 1, 32>}, {pipeline_mode = #tpu.pipeline_mode<synchronous>, transform_indices = @transform_8, window_bounds = array<i64: 32, 32>}, {pipeline_mode = #tpu.pipeline_mode<synchronous>, transform_indices = @transform_9, window_bounds = array<i64: 1, 32>}, {pipeline_mode = #tpu.pipeline_mode<synchronous>, transform_indices = @transform_10, window_bounds = array<i64: 1, 32>}, {pipeline_mode = #tpu.pipeline_mode<synchronous>, transform_indices = @transform_11, window_bounds = array<i64: 1, 32>}, {pipeline_mode = #tpu.pipeline_mode<synchronous>, transform_indices = @transform_12, window_bounds = array<i64: 32, 64>}, {pipeline_mode = #tpu.pipeline_mode<synchronous>, transform_indices = @transform_13, window_bounds = array<i64: 1, 64>}, {pipeline_mode = #tpu.pipeline_mode<synchronous>, transform_indices = @transform_14, window_bounds = array<i64: 1, 64>}, {pipeline_mode = #tpu.pipeline_mode<synchronous>, transform_indices = @transform_15, window_bounds = array<i64: 1, 64>}, {pipeline_mode = #tpu.pipeline_mode<synchronous>, transform_indices = @transform_16, window_bounds = array<i64: 64, 8>}, {pipeline_mode = #tpu.pipeline_mode<synchronous>, transform_indices = @transform_17, window_bounds = array<i64: 8, 1>}, {transform_indices = @transform_18, window_bounds = array<i64: 1, 8, 32>}]} {
    %c0_i32 = arith.constant 0 : i32
    %0 = arith.cmpi eq, %arg1, %c0_i32 : i32
    %1 = arith.extui %0 : i1 to i32
    %c0_i32_0 = arith.constant 0 : i32
    %2 = arith.cmpi ne, %1, %c0_i32_0 : i32
    scf.if %2 {
      %cst_89 = arith.constant 0xFF800000 : f32
      %183 = vector.broadcast %cst_89 : f32 to vector<8x1xf32>
      %c0_90 = arith.constant 0 : index
      %c0_91 = arith.constant 0 : index
      %184 = vector.load %arg21[%c0_90, %c0_91] : memref<8x1xf32, #tpu.memory_space<vmem>>, vector<8x1xf32>
      tpu.vector_store %arg21[%c0_90, %c0_91], %183 {strides = array<i32>} : memref<8x1xf32, #tpu.memory_space<vmem>>, vector<8x1xf32>,
      %cst_92 = arith.constant 0.000000e+00 : f32
      %185 = vector.broadcast %cst_92 : f32 to vector<8x1xf32>
      %c0_93 = arith.constant 0 : index
      %c0_94 = arith.constant 0 : index
      %186 = vector.load %arg22[%c0_93, %c0_94] : memref<8x1xf32, #tpu.memory_space<vmem>>, vector<8x1xf32>
      tpu.vector_store %arg22[%c0_93, %c0_94], %185 {strides = array<i32>} : memref<8x1xf32, #tpu.memory_space<vmem>>, vector<8x1xf32>,
      %cst_95 = arith.constant 0.000000e+00 : f32
      %187 = vector.broadcast %cst_95 : f32 to vector<8x32xf32>
      %c0_96 = arith.constant 0 : index
      %c0_97 = arith.constant 0 : index
      %188 = vector.load %arg23[%c0_96, %c0_97] : memref<8x32xf32, #tpu.memory_space<vmem>>, vector<8x32xf32>
      tpu.vector_store %arg23[%c0_96, %c0_97], %187 {strides = array<i32>} : memref<8x32xf32, #tpu.memory_space<vmem>>, vector<8x32xf32>,
    } else {
    }
    %c0 = arith.constant 0 : index
    %c0_1 = arith.constant 0 : index
    %c0_2 = arith.constant 0 : index
    %3 = vector.load %arg2[%c0, %c0_1, %c0_2] : memref<1x128x128xbf16, #tpu.memory_space<vmem>>, vector<1x128x128xbf16>
    %4 = vector.shape_cast %3 : vector<1x128x128xbf16> to vector<128x128xbf16>
    %5 = arith.extf %4 : vector<128x128xbf16> to vector<128x128xf32>
    %c0_3 = arith.constant 0 : index
    %c0_4 = arith.constant 0 : index
    %c0_5 = arith.constant 0 : index
    %6 = vector.load %arg3[%c0_3, %c0_4, %c0_5] : memref<1x1x128xf32, #tpu.memory_space<vmem>>, vector<1x1x128xf32>
    %7 = vector.shape_cast %6 : vector<1x1x128xf32> to vector<1x128xf32>
    %c0_6 = arith.constant 0 : index
    %c0_7 = arith.constant 0 : index
    %8 = vector.load %arg4[%c0_6, %c0_7] : memref<1x128xf32, #tpu.memory_space<vmem>>, vector<1x128xf32>
    %c0_8 = arith.constant 0 : index
    %c0_9 = arith.constant 0 : index
    %9 = vector.load %arg5[%c0_8, %c0_9] : memref<1x128xf32, #tpu.memory_space<vmem>>, vector<1x128xf32>
    %cst = arith.constant dense<0.000000e+00> : vector<128xf32>
    %10 = vector.multi_reduction <add>, %5, %cst [1] : vector<128x128xf32> to vector<128xf32>
    %11 = vector.shape_cast %10 : vector<128xf32> to vector<128x1xf32>
    %cst_10 = arith.constant 1.280000e+02 : f32
    %12 = vector.broadcast %cst_10 : f32 to vector<128x1xf32>
    %13 = arith.divf %11, %12 : vector<128x1xf32>
    %14 = arith.mulf %5, %5 : vector<128x128xf32>
    %cst_11 = arith.constant dense<0.000000e+00> : vector<128xf32>
    %15 = vector.multi_reduction <add>, %14, %cst_11 [1] : vector<128x128xf32> to vector<128xf32>
    %16 = vector.shape_cast %15 : vector<128xf32> to vector<128x1xf32>
    %cst_12 = arith.constant 1.280000e+02 : f32
    %17 = vector.broadcast %cst_12 : f32 to vector<128x1xf32>
    %18 = arith.divf %16, %17 : vector<128x1xf32>
    %19 = arith.mulf %13, %13 : vector<128x1xf32>
    %20 = arith.subf %18, %19 : vector<128x1xf32>
    %cst_13 = arith.constant 0.000000e+00 : f32
    %21 = vector.broadcast %cst_13 : f32 to vector<128x1xf32>
    %22 = arith.maximumf %20, %21 : vector<128x1xf32>
    %23 = vector.broadcast %13 : vector<128x1xf32> to vector<128x128xf32>
    %24 = arith.subf %5, %23 : vector<128x128xf32>
    %cst_14 = arith.constant 9.99999997E-7 : f32
    %25 = vector.broadcast %cst_14 : f32 to vector<128x1xf32>
    %26 = arith.addf %22, %25 : vector<128x1xf32>
    %27 = math.rsqrt %26 : vector<128x1xf32>
    %28 = vector.broadcast %27 : vector<128x1xf32> to vector<128x128xf32>
    %29 = arith.mulf %24, %28 : vector<128x128xf32>
    %30 = vector.broadcast %8 : vector<1x128xf32> to vector<128x128xf32>
    %31 = arith.mulf %29, %30 : vector<128x128xf32>
    %32 = vector.broadcast %9 : vector<1x128xf32> to vector<128x128xf32>
    %33 = arith.addf %31, %32 : vector<128x128xf32>
    %34 = arith.truncf %33 : vector<128x128xf32> to vector<128x128xbf16>
    %c0_15 = arith.constant 0 : index
    %c0_16 = arith.constant 0 : index
    %35 = vector.load %arg6[%c0_15, %c0_16] : memref<128x32xbf16, #tpu.memory_space<vmem>>, vector<128x32xbf16>
    %cst_17 = arith.constant dense<0.000000e+00> : vector<128x32xf32>
    %36 = tpu.matmul %34, %35, %cst_17 {dimension_numbers = #tpu.dot_dimension_numbers<[1], [0], [0], [1], [0, 0, 1, 1], [], []>} : vector<128x128xbf16>, vector<128x32xbf16>, vector<128x32xf32> -> vector<128x32xf32>
    %c0_18 = arith.constant 0 : index
    %c0_19 = arith.constant 0 : index
    %37 = vector.load %arg7[%c0_18, %c0_19] : memref<1x32xf32, #tpu.memory_space<vmem>>, vector<1x32xf32>
    %38 = vector.broadcast %37 : vector<1x32xf32> to vector<128x32xf32>
    %39 = arith.addf %36, %38 : vector<128x32xf32>
    %cst_20 = arith.constant 0.000000e+00 : f32
    %40 = vector.broadcast %cst_20 : f32 to vector<128x32xf32>
    %41 = arith.cmpf ogt, %39, %40 : vector<128x32xf32>
    %cst_21 = arith.constant 0.00999999977 : f32
    %42 = vector.broadcast %cst_21 : f32 to vector<128x32xf32>
    %43 = arith.mulf %42, %39 : vector<128x32xf32>
    %44 = arith.select %41, %39, %43 : vector<128x32xi1>, vector<128x32xf32>
    %c0_22 = arith.constant 0 : index
    %c0_23 = arith.constant 0 : index
    %45 = vector.load %arg8[%c0_22, %c0_23] : memref<1x32xf32, #tpu.memory_space<vmem>>, vector<1x32xf32>
    %c0_24 = arith.constant 0 : index
    %c0_25 = arith.constant 0 : index
    %46 = vector.load %arg9[%c0_24, %c0_25] : memref<1x32xf32, #tpu.memory_space<vmem>>, vector<1x32xf32>
    %cst_26 = arith.constant dense<0.000000e+00> : vector<128xf32>
    %47 = vector.multi_reduction <add>, %44, %cst_26 [1] : vector<128x32xf32> to vector<128xf32>
    %48 = vector.shape_cast %47 : vector<128xf32> to vector<128x1xf32>
    %cst_27 = arith.constant 3.200000e+01 : f32
    %49 = vector.broadcast %cst_27 : f32 to vector<128x1xf32>
    %50 = arith.divf %48, %49 : vector<128x1xf32>
    %51 = arith.mulf %44, %44 : vector<128x32xf32>
    %cst_28 = arith.constant dense<0.000000e+00> : vector<128xf32>
    %52 = vector.multi_reduction <add>, %51, %cst_28 [1] : vector<128x32xf32> to vector<128xf32>
    %53 = vector.shape_cast %52 : vector<128xf32> to vector<128x1xf32>
    %cst_29 = arith.constant 3.200000e+01 : f32
    %54 = vector.broadcast %cst_29 : f32 to vector<128x1xf32>
    %55 = arith.divf %53, %54 : vector<128x1xf32>
    %56 = arith.mulf %50, %50 : vector<128x1xf32>
    %57 = arith.subf %55, %56 : vector<128x1xf32>
    %cst_30 = arith.constant 0.000000e+00 : f32
    %58 = vector.broadcast %cst_30 : f32 to vector<128x1xf32>
    %59 = arith.maximumf %57, %58 : vector<128x1xf32>
    %60 = vector.broadcast %50 : vector<128x1xf32> to vector<128x32xf32>
    %61 = arith.subf %44, %60 : vector<128x32xf32>
    %cst_31 = arith.constant 9.99999997E-7 : f32
    %62 = vector.broadcast %cst_31 : f32 to vector<128x1xf32>
    %63 = arith.addf %59, %62 : vector<128x1xf32>
    %64 = math.rsqrt %63 : vector<128x1xf32>
    %65 = vector.broadcast %64 : vector<128x1xf32> to vector<128x32xf32>
    %66 = arith.mulf %61, %65 : vector<128x32xf32>
    %67 = vector.broadcast %45 : vector<1x32xf32> to vector<128x32xf32>
    %68 = arith.mulf %66, %67 : vector<128x32xf32>
    %69 = vector.broadcast %46 : vector<1x32xf32> to vector<128x32xf32>
    %70 = arith.addf %68, %69 : vector<128x32xf32>
    %71 = arith.truncf %70 : vector<128x32xf32> to vector<128x32xbf16>
    %c0_32 = arith.constant 0 : index
    %c0_33 = arith.constant 0 : index
    %72 = vector.load %arg10[%c0_32, %c0_33] : memref<32x32xbf16, #tpu.memory_space<vmem>>, vector<32x32xbf16>
    %cst_34 = arith.constant dense<0.000000e+00> : vector<128x32xf32>
    %73 = tpu.matmul %71, %72, %cst_34 {dimension_numbers = #tpu.dot_dimension_numbers<[1], [0], [0], [1], [0, 0, 1, 1], [], []>} : vector<128x32xbf16>, vector<32x32xbf16>, vector<128x32xf32> -> vector<128x32xf32>
    %c0_35 = arith.constant 0 : index
    %c0_36 = arith.constant 0 : index
    %74 = vector.load %arg11[%c0_35, %c0_36] : memref<1x32xf32, #tpu.memory_space<vmem>>, vector<1x32xf32>
    %75 = vector.broadcast %74 : vector<1x32xf32> to vector<128x32xf32>
    %76 = arith.addf %73, %75 : vector<128x32xf32>
    %cst_37 = arith.constant 0.000000e+00 : f32
    %77 = vector.broadcast %cst_37 : f32 to vector<128x32xf32>
    %78 = arith.cmpf ogt, %76, %77 : vector<128x32xf32>
    %cst_38 = arith.constant 0.00999999977 : f32
    %79 = vector.broadcast %cst_38 : f32 to vector<128x32xf32>
    %80 = arith.mulf %79, %76 : vector<128x32xf32>
    %81 = arith.select %78, %76, %80 : vector<128x32xi1>, vector<128x32xf32>
    %c0_39 = arith.constant 0 : index
    %c0_40 = arith.constant 0 : index
    %82 = vector.load %arg12[%c0_39, %c0_40] : memref<1x32xf32, #tpu.memory_space<vmem>>, vector<1x32xf32>
    %c0_41 = arith.constant 0 : index
    %c0_42 = arith.constant 0 : index
    %83 = vector.load %arg13[%c0_41, %c0_42] : memref<1x32xf32, #tpu.memory_space<vmem>>, vector<1x32xf32>
    %cst_43 = arith.constant dense<0.000000e+00> : vector<128xf32>
    %84 = vector.multi_reduction <add>, %81, %cst_43 [1] : vector<128x32xf32> to vector<128xf32>
    %85 = vector.shape_cast %84 : vector<128xf32> to vector<128x1xf32>
    %cst_44 = arith.constant 3.200000e+01 : f32
    %86 = vector.broadcast %cst_44 : f32 to vector<128x1xf32>
    %87 = arith.divf %85, %86 : vector<128x1xf32>
    %88 = arith.mulf %81, %81 : vector<128x32xf32>
    %cst_45 = arith.constant dense<0.000000e+00> : vector<128xf32>
    %89 = vector.multi_reduction <add>, %88, %cst_45 [1] : vector<128x32xf32> to vector<128xf32>
    %90 = vector.shape_cast %89 : vector<128xf32> to vector<128x1xf32>
    %cst_46 = arith.constant 3.200000e+01 : f32
    %91 = vector.broadcast %cst_46 : f32 to vector<128x1xf32>
    %92 = arith.divf %90, %91 : vector<128x1xf32>
    %93 = arith.mulf %87, %87 : vector<128x1xf32>
    %94 = arith.subf %92, %93 : vector<128x1xf32>
    %cst_47 = arith.constant 0.000000e+00 : f32
    %95 = vector.broadcast %cst_47 : f32 to vector<128x1xf32>
    %96 = arith.maximumf %94, %95 : vector<128x1xf32>
    %97 = vector.broadcast %87 : vector<128x1xf32> to vector<128x32xf32>
    %98 = arith.subf %81, %97 : vector<128x32xf32>
    %cst_48 = arith.constant 9.99999997E-7 : f32
    %99 = vector.broadcast %cst_48 : f32 to vector<128x1xf32>
    %100 = arith.addf %96, %99 : vector<128x1xf32>
    %101 = math.rsqrt %100 : vector<128x1xf32>
    %102 = vector.broadcast %101 : vector<128x1xf32> to vector<128x32xf32>
    %103 = arith.mulf %98, %102 : vector<128x32xf32>
    %104 = vector.broadcast %82 : vector<1x32xf32> to vector<128x32xf32>
    %105 = arith.mulf %103, %104 : vector<128x32xf32>
    %106 = vector.broadcast %83 : vector<1x32xf32> to vector<128x32xf32>
    %107 = arith.addf %105, %106 : vector<128x32xf32>
    %108 = arith.truncf %107 : vector<128x32xf32> to vector<128x32xbf16>
    %c0_49 = arith.constant 0 : index
    %c0_50 = arith.constant 0 : index
    %109 = vector.load %arg14[%c0_49, %c0_50] : memref<32x64xbf16, #tpu.memory_space<vmem>>, vector<32x64xbf16>
    %cst_51 = arith.constant dense<0.000000e+00> : vector<128x64xf32>
    %110 = tpu.matmul %108, %109, %cst_51 {dimension_numbers = #tpu.dot_dimension_numbers<[1], [0], [0], [1], [0, 0, 1, 1], [], []>} : vector<128x32xbf16>, vector<32x64xbf16>, vector<128x64xf32> -> vector<128x64xf32>
    %c0_52 = arith.constant 0 : index
    %c0_53 = arith.constant 0 : index
    %111 = vector.load %arg15[%c0_52, %c0_53] : memref<1x64xf32, #tpu.memory_space<vmem>>, vector<1x64xf32>
    %112 = vector.broadcast %111 : vector<1x64xf32> to vector<128x64xf32>
    %113 = arith.addf %110, %112 : vector<128x64xf32>
    %cst_54 = arith.constant 0.000000e+00 : f32
    %114 = vector.broadcast %cst_54 : f32 to vector<128x64xf32>
    %115 = arith.cmpf ogt, %113, %114 : vector<128x64xf32>
    %cst_55 = arith.constant 0.00999999977 : f32
    %116 = vector.broadcast %cst_55 : f32 to vector<128x64xf32>
    %117 = arith.mulf %116, %113 : vector<128x64xf32>
    %118 = arith.select %115, %113, %117 : vector<128x64xi1>, vector<128x64xf32>
    %c0_56 = arith.constant 0 : index
    %c0_57 = arith.constant 0 : index
    %119 = vector.load %arg16[%c0_56, %c0_57] : memref<1x64xf32, #tpu.memory_space<vmem>>, vector<1x64xf32>
    %c0_58 = arith.constant 0 : index
    %c0_59 = arith.constant 0 : index
    %120 = vector.load %arg17[%c0_58, %c0_59] : memref<1x64xf32, #tpu.memory_space<vmem>>, vector<1x64xf32>
    %cst_60 = arith.constant dense<0.000000e+00> : vector<128xf32>
    %121 = vector.multi_reduction <add>, %118, %cst_60 [1] : vector<128x64xf32> to vector<128xf32>
    %122 = vector.shape_cast %121 : vector<128xf32> to vector<128x1xf32>
    %cst_61 = arith.constant 6.400000e+01 : f32
    %123 = vector.broadcast %cst_61 : f32 to vector<128x1xf32>
    %124 = arith.divf %122, %123 : vector<128x1xf32>
    %125 = arith.mulf %118, %118 : vector<128x64xf32>
    %cst_62 = arith.constant dense<0.000000e+00> : vector<128xf32>
    %126 = vector.multi_reduction <add>, %125, %cst_62 [1] : vector<128x64xf32> to vector<128xf32>
    %127 = vector.shape_cast %126 : vector<128xf32> to vector<128x1xf32>
    %cst_63 = arith.constant 6.400000e+01 : f32
    %128 = vector.broadcast %cst_63 : f32 to vector<128x1xf32>
    %129 = arith.divf %127, %128 : vector<128x1xf32>
    %130 = arith.mulf %124, %124 : vector<128x1xf32>
    %131 = arith.subf %129, %130 : vector<128x1xf32>
    %cst_64 = arith.constant 0.000000e+00 : f32
    %132 = vector.broadcast %cst_64 : f32 to vector<128x1xf32>
    %133 = arith.maximumf %131, %132 : vector<128x1xf32>
    %134 = vector.broadcast %124 : vector<128x1xf32> to vector<128x64xf32>
    %135 = arith.subf %118, %134 : vector<128x64xf32>
    %cst_65 = arith.constant 9.99999997E-7 : f32
    %136 = vector.broadcast %cst_65 : f32 to vector<128x1xf32>
    %137 = arith.addf %133, %136 : vector<128x1xf32>
    %138 = math.rsqrt %137 : vector<128x1xf32>
    %139 = vector.broadcast %138 : vector<128x1xf32> to vector<128x64xf32>
    %140 = arith.mulf %135, %139 : vector<128x64xf32>
    %141 = vector.broadcast %119 : vector<1x64xf32> to vector<128x64xf32>
    %142 = arith.mulf %140, %141 : vector<128x64xf32>
    %143 = vector.broadcast %120 : vector<1x64xf32> to vector<128x64xf32>
    %144 = arith.addf %142, %143 : vector<128x64xf32>
    %c0_66 = arith.constant 0 : index
    %c0_67 = arith.constant 0 : index
    %145 = vector.load %arg18[%c0_66, %c0_67] : memref<64x8xbf16, #tpu.memory_space<vmem>>, vector<64x8xbf16>
    %146 = arith.truncf %144 : vector<128x64xf32> to vector<128x64xbf16>
    %cst_68 = arith.constant dense<0.000000e+00> : vector<8x128xf32>
    %147 = tpu.matmul %145, %146, %cst_68 {dimension_numbers = #tpu.dot_dimension_numbers<[0], [1], [1], [0], [0, 1, 1, 0], [], []>} : vector<64x8xbf16>, vector<128x64xbf16>, vector<8x128xf32> -> vector<8x128xf32>
    %c0_69 = arith.constant 0 : index
    %c0_70 = arith.constant 0 : index
    %148 = vector.load %arg19[%c0_69, %c0_70] : memref<8x1xf32, #tpu.memory_space<vmem>>, vector<8x1xf32>
    %149 = vector.broadcast %148 : vector<8x1xf32> to vector<8x128xf32>
    %150 = arith.addf %147, %149 : vector<8x128xf32>
    %cst_71 = arith.constant 0.000000e+00 : f32
    %151 = vector.broadcast %cst_71 : f32 to vector<1x128xf32>
    %152 = arith.cmpf oeq, %7, %151 : vector<1x128xf32>
    %cst_72 = arith.constant -1.000000e+09 : f32
    %153 = vector.shape_cast %152 : vector<1x128xi1> to vector<1x128xi1>
    %154 = vector.broadcast %153 : vector<1x128xi1> to vector<8x128xi1>
    %155 = vector.broadcast %cst_72 : f32 to vector<8x128xf32>
    %156 = arith.select %154, %155, %150 : vector<8x128xi1>, vector<8x128xf32>
    %c0_73 = arith.constant 0 : index
    %c0_74 = arith.constant 0 : index
    %157 = vector.load %arg21[%c0_73, %c0_74] : memref<8x1xf32, #tpu.memory_space<vmem>>, vector<8x1xf32>
    %cst_75 = arith.constant dense<0xFF800000> : vector<8xf32>
    %158 = vector.multi_reduction <maximumf>, %156, %cst_75 [1] : vector<8x128xf32> to vector<8xf32>
    %159 = vector.shape_cast %158 : vector<8xf32> to vector<8x1xf32>
    %160 = arith.maximumf %157, %159 : vector<8x1xf32>
    %161 = arith.subf %157, %160 : vector<8x1xf32>
    %162 = math.exp %161 : vector<8x1xf32>
    %163 = vector.broadcast %160 : vector<8x1xf32> to vector<8x128xf32>
    %164 = arith.subf %156, %163 : vector<8x128xf32>
    %165 = math.exp %164 : vector<8x128xf32>
    %c0_76 = arith.constant 0 : index
    %c0_77 = arith.constant 0 : index
    %166 = vector.load %arg22[%c0_76, %c0_77] : memref<8x1xf32, #tpu.memory_space<vmem>>, vector<8x1xf32>
    %167 = arith.mulf %162, %166 : vector<8x1xf32>
    %cst_78 = arith.constant dense<0.000000e+00> : vector<8xf32>
    %168 = vector.multi_reduction <add>, %165, %cst_78 [1] : vector<8x128xf32> to vector<8xf32>
    %169 = vector.shape_cast %168 : vector<8xf32> to vector<8x1xf32>
    %170 = arith.addf %167, %169 : vector<8x1xf32>
    %c0_79 = arith.constant 0 : index
    %c0_80 = arith.constant 0 : index
    %171 = vector.load %arg22[%c0_79, %c0_80] : memref<8x1xf32, #tpu.memory_space<vmem>>, vector<8x1xf32>
    tpu.vector_store %arg22[%c0_79, %c0_80], %170 {strides = array<i32>} : memref<8x1xf32, #tpu.memory_space<vmem>>, vector<8x1xf32>,
    %c0_81 = arith.constant 0 : index
    %c0_82 = arith.constant 0 : index
    %172 = vector.load %arg23[%c0_81, %c0_82] : memref<8x32xf32, #tpu.memory_space<vmem>>, vector<8x32xf32>
    %173 = vector.broadcast %162 : vector<8x1xf32> to vector<8x32xf32>
    %174 = arith.mulf %173, %172 : vector<8x32xf32>
    %175 = arith.truncf %165 : vector<8x128xf32> to vector<8x128xbf16>
    %cst_83 = arith.constant dense<0.000000e+00> : vector<8x32xf32>
    %176 = tpu.matmul %175, %108, %cst_83 {dimension_numbers = #tpu.dot_dimension_numbers<[1], [0], [0], [1], [0, 0, 1, 1], [], []>} : vector<8x128xbf16>, vector<128x32xbf16>, vector<8x32xf32> -> vector<8x32xf32>
    %177 = arith.addf %174, %176 : vector<8x32xf32>
    %c0_84 = arith.constant 0 : index
    %c0_85 = arith.constant 0 : index
    %178 = vector.load %arg23[%c0_84, %c0_85] : memref<8x32xf32, #tpu.memory_space<vmem>>, vector<8x32xf32>
    tpu.vector_store %arg23[%c0_84, %c0_85], %177 {strides = array<i32>} : memref<8x32xf32, #tpu.memory_space<vmem>>, vector<8x32xf32>,
    %c0_86 = arith.constant 0 : index
    %c0_87 = arith.constant 0 : index
    %179 = vector.load %arg21[%c0_86, %c0_87] : memref<8x1xf32, #tpu.memory_space<vmem>>, vector<8x1xf32>
    tpu.vector_store %arg21[%c0_86, %c0_87], %160 {strides = array<i32>} : memref<8x1xf32, #tpu.memory_space<vmem>>, vector<8x1xf32>,
    %c1_i32 = arith.constant 1 : i32
    %180 = arith.cmpi eq, %arg1, %c1_i32 : i32
    %181 = arith.extui %180 : i1 to i32
    %c0_i32_88 = arith.constant 0 : i32
    %182 = arith.cmpi ne, %181, %c0_i32_88 : i32
    scf.if %182 {
      %c0_89 = arith.constant 0 : index
      %c0_90 = arith.constant 0 : index
      %183 = vector.load %arg23[%c0_89, %c0_90] : memref<8x32xf32, #tpu.memory_space<vmem>>, vector<8x32xf32>
      %c0_91 = arith.constant 0 : index
      %c0_92 = arith.constant 0 : index
      %184 = vector.load %arg22[%c0_91, %c0_92] : memref<8x1xf32, #tpu.memory_space<vmem>>, vector<8x1xf32>
      %185 = vector.broadcast %184 : vector<8x1xf32> to vector<8x32xf32>
      %186 = arith.divf %183, %185 : vector<8x32xf32>
      %187 = arith.truncf %186 : vector<8x32xf32> to vector<8x32xbf16>
      %c0_93 = arith.constant 0 : index
      %c0_94 = arith.constant 0 : index
      %c0_95 = arith.constant 0 : index
      %188 = vector.load %arg20[%c0_93, %c0_94, %c0_95] : memref<1x8x32xbf16, #tpu.memory_space<vmem>>, vector<1x8x32xbf16>
      %189 = vector.shape_cast %188 : vector<1x8x32xbf16> to vector<8x32xbf16>
      %190 = vector.shape_cast %187 : vector<8x32xbf16> to vector<1x8x32xbf16>
      tpu.vector_store %arg20[%c0_93, %c0_94, %c0_95], %190 {strides = array<i32>} : memref<1x8x32xbf16, #tpu.memory_space<vmem>>, vector<1x8x32xbf16>,
    } else {
    }
    return
  }
  func.func @transform_0(%arg0: i32, %arg1: i32) -> (i32, i32, i32) {
    %c0_i32 = arith.constant 0 : i32
    %c0_i32_0 = arith.constant 0 : i32
    return %arg0, %arg1, %c0_i32 : i32, i32, i32
  }
  func.func @transform_1(%arg0: i32, %arg1: i32) -> (i32, i32, i32) {
    %c0_i32 = arith.constant 0 : i32
    %c0_i32_0 = arith.constant 0 : i32
    return %arg0, %c0_i32, %arg1 : i32, i32, i32
  }
  func.func @transform_2(%arg0: i32, %arg1: i32) -> (i32, i32) {
    %c0_i32 = arith.constant 0 : i32
    %c0_i32_0 = arith.constant 0 : i32
    %c0_i32_1 = arith.constant 0 : i32
    return %c0_i32, %c0_i32_0 : i32, i32
  }
  func.func @transform_3(%arg0: i32, %arg1: i32) -> (i32, i32) {
    %c0_i32 = arith.constant 0 : i32
    %c0_i32_0 = arith.constant 0 : i32
    %c0_i32_1 = arith.constant 0 : i32
    return %c0_i32, %c0_i32_0 : i32, i32
  }
  func.func @transform_4(%arg0: i32, %arg1: i32) -> (i32, i32) {
    %c0_i32 = arith.constant 0 : i32
    %c0_i32_0 = arith.constant 0 : i32
    %c0_i32_1 = arith.constant 0 : i32
    return %c0_i32, %c0_i32_0 : i32, i32
  }
  func.func @transform_5(%arg0: i32, %arg1: i32) -> (i32, i32) {
    %c0_i32 = arith.constant 0 : i32
    %c0_i32_0 = arith.constant 0 : i32
    %c0_i32_1 = arith.constant 0 : i32
    return %c0_i32, %c0_i32_0 : i32, i32
  }
  func.func @transform_6(%arg0: i32, %arg1: i32) -> (i32, i32) {
    %c0_i32 = arith.constant 0 : i32
    %c0_i32_0 = arith.constant 0 : i32
    %c0_i32_1 = arith.constant 0 : i32
    return %c0_i32, %c0_i32_0 : i32, i32
  }
  func.func @transform_7(%arg0: i32, %arg1: i32) -> (i32, i32) {
    %c0_i32 = arith.constant 0 : i32
    %c0_i32_0 = arith.constant 0 : i32
    %c0_i32_1 = arith.constant 0 : i32
    return %c0_i32, %c0_i32_0 : i32, i32
  }
  func.func @transform_8(%arg0: i32, %arg1: i32) -> (i32, i32) {
    %c0_i32 = arith.constant 0 : i32
    %c0_i32_0 = arith.constant 0 : i32
    %c0_i32_1 = arith.constant 0 : i32
    return %c0_i32, %c0_i32_0 : i32, i32
  }
  func.func @transform_9(%arg0: i32, %arg1: i32) -> (i32, i32) {
    %c0_i32 = arith.constant 0 : i32
    %c0_i32_0 = arith.constant 0 : i32
    %c0_i32_1 = arith.constant 0 : i32
    return %c0_i32, %c0_i32_0 : i32, i32
  }
  func.func @transform_10(%arg0: i32, %arg1: i32) -> (i32, i32) {
    %c0_i32 = arith.constant 0 : i32
    %c0_i32_0 = arith.constant 0 : i32
    %c0_i32_1 = arith.constant 0 : i32
    return %c0_i32, %c0_i32_0 : i32, i32
  }
  func.func @transform_11(%arg0: i32, %arg1: i32) -> (i32, i32) {
    %c0_i32 = arith.constant 0 : i32
    %c0_i32_0 = arith.constant 0 : i32
    %c0_i32_1 = arith.constant 0 : i32
    return %c0_i32, %c0_i32_0 : i32, i32
  }
  func.func @transform_12(%arg0: i32, %arg1: i32) -> (i32, i32) {
    %c0_i32 = arith.constant 0 : i32
    %c0_i32_0 = arith.constant 0 : i32
    %c0_i32_1 = arith.constant 0 : i32
    return %c0_i32, %c0_i32_0 : i32, i32
  }
  func.func @transform_13(%arg0: i32, %arg1: i32) -> (i32, i32) {
    %c0_i32 = arith.constant 0 : i32
    %c0_i32_0 = arith.constant 0 : i32
    %c0_i32_1 = arith.constant 0 : i32
    return %c0_i32, %c0_i32_0 : i32, i32
  }
  func.func @transform_14(%arg0: i32, %arg1: i32) -> (i32, i32) {
    %c0_i32 = arith.constant 0 : i32
    %c0_i32_0 = arith.constant 0 : i32
    %c0_i32_1 = arith.constant 0 : i32
    return %c0_i32, %c0_i32_0 : i32, i32
  }
  func.func @transform_15(%arg0: i32, %arg1: i32) -> (i32, i32) {
    %c0_i32 = arith.constant 0 : i32
    %c0_i32_0 = arith.constant 0 : i32
    %c0_i32_1 = arith.constant 0 : i32
    return %c0_i32, %c0_i32_0 : i32, i32
  }
  func.func @transform_16(%arg0: i32, %arg1: i32) -> (i32, i32) {
    %c0_i32 = arith.constant 0 : i32
    %c0_i32_0 = arith.constant 0 : i32
    %c0_i32_1 = arith.constant 0 : i32
    return %c0_i32, %c0_i32_0 : i32, i32
  }
  func.func @transform_17(%arg0: i32, %arg1: i32) -> (i32, i32) {
    %c0_i32 = arith.constant 0 : i32
    %c0_i32_0 = arith.constant 0 : i32
    %c0_i32_1 = arith.constant 0 : i32
    return %c0_i32, %c0_i32_0 : i32, i32
  }
  func.func @transform_18(%arg0: i32, %arg1: i32) -> (i32, i32, i32) {
    %c0_i32 = arith.constant 0 : i32
    %c0_i32_0 = arith.constant 0 : i32
    %c0_i32_1 = arith.constant 0 : i32
    return %arg0, %c0_i32, %c0_i32_0 : i32, i32, i32
  }
}

</mosaic_0001>

<llo_original>
// kernel: tpu_custom_call.1
$region0: #{tpu_custom_call.1}
  #allocation0 [shape = 'u32[]', space=smem, size = 0x4, offset = 0x4, fixed_abs, tag = 'smem constant byte address 0x4 - core index']
  #allocation1 [shape = 'u32[144,128]{1,0:T(1,128)}', space=vmem, size = 0x12000, scoped, tag = 'internal scratch']
  #allocation2 [shape = 'f32[8,1]{1,0:T(8,128)}', space=vmem, size = 0x1000, scoped, tag = 'scratch operand']
  #allocation3 [shape = 'f32[8,1]{1,0:T(8,128)}', space=vmem, size = 0x1000, scoped, tag = 'scratch operand']
  #allocation4 [shape = 'f32[8,32]{1,0:T(8,128)}', space=vmem, size = 0x1000, scoped, tag = 'scratch operand']
  %s0 = inlined_call_operand.hbm [shape: bf16[2,256,128], index: 0, kind: input, shape index: {}]
  %s1 = inlined_call_operand.hbm [shape: f32[2,1,256], index: 1, kind: input, shape index: {}]
  %s2 = inlined_call_operand.hbm [shape: f32[1,128], index: 2, kind: input, shape index: {}]
  %s3 = inlined_call_operand.hbm [shape: f32[1,128], index: 3, kind: input, shape index: {}]
  %s4 = inlined_call_operand.hbm [shape: bf16[128,32], index: 4, kind: input, shape index: {}]
  %s5 = inlined_call_operand.hbm [shape: f32[1,32], index: 5, kind: input, shape index: {}]
  %s6 = inlined_call_operand.hbm [shape: f32[1,32], index: 6, kind: input, shape index: {}]
  %s7 = inlined_call_operand.hbm [shape: f32[1,32], index: 7, kind: input, shape index: {}]
  %s8 = inlined_call_operand.hbm [shape: bf16[32,32], index: 8, kind: input, shape index: {}]
  %s9 = inlined_call_operand.hbm [shape: f32[1,32], index: 9, kind: input, shape index: {}]
  %s10 = inlined_call_operand.hbm [shape: f32[1,32], index: 10, kind: input, shape index: {}]
  %s11 = inlined_call_operand.hbm [shape: f32[1,32], index: 11, kind: input, shape index: {}]
  %s12 = inlined_call_operand.hbm [shape: bf16[32,64], index: 12, kind: input, shape index: {}]
  %s13 = inlined_call_operand.hbm [shape: f32[1,64], index: 13, kind: input, shape index: {}]
  %s14 = inlined_call_operand.hbm [shape: f32[1,64], index: 14, kind: input, shape index: {}]
  %s15 = inlined_call_operand.hbm [shape: f32[1,64], index: 15, kind: input, shape index: {}]
  %s16 = inlined_call_operand.hbm [shape: bf16[64,8], index: 16, kind: input, shape index: {}]
  %s17 = inlined_call_operand.hbm [shape: f32[8,1], index: 17, kind: input, shape index: {}]
  %s18 = inlined_call_operand.hbm [shape: bf16[2,8,32], index: 18, kind: output, shape index: {}]
  %s19 = sld [smem:[#allocation0]]
  $region185: #{tpu_custom_call.1} parent=0
    _
  %s21 = ssub.s32 1, %s19
  %s22 = scalar_select 0, %s21, %s19
  $region1: #{tpu_custom_call.1} parent=0
    #allocation5 [shape = 'u8[65536]{0}', space=vmem, size = 0x10000, scoped, tag = 'input window, operand 0']
    #allocation6 [shape = 's32[2]{0}', space=sflag, size = 0x8, scoped, tag = 'scoped memory for tpu_custom_call.1']
    #allocation7 [shape = 's32[2]{0}', space=sflag, size = 0x8, scoped, tag = 'scoped memory for tpu_custom_call.1']
    #allocation8 [shape = 'u8[1024]{0}', space=vmem, size = 0x400, scoped, tag = 'input window, operand 1']
    #allocation9 [shape = 's32[2]{0}', space=sflag, size = 0x8, scoped, tag = 'scoped memory for tpu_custom_call.1']
    #allocation10 [shape = 'u8[512]{0}', space=vmem, size = 0x400, scoped, tag = 'input window, operand 2, single buffered']
    #allocation11 [shape = 'u8[512]{0}', space=vmem, size = 0x400, scoped, tag = 'input window, operand 3, single buffered']
    #allocation12 [shape = 's32[1]{0}', space=sflag, size = 0x4, scoped, tag = 'scoped memory for tpu_custom_call.1']
    #allocation13 [shape = 'u8[32768]{0}', space=vmem, size = 0x8000, scoped, tag = 'input window, operand 4, single buffered']
    #allocation14 [shape = 'u8[512]{0}', space=vmem, size = 0x400, scoped, tag = 'input window, operand 5, single buffered']
    #allocation15 [shape = 's32[1]{0}', space=sflag, size = 0x4, scoped, tag = 'scoped memory for tpu_custom_call.1']
    #allocation16 [shape = 'u8[512]{0}', space=vmem, size = 0x400, scoped, tag = 'input window, operand 6, single buffered']
    #allocation17 [shape = 'u8[512]{0}', space=vmem, size = 0x400, scoped, tag = 'input window, operand 7, single buffered']
    #allocation18 [shape = 's32[1]{0}', space=sflag, size = 0x4, scoped, tag = 'scoped memory for tpu_custom_call.1']
    #allocation19 [shape = 'u8[8192]{0}', space=vmem, size = 0x2000, scoped, tag = 'input window, operand 8, single buffered']
    #allocation20 [shape = 'u8[512]{0}', space=vmem, size = 0x400, scoped, tag = 'input window, operand 9, single buffered']
    #allocation21 [shape = 's32[1]{0}', space=sflag, size = 0x4, scoped, tag = 'scoped memory for tpu_custom_call.1']
    #allocation22 [shape = 'u8[512]{0}', space=vmem, size = 0x400, scoped, tag = 'input window, operand 10, single buffered']
    #allocation23 [shape = 'u8[512]{0}', space=vmem, size = 0x400, scoped, tag = 'input window, operand 11, single buffered']
    #allocation24 [shape = 's32[1]{0}', space=sflag, size = 0x4, scoped, tag = 'scoped memory for tpu_custom_call.1']
    #allocation25 [shape = 'u8[8192]{0}', space=vmem, size = 0x2000, scoped, tag = 'input window, operand 12, single buffered']
    #allocation26 [shape = 'u8[512]{0}', space=vmem, size = 0x400, scoped, tag = 'input window, operand 13, single buffered']
    #allocation27 [shape = 's32[1]{0}', space=sflag, size = 0x4, scoped, tag = 'scoped memory for tpu_custom_call.1']
    #allocation28 [shape = 'u8[512]{0}', space=vmem, size = 0x400, scoped, tag = 'input window, operand 14, single buffered']
    #allocation29 [shape = 'u8[512]{0}', space=vmem, size = 0x400, scoped, tag = 'input window, operand 15, single buffered']
    #allocation30 [shape = 's32[1]{0}', space=sflag, size = 0x4, scoped, tag = 'scoped memory for tpu_custom_call.1']
    #allocation31 [shape = 'u8[16384]{0}', space=vmem, size = 0x4000, scoped, tag = 'input window, operand 16, single buffered']
    #allocation32 [shape = 'u8[4096]{0}', space=vmem, size = 0x1000, scoped, tag = 'input window, operand 17, single buffered']
    #allocation33 [shape = 's32[1]{0}', space=sflag, size = 0x4, scoped, tag = 'scoped memory for tpu_custom_call.1']
    #allocation34 [shape = 'u8[4096]{0}', space=vmem, size = 0x1000, scoped, tag = 'output window, operand 0']
    %23 = vsyncpa [#allocation6], 0
    %s24 = scalar_lea.sflag [#allocation6], 1
    %25 = vsyncpa %s24, 0
    %26 = vsyncpa [#allocation9], 0
    %s27 = scalar_lea.sflag [#allocation9], 1
    %28 = vsyncpa %s27, 0
    %29 = vsyncpa [#allocation12], 0
    %30 = vsyncpa [#allocation15], 0
    %31 = vsyncpa [#allocation18], 0
    %32 = vsyncpa [#allocation21], 0
    %33 = vsyncpa [#allocation24], 0
    %34 = vsyncpa [#allocation27], 0
    %35 = vsyncpa [#allocation30], 0
    %36 = vsyncpa [#allocation33], 0
    %37 = vsyncpa [#allocation7], 0
    %s38 = scalar_lea.sflag [#allocation7], 1
    %39 = vsyncpa %s38, 0
    loop: start=0, step=1, limit=6
    $region2: #{tpu_custom_call.1} parent=1 // loop_pre_header
      _
    $region3: #{tpu_custom_call.1} parent=1 // loop_header
      %s41 = sphi 0, %s45
      %p42 = scmp.ge.s32.totalorder %s41, 6
      %s48 = sphi 0, %s60
      %s49 = sphi 0, %s56
      %s50 = sphi 0, %s48
      %s51 = sphi 0, %s49
      %s52 = sphi 0, %s50
      %s53 = sphi 0, %s51
      %s65 = sphi 0, %s67
      %s68 = sphi 0, %s65
      %s69 = sphi 0, %s68
      %s85 = sphi 0, %s69
      %s93 = sphi 0, %s95
      %s96 = sphi 0, %s93
      %s97 = sphi 0, %s96
      %s113 = sphi 0, %s97
      %s117 = sphi 0, %s117
      %s119 = sphi 0, %s117
      %s120 = sphi 0, %s119
      %s134 = sphi 0, %s120
      %s138 = sphi 0, %s138
      %s140 = sphi 0, %s138
      %s141 = sphi 0, %s140
      %s155 = sphi 0, %s141
      %s159 = sphi 0, %s159
      %s161 = sphi 0, %s159
      %s162 = sphi 0, %s161
      %s176 = sphi 0, %s162
      %s180 = sphi 0, %s180
      %s182 = sphi 0, %s180
      %s183 = sphi 0, %s182
      %s197 = sphi 0, %s183
      %s201 = sphi 0, %s201
      %s203 = sphi 0, %s201
      %s204 = sphi 0, %s203
      %s218 = sphi 0, %s204
      %s222 = sphi 0, %s222
      %s224 = sphi 0, %s222
      %s225 = sphi 0, %s224
      %s239 = sphi 0, %s225
      %s243 = sphi 0, %s243
      %s245 = sphi 0, %s243
      %s246 = sphi 0, %s245
      %s260 = sphi 0, %s246
      %s264 = sphi 0, %s264
      %s266 = sphi 0, %s264
      %s267 = sphi 0, %s266
      %s281 = sphi 0, %s267
      %s285 = sphi 0, %s285
      %s287 = sphi 0, %s285
      %s288 = sphi 0, %s287
      %s302 = sphi 0, %s288
      %s306 = sphi 0, %s306
      %s308 = sphi 0, %s306
      %s309 = sphi 0, %s308
      %s323 = sphi 0, %s309
      %s327 = sphi 0, %s327
      %s329 = sphi 0, %s327
      %s330 = sphi 0, %s329
      %s344 = sphi 0, %s330
      %s348 = sphi 0, %s348
      %s350 = sphi 0, %s348
      %s351 = sphi 0, %s350
      %s365 = sphi 0, %s351
      %s369 = sphi 0, %s369
      %s371 = sphi 0, %s369
      %s372 = sphi 0, %s371
      %s386 = sphi 0, %s372
      %s390 = sphi 0, %s390
      %s392 = sphi 0, %s390
      %s393 = sphi 0, %s392
      %s407 = sphi 0, %s393
      %s411 = sphi 0, %s411
      %s413 = sphi 0, %s411
      %s414 = sphi 0, %s413
      %s428 = sphi 0, %s414
      %s432 = sphi 0, %s432
      %s434 = sphi 0, %s432
      %s435 = sphi 0, %s434
      %s449 = sphi 0, %s435
      %s455 = sphi 0, %s457
      %s458 = sphi 0, %s455
      %s459 = sphi 0, %s458
      %s475 = sphi 0, %s459
    $region4: #{tpu_custom_call.1} parent=1 // loop_header_branch
      %44 = sbr.rel (%p42) target = $region8
    $region5: #{tpu_custom_call.1} parent=1 // loop_body
      %s46 = ssub.s32 %s41, 1
      %s47 = ssub.s32 %s41, 2
      %s54 = sadd.s32 1, %s49
      %p55 = scmp.ge.s32.totalorder %s54, 2
      %s56 = scalar_select %p55, 0, %s54
      %s57 = sadd.s32 1, %s48
      %s58 = scalar_select %p55, %s57, %s48
      %p59 = scmp.ge.s32.totalorder %s58, 2
      %s60 = scalar_select %p59, 0, %s58
      %s61 = ssub.s32 %s48, %s60
      %s62 = ssub.s32 %s49, %s56
      %s63 = sor.u32 %s61, %s62
      %p64 = scmp.eq.s32.totalorder %s63, 0
      %s66 = sadd.s32 %s65, 1
      %s67 = scalar_select %p64, %s65, %s66
      %p70 = pneg %p64
      %p71 = scmp.eq.s32.totalorder %s41, 3
      %p72 = por %p70, %p71
      %p73 = scmp.ne.s32.totalorder %s65, %s68
      %p74 = scmp.eq.s32.totalorder %s41, 0
      %p75 = por %p73, %p74
      %p76 = scmp.ne.s32.totalorder %s65, %s68
      %p77 = scmp.eq.s32.totalorder %s46, 3
      %p78 = por %p76, %p77
      %p79 = scmp.ne.s32.totalorder %s68, %s69
      %p80 = scmp.eq.s32.totalorder %s46, 0
      %p81 = por %p79, %p80
      %p82 = scmp.ne.s32.totalorder %s68, %s69
      %p83 = scmp.eq.s32.totalorder %s47, 3
      %p84 = por %p82, %p83
      %p86 = scmp.ne.s32.totalorder %s69, %s85
      %p87 = scmp.eq.s32.totalorder %s47, 0
      %p88 = por %p86, %p87
      %s89 = ssub.s32 %s48, %s60
      %s90 = ssub.s32 %s49, %s56
      %s91 = sor.u32 %s89, %s90
      %p92 = scmp.eq.s32.totalorder %s91, 0
      %s94 = sadd.s32 %s93, 1
      %s95 = scalar_select %p92, %s93, %s94
      %p98 = pneg %p92
      %p99 = scmp.eq.s32.totalorder %s41, 3
      %p100 = por %p98, %p99
      %p101 = scmp.ne.s32.totalorder %s93, %s96
      %p102 = scmp.eq.s32.totalorder %s41, 0
      %p103 = por %p101, %p102
      %p104 = scmp.ne.s32.totalorder %s93, %s96
      %p105 = scmp.eq.s32.totalorder %s46, 3
      %p106 = por %p104, %p105
      %p107 = scmp.ne.s32.totalorder %s96, %s97
      %p108 = scmp.eq.s32.totalorder %s46, 0
      %p109 = por %p107, %p108
      %p110 = scmp.ne.s32.totalorder %s96, %s97
      %p111 = scmp.eq.s32.totalorder %s47, 3
      %p112 = por %p110, %p111
      %p114 = scmp.ne.s32.totalorder %s97, %s113
      %p115 = scmp.eq.s32.totalorder %s47, 0
      %p116 = por %p114, %p115
      %s118 = sadd.s32 %s117, 1
      %p121 = scmp.eq.s32.totalorder %s41, 3
      %p122 = scmp.ne.s32.totalorder %s117, %s119
      %p123 = scmp.eq.s32.totalorder %s41, 0
      %p124 = por %p122, %p123
      %p125 = scmp.ne.s32.totalorder %s117, %s119
      %p126 = scmp.eq.s32.totalorder %s46, 3
      %p127 = por %p125, %p126
      %p128 = scmp.ne.s32.totalorder %s119, %s120
      %p129 = scmp.eq.s32.totalorder %s46, 0
      %p130 = por %p128, %p129
      %p131 = scmp.ne.s32.totalorder %s119, %s120
      %p132 = scmp.eq.s32.totalorder %s47, 3
      %p133 = por %p131, %p132
      %p135 = scmp.ne.s32.totalorder %s120, %s134
      %p136 = scmp.eq.s32.totalorder %s47, 0
      %p137 = por %p135, %p136
      %s139 = sadd.s32 %s138, 1
      %p142 = scmp.eq.s32.totalorder %s41, 3
      %p143 = scmp.ne.s32.totalorder %s138, %s140
      %p144 = scmp.eq.s32.totalorder %s41, 0
      %p145 = por %p143, %p144
      %p146 = scmp.ne.s32.totalorder %s138, %s140
      %p147 = scmp.eq.s32.totalorder %s46, 3
      %p148 = por %p146, %p147
      %p149 = scmp.ne.s32.totalorder %s140, %s141
      %p150 = scmp.eq.s32.totalorder %s46, 0
      %p151 = por %p149, %p150
      %p152 = scmp.ne.s32.totalorder %s140, %s141
      %p153 = scmp.eq.s32.totalorder %s47, 3
      %p154 = por %p152, %p153
      %p156 = scmp.ne.s32.totalorder %s141, %s155
      %p157 = scmp.eq.s32.totalorder %s47, 0
      %p158 = por %p156, %p157
      %s160 = sadd.s32 %s159, 1
      %p163 = scmp.eq.s32.totalorder %s41, 3
      %p164 = scmp.ne.s32.totalorder %s159, %s161
      %p165 = scmp.eq.s32.totalorder %s41, 0
      %p166 = por %p164, %p165
      %p167 = scmp.ne.s32.totalorder %s159, %s161
      %p168 = scmp.eq.s32.totalorder %s46, 3
      %p169 = por %p167, %p168
      %p170 = scmp.ne.s32.totalorder %s161, %s162
      %p171 = scmp.eq.s32.totalorder %s46, 0
      %p172 = por %p170, %p171
      %p173 = scmp.ne.s32.totalorder %s161, %s162
      %p174 = scmp.eq.s32.totalorder %s47, 3
      %p175 = por %p173, %p174
      %p177 = scmp.ne.s32.totalorder %s162, %s176
      %p178 = scmp.eq.s32.totalorder %s47, 0
      %p179 = por %p177, %p178
      %s181 = sadd.s32 %s180, 1
      %p184 = scmp.eq.s32.totalorder %s41, 3
      %p185 = scmp.ne.s32.totalorder %s180, %s182
      %p186 = scmp.eq.s32.totalorder %s41, 0
      %p187 = por %p185, %p186
      %p188 = scmp.ne.s32.totalorder %s180, %s182
      %p189 = scmp.eq.s32.totalorder %s46, 3
      %p190 = por %p188, %p189
      %p191 = scmp.ne.s32.totalorder %s182, %s183
      %p192 = scmp.eq.s32.totalorder %s46, 0
      %p193 = por %p191, %p192
      %p194 = scmp.ne.s32.totalorder %s182, %s183
      %p195 = scmp.eq.s32.totalorder %s47, 3
      %p196 = por %p194, %p195
      %p198 = scmp.ne.s32.totalorder %s183, %s197
      %p199 = scmp.eq.s32.totalorder %s47, 0
      %p200 = por %p198, %p199
      %s202 = sadd.s32 %s201, 1
      %p205 = scmp.eq.s32.totalorder %s41, 3
      %p206 = scmp.ne.s32.totalorder %s201, %s203
      %p207 = scmp.eq.s32.totalorder %s41, 0
      %p208 = por %p206, %p207
      %p209 = scmp.ne.s32.totalorder %s201, %s203
      %p210 = scmp.eq.s32.totalorder %s46, 3
      %p211 = por %p209, %p210
      %p212 = scmp.ne.s32.totalorder %s203, %s204
      %p213 = scmp.eq.s32.totalorder %s46, 0
      %p214 = por %p212, %p213
      %p215 = scmp.ne.s32.totalorder %s203, %s204
      %p216 = scmp.eq.s32.totalorder %s47, 3
      %p217 = por %p215, %p216
      %p219 = scmp.ne.s32.totalorder %s204, %s218
      %p220 = scmp.eq.s32.totalorder %s47, 0
      %p221 = por %p219, %p220
      %s223 = sadd.s32 %s222, 1
      %p226 = scmp.eq.s32.totalorder %s41, 3
      %p227 = scmp.ne.s32.totalorder %s222, %s224
      %p228 = scmp.eq.s32.totalorder %s41, 0
      %p229 = por %p227, %p228
      %p230 = scmp.ne.s32.totalorder %s222, %s224
      %p231 = scmp.eq.s32.totalorder %s46, 3
      %p232 = por %p230, %p231
      %p233 = scmp.ne.s32.totalorder %s224, %s225
      %p234 = scmp.eq.s32.totalorder %s46, 0
      %p235 = por %p233, %p234
      %p236 = scmp.ne.s32.totalorder %s224, %s225
      %p237 = scmp.eq.s32.totalorder %s47, 3
      %p238 = por %p236, %p237
      %p240 = scmp.ne.s32.totalorder %s225, %s239
      %p241 = scmp.eq.s32.totalorder %s47, 0
      %p242 = por %p240, %p241
      %s244 = sadd.s32 %s243, 1
      %p247 = scmp.eq.s32.totalorder %s41, 3
      %p248 = scmp.ne.s32.totalorder %s243, %s245
      %p249 = scmp.eq.s32.totalorder %s41, 0
      %p250 = por %p248, %p249
      %p251 = scmp.ne.s32.totalorder %s243, %s245
      %p252 = scmp.eq.s32.totalorder %s46, 3
      %p253 = por %p251, %p252
      %p254 = scmp.ne.s32.totalorder %s245, %s246
      %p255 = scmp.eq.s32.totalorder %s46, 0
      %p256 = por %p254, %p255
      %p257 = scmp.ne.s32.totalorder %s245, %s246
      %p258 = scmp.eq.s32.totalorder %s47, 3
      %p259 = por %p257, %p258
      %p261 = scmp.ne.s32.totalorder %s246, %s260
      %p262 = scmp.eq.s32.totalorder %s47, 0
      %p263 = por %p261, %p262
      %s265 = sadd.s32 %s264, 1
      %p268 = scmp.eq.s32.totalorder %s41, 3
      %p269 = scmp.ne.s32.totalorder %s264, %s266
      %p270 = scmp.eq.s32.totalorder %s41, 0
      %p271 = por %p269, %p270
      %p272 = scmp.ne.s32.totalorder %s264, %s266
      %p273 = scmp.eq.s32.totalorder %s46, 3
      %p274 = por %p272, %p273
      %p275 = scmp.ne.s32.totalorder %s266, %s267
      %p276 = scmp.eq.s32.totalorder %s46, 0
      %p277 = por %p275, %p276
      %p278 = scmp.ne.s32.totalorder %s266, %s267
      %p279 = scmp.eq.s32.totalorder %s47, 3
      %p280 = por %p278, %p279
      %p282 = scmp.ne.s32.totalorder %s267, %s281
      %p283 = scmp.eq.s32.totalorder %s47, 0
      %p284 = por %p282, %p283
      %s286 = sadd.s32 %s285, 1
      %p289 = scmp.eq.s32.totalorder %s41, 3
      %p290 = scmp.ne.s32.totalorder %s285, %s287
      %p291 = scmp.eq.s32.totalorder %s41, 0
      %p292 = por %p290, %p291
      %p293 = scmp.ne.s32.totalorder %s285, %s287
      %p294 = scmp.eq.s32.totalorder %s46, 3
      %p295 = por %p293, %p294
      %p296 = scmp.ne.s32.totalorder %s287, %s288
      %p297 = scmp.eq.s32.totalorder %s46, 0
      %p298 = por %p296, %p297
      %p299 = scmp.ne.s32.totalorder %s287, %s288
      %p300 = scmp.eq.s32.totalorder %s47, 3
      %p301 = por %p299, %p300
      %p303 = scmp.ne.s32.totalorder %s288, %s302
      %p304 = scmp.eq.s32.totalorder %s47, 0
      %p305 = por %p303, %p304
      %s307 = sadd.s32 %s306, 1
      %p310 = scmp.eq.s32.totalorder %s41, 3
      %p311 = scmp.ne.s32.totalorder %s306, %s308
      %p312 = scmp.eq.s32.totalorder %s41, 0
      %p313 = por %p311, %p312
      %p314 = scmp.ne.s32.totalorder %s306, %s308
      %p315 = scmp.eq.s32.totalorder %s46, 3
      %p316 = por %p314, %p315
      %p317 = scmp.ne.s32.totalorder %s308, %s309
      %p318 = scmp.eq.s32.totalorder %s46, 0
      %p319 = por %p317, %p318
      %p320 = scmp.ne.s32.totalorder %s308, %s309
      %p321 = scmp.eq.s32.totalorder %s47, 3
      %p322 = por %p320, %p321
      %p324 = scmp.ne.s32.totalorder %s309, %s323
      %p325 = scmp.eq.s32.totalorder %s47, 0
      %p326 = por %p324, %p325
      %s328 = sadd.s32 %s327, 1
      %p331 = scmp.eq.s32.totalorder %s41, 3
      %p332 = scmp.ne.s32.totalorder %s327, %s329
      %p333 = scmp.eq.s32.totalorder %s41, 0
      %p334 = por %p332, %p333
      %p335 = scmp.ne.s32.totalorder %s327, %s329
      %p336 = scmp.eq.s32.totalorder %s46, 3
      %p337 = por %p335, %p336
      %p338 = scmp.ne.s32.totalorder %s329, %s330
      %p339 = scmp.eq.s32.totalorder %s46, 0
      %p340 = por %p338, %p339
      %p341 = scmp.ne.s32.totalorder %s329, %s330
      %p342 = scmp.eq.s32.totalorder %s47, 3
      %p343 = por %p341, %p342
      %p345 = scmp.ne.s32.totalorder %s330, %s344
      %p346 = scmp.eq.s32.totalorder %s47, 0
      %p347 = por %p345, %p346
      %s349 = sadd.s32 %s348, 1
      %p352 = scmp.eq.s32.totalorder %s41, 3
      %p353 = scmp.ne.s32.totalorder %s348, %s350
      %p354 = scmp.eq.s32.totalorder %s41, 0
      %p355 = por %p353, %p354
      %p356 = scmp.ne.s32.totalorder %s348, %s350
      %p357 = scmp.eq.s32.totalorder %s46, 3
      %p358 = por %p356, %p357
      %p359 = scmp.ne.s32.totalorder %s350, %s351
      %p360 = scmp.eq.s32.totalorder %s46, 0
      %p361 = por %p359, %p360
      %p362 = scmp.ne.s32.totalorder %s350, %s351
      %p363 = scmp.eq.s32.totalorder %s47, 3
      %p364 = por %p362, %p363
      %p366 = scmp.ne.s32.totalorder %s351, %s365
      %p367 = scmp.eq.s32.totalorder %s47, 0
      %p368 = por %p366, %p367
      %s370 = sadd.s32 %s369, 1
      %p373 = scmp.eq.s32.totalorder %s41, 3
      %p374 = scmp.ne.s32.totalorder %s369, %s371
      %p375 = scmp.eq.s32.totalorder %s41, 0
      %p376 = por %p374, %p375
      %p377 = scmp.ne.s32.totalorder %s369, %s371
      %p378 = scmp.eq.s32.totalorder %s46, 3
      %p379 = por %p377, %p378
      %p380 = scmp.ne.s32.totalorder %s371, %s372
      %p381 = scmp.eq.s32.totalorder %s46, 0
      %p382 = por %p380, %p381
      %p383 = scmp.ne.s32.totalorder %s371, %s372
      %p384 = scmp.eq.s32.totalorder %s47, 3
      %p385 = por %p383, %p384
      %p387 = scmp.ne.s32.totalorder %s372, %s386
      %p388 = scmp.eq.s32.totalorder %s47, 0
      %p389 = por %p387, %p388
      %s391 = sadd.s32 %s390, 1
      %p394 = scmp.eq.s32.totalorder %s41, 3
      %p395 = scmp.ne.s32.totalorder %s390, %s392
      %p396 = scmp.eq.s32.totalorder %s41, 0
      %p397 = por %p395, %p396
      %p398 = scmp.ne.s32.totalorder %s390, %s392
      %p399 = scmp.eq.s32.totalorder %s46, 3
      %p400 = por %p398, %p399
      %p401 = scmp.ne.s32.totalorder %s392, %s393
      %p402 = scmp.eq.s32.totalorder %s46, 0
      %p403 = por %p401, %p402
      %p404 = scmp.ne.s32.totalorder %s392, %s393
      %p405 = scmp.eq.s32.totalorder %s47, 3
      %p406 = por %p404, %p405
      %p408 = scmp.ne.s32.totalorder %s393, %s407
      %p409 = scmp.eq.s32.totalorder %s47, 0
      %p410 = por %p408, %p409
      %s412 = sadd.s32 %s411, 1
      %p415 = scmp.eq.s32.totalorder %s41, 3
      %p416 = scmp.ne.s32.totalorder %s411, %s413
      %p417 = scmp.eq.s32.totalorder %s41, 0
      %p418 = por %p416, %p417
      %p419 = scmp.ne.s32.totalorder %s411, %s413
      %p420 = scmp.eq.s32.totalorder %s46, 3
      %p421 = por %p419, %p420
      %p422 = scmp.ne.s32.totalorder %s413, %s414
      %p423 = scmp.eq.s32.totalorder %s46, 0
      %p424 = por %p422, %p423
      %p425 = scmp.ne.s32.totalorder %s413, %s414
      %p426 = scmp.eq.s32.totalorder %s47, 3
      %p427 = por %p425, %p426
      %p429 = scmp.ne.s32.totalorder %s414, %s428
      %p430 = scmp.eq.s32.totalorder %s47, 0
      %p431 = por %p429, %p430
      %s433 = sadd.s32 %s432, 1
      %p436 = scmp.eq.s32.totalorder %s41, 3
      %p437 = scmp.ne.s32.totalorder %s432, %s434
      %p438 = scmp.eq.s32.totalorder %s41, 0
      %p439 = por %p437, %p438
      %p440 = scmp.ne.s32.totalorder %s432, %s434
      %p441 = scmp.eq.s32.totalorder %s46, 3
      %p442 = por %p440, %p441
      %p443 = scmp.ne.s32.totalorder %s434, %s435
      %p444 = scmp.eq.s32.totalorder %s46, 0
      %p445 = por %p443, %p444
      %p446 = scmp.ne.s32.totalorder %s434, %s435
      %p447 = scmp.eq.s32.totalorder %s47, 3
      %p448 = por %p446, %p447
      %p450 = scmp.ne.s32.totalorder %s435, %s449
      %p451 = scmp.eq.s32.totalorder %s47, 0
      %p452 = por %p450, %p451
      %s453 = ssub.s32 %s48, %s60
      %p454 = scmp.eq.s32.totalorder %s453, 0
      %s456 = sadd.s32 %s455, 1
      %s457 = scalar_select %p454, %s455, %s456
      %p460 = pneg %p454
      %p461 = scmp.eq.s32.totalorder %s41, 3
      %p462 = por %p460, %p461
      %p463 = scmp.ne.s32.totalorder %s455, %s458
      %p464 = scmp.eq.s32.totalorder %s41, 0
      %p465 = por %p463, %p464
      %p466 = scmp.ne.s32.totalorder %s455, %s458
      %p467 = scmp.eq.s32.totalorder %s46, 3
      %p468 = por %p466, %p467
      %p469 = scmp.ne.s32.totalorder %s458, %s459
      %p470 = scmp.eq.s32.totalorder %s46, 0
      %p471 = por %p469, %p470
      %p472 = scmp.ne.s32.totalorder %s458, %s459
      %p473 = scmp.eq.s32.totalorder %s47, 3
      %p474 = por %p472, %p473
      %p476 = scmp.ne.s32.totalorder %s459, %s475
      %p477 = scmp.eq.s32.totalorder %s47, 0
      %p478 = por %p476, %p477
      %p479 = scmp.le.s32.totalorder 1, %s41
      %p480 = scmp.lt.s32.totalorder %s41, 5
      %p481 = pnand %p479, %p480
      %p482 = pneg %p481
      // Predicated region
      $region9: #{tpu_custom_call.1} parent=5 // pred_check
        _
      $region10: #{tpu_custom_call.1} parent=5 // pred_check_branch
        %484 = sbr.rel (%p481) target = $region12
      $region11: #{tpu_custom_call.1} parent=5 // pred_region
        %s485 = ssub.s32 %s41, 1
        // Predicated region
        $region13: #{tpu_custom_call.1} parent=11 // pred_check
          %p486 = pneg %p130
        $region14: #{tpu_custom_call.1} parent=11 // pred_check_branch
          %488 = sbr.rel (%p486) target = $region16
        $region15: #{tpu_custom_call.1} parent=11 // pred_region
          %s490 = ssub.s32 16, 16
          %491 = vsyncadd [#allocation9], %s490
          %s493 = sshll.u32 [#allocation10], 4
          %s494 = int_to_ptr.vmem [resolvable:$true] %s493
          %496 = dma.hbm_to_vmem [thread:$0]  %s2, 16, %s494, [#allocation9]
        $region16: #{tpu_custom_call.1} parent=11 // pred_fallthru
          _
        // Predicated region
        $region17: #{tpu_custom_call.1} parent=11 // pred_check
          %p497 = pneg %p151
        $region18: #{tpu_custom_call.1} parent=11 // pred_check_branch
          %499 = sbr.rel (%p497) target = $region20
        $region19: #{tpu_custom_call.1} parent=11 // pred_region
          %s501 = ssub.s32 16, 16
          %502 = vsyncadd [#allocation12], %s501
          %s504 = sshll.u32 [#allocation11], 4
          %s505 = int_to_ptr.vmem [resolvable:$true] %s504
          %507 = dma.hbm_to_vmem [thread:$0]  %s3, 16, %s505, [#allocation12]
        $region20: #{tpu_custom_call.1} parent=11 // pred_fallthru
          _
        // Predicated region
        $region21: #{tpu_custom_call.1} parent=11 // pred_check
          %p508 = pneg %p172
        $region22: #{tpu_custom_call.1} parent=11 // pred_check_branch
          %510 = sbr.rel (%p508) target = $region24
        $region23: #{tpu_custom_call.1} parent=11 // pred_region
          %s512 = ssub.s32 1024, 1024
          %513 = vsyncadd [#allocation12], %s512
          %s514 = sshll.u32 [#allocation13], 4
          %s515 = int_to_ptr.vmem [resolvable:$true] %s514
          %520 = dma.hbm_to_vmem [thread:$0]  %s4, 1024, %s515, [#allocation12], 64, 64, 4
        $region24: #{tpu_custom_call.1} parent=11 // pred_fallthru
          _
        // Predicated region
        $region25: #{tpu_custom_call.1} parent=11 // pred_check
          %p521 = pneg %p193
        $region26: #{tpu_custom_call.1} parent=11 // pred_check_branch
          %523 = sbr.rel (%p521) target = $region28
        $region27: #{tpu_custom_call.1} parent=11 // pred_region
          %s525 = ssub.s32 16, 16
          %526 = vsyncadd [#allocation15], %s525
          %s528 = sshll.u32 [#allocation14], 4
          %s529 = int_to_ptr.vmem [resolvable:$true] %s528
          %531 = dma.hbm_to_vmem [thread:$0]  %s5, 16, %s529, [#allocation15]
        $region28: #{tpu_custom_call.1} parent=11 // pred_fallthru
          _
        // Predicated region
        $region29: #{tpu_custom_call.1} parent=11 // pred_check
          %p532 = pneg %p214
        $region30: #{tpu_custom_call.1} parent=11 // pred_check_branch
          %534 = sbr.rel (%p532) target = $region32
        $region31: #{tpu_custom_call.1} parent=11 // pred_region
          %s536 = ssub.s32 16, 16
          %537 = vsyncadd [#allocation15], %s536
          %s539 = sshll.u32 [#allocation16], 4
          %s540 = int_to_ptr.vmem [resolvable:$true] %s539
          %542 = dma.hbm_to_vmem [thread:$0]  %s6, 16, %s540, [#allocation15]
        $region32: #{tpu_custom_call.1} parent=11 // pred_fallthru
          _
        // Predicated region
        $region33: #{tpu_custom_call.1} parent=11 // pred_check
          %p543 = pneg %p235
        $region34: #{tpu_custom_call.1} parent=11 // pred_check_branch
          %545 = sbr.rel (%p543) target = $region36
        $region35: #{tpu_custom_call.1} parent=11 // pred_region
          %s547 = ssub.s32 16, 16
          %548 = vsyncadd [#allocation18], %s547
          %s550 = sshll.u32 [#allocation17], 4
          %s551 = int_to_ptr.vmem [resolvable:$true] %s550
          %553 = dma.hbm_to_vmem [thread:$0]  %s7, 16, %s551, [#allocation18]
        $region36: #{tpu_custom_call.1} parent=11 // pred_fallthru
          _
        // Predicated region
        $region37: #{tpu_custom_call.1} parent=11 // pred_check
          %p554 = pneg %p256
        $region38: #{tpu_custom_call.1} parent=11 // pred_check_branch
          %556 = sbr.rel (%p554) target = $region40
        $region39: #{tpu_custom_call.1} parent=11 // pred_region
          %s558 = ssub.s32 256, 256
          %559 = vsyncadd [#allocation18], %s558
          %s560 = sshll.u32 [#allocation19], 4
          %s561 = int_to_ptr.vmem [resolvable:$true] %s560
          %566 = dma.hbm_to_vmem [thread:$0]  %s8, 256, %s561, [#allocation18], 64, 64, 4
        $region40: #{tpu_custom_call.1} parent=11 // pred_fallthru
          _
        // Predicated region
        $region41: #{tpu_custom_call.1} parent=11 // pred_check
          %p567 = pneg %p277
        $region42: #{tpu_custom_call.1} parent=11 // pred_check_branch
          %569 = sbr.rel (%p567) target = $region44
        $region43: #{tpu_custom_call.1} parent=11 // pred_region
          %s571 = ssub.s32 16, 16
          %572 = vsyncadd [#allocation21], %s571
          %s574 = sshll.u32 [#allocation20], 4
          %s575 = int_to_ptr.vmem [resolvable:$true] %s574
          %577 = dma.hbm_to_vmem [thread:$0]  %s9, 16, %s575, [#allocation21]
        $region44: #{tpu_custom_call.1} parent=11 // pred_fallthru
          _
        // Predicated region
        $region45: #{tpu_custom_call.1} parent=11 // pred_check
          %p578 = pneg %p298
        $region46: #{tpu_custom_call.1} parent=11 // pred_check_branch
          %580 = sbr.rel (%p578) target = $region48
        $region47: #{tpu_custom_call.1} parent=11 // pred_region
          %s582 = ssub.s32 16, 16
          %583 = vsyncadd [#allocation21], %s582
          %s585 = sshll.u32 [#allocation22], 4
          %s586 = int_to_ptr.vmem [resolvable:$true] %s585
          %588 = dma.hbm_to_vmem [thread:$0]  %s10, 16, %s586, [#allocation21]
        $region48: #{tpu_custom_call.1} parent=11 // pred_fallthru
          _
        // Predicated region
        $region49: #{tpu_custom_call.1} parent=11 // pred_check
          %p589 = pneg %p319
        $region50: #{tpu_custom_call.1} parent=11 // pred_check_branch
          %591 = sbr.rel (%p589) target = $region52
        $region51: #{tpu_custom_call.1} parent=11 // pred_region
          %s593 = ssub.s32 16, 16
          %594 = vsyncadd [#allocation24], %s593
          %s596 = sshll.u32 [#allocation23], 4
          %s597 = int_to_ptr.vmem [resolvable:$true] %s596
          %599 = dma.hbm_to_vmem [thread:$0]  %s11, 16, %s597, [#allocation24]
        $region52: #{tpu_custom_call.1} parent=11 // pred_fallthru
          _
        // Predicated region
        $region53: #{tpu_custom_call.1} parent=11 // pred_check
          %p600 = pneg %p340
        $region54: #{tpu_custom_call.1} parent=11 // pred_check_branch
          %602 = sbr.rel (%p600) target = $region56
        $region55: #{tpu_custom_call.1} parent=11 // pred_region
          %s604 = ssub.s32 256, 256
          %605 = vsyncadd [#allocation24], %s604
          %s606 = sshll.u32 [#allocation25], 4
          %s607 = int_to_ptr.vmem [resolvable:$true] %s606
          %612 = dma.hbm_to_vmem [thread:$0]  %s12, 256, %s607, [#allocation24], 64, 64, 4
        $region56: #{tpu_custom_call.1} parent=11 // pred_fallthru
          _
        // Predicated region
        $region57: #{tpu_custom_call.1} parent=11 // pred_check
          %p613 = pneg %p361
        $region58: #{tpu_custom_call.1} parent=11 // pred_check_branch
          %615 = sbr.rel (%p613) target = $region60
        $region59: #{tpu_custom_call.1} parent=11 // pred_region
          %s617 = ssub.s32 16, 16
          %618 = vsyncadd [#allocation27], %s617
          %s620 = sshll.u32 [#allocation26], 4
          %s621 = int_to_ptr.vmem [resolvable:$true] %s620
          %623 = dma.hbm_to_vmem [thread:$0]  %s13, 16, %s621, [#allocation27]
        $region60: #{tpu_custom_call.1} parent=11 // pred_fallthru
          _
        // Predicated region
        $region61: #{tpu_custom_call.1} parent=11 // pred_check
          %p624 = pneg %p382
        $region62: #{tpu_custom_call.1} parent=11 // pred_check_branch
          %626 = sbr.rel (%p624) target = $region64
        $region63: #{tpu_custom_call.1} parent=11 // pred_region
          %s628 = ssub.s32 16, 16
          %629 = vsyncadd [#allocation27], %s628
          %s631 = sshll.u32 [#allocation28], 4
          %s632 = int_to_ptr.vmem [resolvable:$true] %s631
          %634 = dma.hbm_to_vmem [thread:$0]  %s14, 16, %s632, [#allocation27]
        $region64: #{tpu_custom_call.1} parent=11 // pred_fallthru
          _
        // Predicated region
        $region65: #{tpu_custom_call.1} parent=11 // pred_check
          %p635 = pneg %p403
        $region66: #{tpu_custom_call.1} parent=11 // pred_check_branch
          %637 = sbr.rel (%p635) target = $region68
        $region67: #{tpu_custom_call.1} parent=11 // pred_region
          %s639 = ssub.s32 16, 16
          %640 = vsyncadd [#allocation30], %s639
          %s642 = sshll.u32 [#allocation29], 4
          %s643 = int_to_ptr.vmem [resolvable:$true] %s642
          %645 = dma.hbm_to_vmem [thread:$0]  %s15, 16, %s643, [#allocation30]
        $region68: #{tpu_custom_call.1} parent=11 // pred_fallthru
          _
        // Predicated region
        $region69: #{tpu_custom_call.1} parent=11 // pred_check
          %p646 = pneg %p424
        $region70: #{tpu_custom_call.1} parent=11 // pred_check_branch
          %648 = sbr.rel (%p646) target = $region72
        $region71: #{tpu_custom_call.1} parent=11 // pred_region
          %s650 = ssub.s32 512, 512
          %651 = vsyncadd [#allocation30], %s650
          %s652 = sshll.u32 [#allocation31], 4
          %s653 = int_to_ptr.vmem [resolvable:$true] %s652
          %658 = dma.hbm_to_vmem [thread:$0]  %s16, 512, %s653, [#allocation30], 64, 64, 4
        $region72: #{tpu_custom_call.1} parent=11 // pred_fallthru
          _
        // Predicated region
        $region73: #{tpu_custom_call.1} parent=11 // pred_check
          %p659 = pneg %p445
        $region74: #{tpu_custom_call.1} parent=11 // pred_check_branch
          %661 = sbr.rel (%p659) target = $region76
        $region75: #{tpu_custom_call.1} parent=11 // pred_region
          %s663 = ssub.s32 128, 128
          %664 = vsyncadd [#allocation33], %s663
          %s666 = sshll.u32 [#allocation32], 4
          %s667 = int_to_ptr.vmem [resolvable:$true] %s666
          %669 = dma.hbm_to_vmem [thread:$0]  %s17, 128, %s667, [#allocation33]
        $region76: #{tpu_custom_call.1} parent=11 // pred_fallthru
          _
      $region12: #{tpu_custom_call.1} parent=5 // pred_fallthru
        _
      %p670 = scmp.lt.s32.totalorder %s41, 4
      // Predicated region
      $region77: #{tpu_custom_call.1} parent=5 // pred_check
        %p671 = pneg %p670
      $region78: #{tpu_custom_call.1} parent=5 // pred_check_branch
        %673 = sbr.rel (%p671) target = $region80
      $region79: #{tpu_custom_call.1} parent=5 // pred_region
        // Predicated region
        $region81: #{tpu_custom_call.1} parent=79 // pred_check
          %p674 = pneg %p75
        $region82: #{tpu_custom_call.1} parent=79 // pred_check_branch
          %676 = sbr.rel (%p674) target = $region84
        $region83: #{tpu_custom_call.1} parent=79 // pred_region
          %s677 = sand.u32 %s65, 1
          %s678 = scalar_lea.sflag [#allocation6], %s677
          %s679 = sand.u32 %s65, 1
          %s680 = smul.addr %s679, 64
          %s681 = scalar_lea.vmem [#allocation5], %s680
          %s682 = smul.u32 16, %s49
          %s684 = ssub.s32 1024, 1024
          %685 = vsyncadd %s678, %s684
          %s686 = smul.addr %s48, 32
          %s687 = sadd.s32 %s682, %s686
          %s688 = smul.addr %s687, 64
          %s689 = scalar_lea.hbm %s0, %s688
          %s690 = sshll.u32 %s681, 4
          %s691 = int_to_ptr.vmem [resolvable:$true] %s690
          %696 = dma.hbm_to_vmem [thread:$0]  %s689, 1024, %s691, %s678, 64, 64, 4
        $region84: #{tpu_custom_call.1} parent=79 // pred_fallthru
          _
        // Predicated region
        $region85: #{tpu_custom_call.1} parent=79 // pred_check
          %p697 = pneg %p103
        $region86: #{tpu_custom_call.1} parent=79 // pred_check_branch
          %699 = sbr.rel (%p697) target = $region88
        $region87: #{tpu_custom_call.1} parent=79 // pred_region
          %s700 = sand.u32 %s41, 1
          %s701 = scalar_lea.sflag [#allocation9], %s700
          %s702 = sand.u32 %s93, 1
          %s703 = scalar_lea.vmem [#allocation8], %s702
          %s705 = ssub.s32 16, 16
          %706 = vsyncadd %s701, %s705
          %s707 = smul.addr %s48, 2
          %s708 = sadd.s32 %s49, %s707
          %s709 = smul.addr %s708, 16
          %s710 = scalar_lea.hbm %s1, %s709
          %s712 = sshll.u32 %s703, 4
          %s713 = int_to_ptr.vmem [resolvable:$true] %s712
          %715 = dma.hbm_to_vmem [thread:$0]  %s710, 16, %s713, %s701
        $region88: #{tpu_custom_call.1} parent=79 // pred_fallthru
          _
      $region80: #{tpu_custom_call.1} parent=5 // pred_fallthru
        _
      %p716 = scmp.le.s32.totalorder 1, %s41
      %p717 = scmp.lt.s32.totalorder %s41, 5
      %p718 = pnand %p716, %p717
      %p719 = pneg %p718
      // Predicated region
      $region89: #{tpu_custom_call.1} parent=5 // pred_check
        _
      $region90: #{tpu_custom_call.1} parent=5 // pred_check_branch
        %721 = sbr.rel (%p718) target = $region92
      $region91: #{tpu_custom_call.1} parent=5 // pred_region
        %s722 = ssub.s32 %s41, 1
        %s723 = sand.u32 %s68, 1
        %s724 = scalar_lea.sflag [#allocation6], %s723
        %s725 = sand.u32 %s68, 1
        %s726 = smul.addr %s725, 64
        %s727 = scalar_lea.vmem [#allocation5], %s726
        // Predicated region
        $region93: #{tpu_custom_call.1} parent=91 // pred_check
          %p728 = pneg %p81
        $region94: #{tpu_custom_call.1} parent=91 // pred_check_branch
          %730 = sbr.rel (%p728) target = $region96
        $region95: #{tpu_custom_call.1} parent=91 // pred_region
          %731 = dma.done %s724, 1024
        $region96: #{tpu_custom_call.1} parent=91 // pred_fallthru
          _
        %s732 = sand.u32 %s46, 1
        %s733 = scalar_lea.sflag [#allocation9], %s732
        %s734 = sand.u32 %s96, 1
        %s735 = scalar_lea.vmem [#allocation8], %s734
        // Predicated region
        $region97: #{tpu_custom_call.1} parent=91 // pred_check
          %p736 = pneg %p109
        $region98: #{tpu_custom_call.1} parent=91 // pred_check_branch
          %738 = sbr.rel (%p736) target = $region100
        $region99: #{tpu_custom_call.1} parent=91 // pred_region
          %739 = dma.done %s733, 16
        $region100: #{tpu_custom_call.1} parent=91 // pred_fallthru
          _
        // Predicated region
        $region101: #{tpu_custom_call.1} parent=91 // pred_check
          %p740 = pneg %p130
        $region102: #{tpu_custom_call.1} parent=91 // pred_check_branch
          %742 = sbr.rel (%p740) target = $region104
        $region103: #{tpu_custom_call.1} parent=91 // pred_region
          %743 = dma.done [#allocation9], 16
        $region104: #{tpu_custom_call.1} parent=91 // pred_fallthru
          _
        // Predicated region
        $region105: #{tpu_custom_call.1} parent=91 // pred_check
          %p744 = pneg %p151
        $region106: #{tpu_custom_call.1} parent=91 // pred_check_branch
          %746 = sbr.rel (%p744) target = $region108
        $region107: #{tpu_custom_call.1} parent=91 // pred_region
          %747 = dma.done [#allocation12], 16
        $region108: #{tpu_custom_call.1} parent=91 // pred_fallthru
          _
        // Predicated region
        $region109: #{tpu_custom_call.1} parent=91 // pred_check
          %p748 = pneg %p172
        $region110: #{tpu_custom_call.1} parent=91 // pred_check_branch
          %750 = sbr.rel (%p748) target = $region112
        $region111: #{tpu_custom_call.1} parent=91 // pred_region
          %751 = dma.done [#allocation12], 1024
        $region112: #{tpu_custom_call.1} parent=91 // pred_fallthru
          _
        // Predicated region
        $region113: #{tpu_custom_call.1} parent=91 // pred_check
          %p752 = pneg %p193
        $region114: #{tpu_custom_call.1} parent=91 // pred_check_branch
          %754 = sbr.rel (%p752) target = $region116
        $region115: #{tpu_custom_call.1} parent=91 // pred_region
          %755 = dma.done [#allocation15], 16
        $region116: #{tpu_custom_call.1} parent=91 // pred_fallthru
          _
        // Predicated region
        $region117: #{tpu_custom_call.1} parent=91 // pred_check
          %p756 = pneg %p214
        $region118: #{tpu_custom_call.1} parent=91 // pred_check_branch
          %758 = sbr.rel (%p756) target = $region120
        $region119: #{tpu_custom_call.1} parent=91 // pred_region
          %759 = dma.done [#allocation15], 16
        $region120: #{tpu_custom_call.1} parent=91 // pred_fallthru
          _
        // Predicated region
        $region121: #{tpu_custom_call.1} parent=91 // pred_check
          %p760 = pneg %p235
        $region122: #{tpu_custom_call.1} parent=91 // pred_check_branch
          %762 = sbr.rel (%p760) target = $region124
        $region123: #{tpu_custom_call.1} parent=91 // pred_region
          %763 = dma.done [#allocation18], 16
        $region124: #{tpu_custom_call.1} parent=91 // pred_fallthru
          _
        // Predicated region
        $region125: #{tpu_custom_call.1} parent=91 // pred_check
          %p764 = pneg %p256
        $region126: #{tpu_custom_call.1} parent=91 // pred_check_branch
          %766 = sbr.rel (%p764) target = $region128
        $region127: #{tpu_custom_call.1} parent=91 // pred_region
          %767 = dma.done [#allocation18], 256
        $region128: #{tpu_custom_call.1} parent=91 // pred_fallthru
          _
        // Predicated region
        $region129: #{tpu_custom_call.1} parent=91 // pred_check
          %p768 = pneg %p277
        $region130: #{tpu_custom_call.1} parent=91 // pred_check_branch
          %770 = sbr.rel (%p768) target = $region132
        $region131: #{tpu_custom_call.1} parent=91 // pred_region
          %771 = dma.done [#allocation21], 16
        $region132: #{tpu_custom_call.1} parent=91 // pred_fallthru
          _
        // Predicated region
        $region133: #{tpu_custom_call.1} parent=91 // pred_check
          %p772 = pneg %p298
        $region134: #{tpu_custom_call.1} parent=91 // pred_check_branch
          %774 = sbr.rel (%p772) target = $region136
        $region135: #{tpu_custom_call.1} parent=91 // pred_region
          %775 = dma.done [#allocation21], 16
        $region136: #{tpu_custom_call.1} parent=91 // pred_fallthru
          _
        // Predicated region
        $region137: #{tpu_custom_call.1} parent=91 // pred_check
          %p776 = pneg %p319
        $region138: #{tpu_custom_call.1} parent=91 // pred_check_branch
          %778 = sbr.rel (%p776) target = $region140
        $region139: #{tpu_custom_call.1} parent=91 // pred_region
          %779 = dma.done [#allocation24], 16
        $region140: #{tpu_custom_call.1} parent=91 // pred_fallthru
          _
        // Predicated region
        $region141: #{tpu_custom_call.1} parent=91 // pred_check
          %p780 = pneg %p340
        $region142: #{tpu_custom_call.1} parent=91 // pred_check_branch
          %782 = sbr.rel (%p780) target = $region144
        $region143: #{tpu_custom_call.1} parent=91 // pred_region
          %783 = dma.done [#allocation24], 256
        $region144: #{tpu_custom_call.1} parent=91 // pred_fallthru
          _
        // Predicated region
        $region145: #{tpu_custom_call.1} parent=91 // pred_check
          %p784 = pneg %p361
        $region146: #{tpu_custom_call.1} parent=91 // pred_check_branch
          %786 = sbr.rel (%p784) target = $region148
        $region147: #{tpu_custom_call.1} parent=91 // pred_region
          %787 = dma.done [#allocation27], 16
        $region148: #{tpu_custom_call.1} parent=91 // pred_fallthru
          _
        // Predicated region
        $region149: #{tpu_custom_call.1} parent=91 // pred_check
          %p788 = pneg %p382
        $region150: #{tpu_custom_call.1} parent=91 // pred_check_branch
          %790 = sbr.rel (%p788) target = $region152
        $region151: #{tpu_custom_call.1} parent=91 // pred_region
          %791 = dma.done [#allocation27], 16
        $region152: #{tpu_custom_call.1} parent=91 // pred_fallthru
          _
        // Predicated region
        $region153: #{tpu_custom_call.1} parent=91 // pred_check
          %p792 = pneg %p403
        $region154: #{tpu_custom_call.1} parent=91 // pred_check_branch
          %794 = sbr.rel (%p792) target = $region156
        $region155: #{tpu_custom_call.1} parent=91 // pred_region
          %795 = dma.done [#allocation30], 16
        $region156: #{tpu_custom_call.1} parent=91 // pred_fallthru
          _
        // Predicated region
        $region157: #{tpu_custom_call.1} parent=91 // pred_check
          %p796 = pneg %p424
        $region158: #{tpu_custom_call.1} parent=91 // pred_check_branch
          %798 = sbr.rel (%p796) target = $region160
        $region159: #{tpu_custom_call.1} parent=91 // pred_region
          %799 = dma.done [#allocation30], 512
        $region160: #{tpu_custom_call.1} parent=91 // pred_fallthru
          _
        // Predicated region
        $region161: #{tpu_custom_call.1} parent=91 // pred_check
          %p800 = pneg %p445
        $region162: #{tpu_custom_call.1} parent=91 // pred_check_branch
          %802 = sbr.rel (%p800) target = $region164
        $region163: #{tpu_custom_call.1} parent=91 // pred_region
          %803 = dma.done [#allocation33], 128
        $region164: #{tpu_custom_call.1} parent=91 // pred_fallthru
          _
        %s804 = sand.u32 %s68, 1
        %s805 = scalar_lea.sflag [#allocation6], %s804
        %s806 = sand.u32 %s68, 1
        %s807 = smul.addr %s806, 64
        %s808 = scalar_lea.vmem [#allocation5], %s807
        %p809 = pneg %p81
        %p810 = pneg %p78
        %s811 = sand.u32 %s46, 1
        %s812 = scalar_lea.sflag [#allocation9], %s811
        %s813 = sand.u32 %s96, 1
        %s814 = scalar_lea.vmem [#allocation8], %s813
        %p815 = pneg %p109
        %p816 = pneg %p106
        %p817 = pneg %p130
        %p818 = pneg %p127
        %p819 = pneg %p151
        %p820 = pneg %p148
        %p821 = pneg %p172
        %p822 = pneg %p169
        %p823 = pneg %p193
        %p824 = pneg %p190
        %p825 = pneg %p214
        %p826 = pneg %p211
        %p827 = pneg %p235
        %p828 = pneg %p232
        %p829 = pneg %p256
        %p830 = pneg %p253
        %p831 = pneg %p277
        %p832 = pneg %p274
        %p833 = pneg %p298
        %p834 = pneg %p295
        %p835 = pneg %p319
        %p836 = pneg %p316
        %p837 = pneg %p340
        %p838 = pneg %p337
        %p839 = pneg %p361
        %p840 = pneg %p358
        %p841 = pneg %p382
        %p842 = pneg %p379
        %p843 = pneg %p403
        %p844 = pneg %p400
        %p845 = pneg %p424
        %p846 = pneg %p421
        %p847 = pneg %p445
        %p848 = pneg %p442
        %p849 = pneg %p471
        %p850 = pneg %p468
        %s851 = sand.u32 %s458, 1
        %s852 = scalar_lea.sflag [#allocation7], %s851
        %s853 = sand.u32 %s458, 1
        %s854 = smul.addr %s853, 4
        %s855 = scalar_lea.vmem [#allocation34], %s854
        %s856 = smul.u32 16, %s51
        %p858 = scmp.eq.s32.totalorder %s51, 0
        // Predicated region
        $region165: #{tpu_custom_call.1} parent=91 // pred_check
          %p859 = pneg %p858
        $region166: #{tpu_custom_call.1} parent=91 // pred_check_branch
          %861 = sbr.rel (%p859) target = $region168
        $region167: #{tpu_custom_call.1} parent=91 // pred_region
          %vm862 = vcmask 7168
          %863 = vst.msk [vmem:[#allocation2] sm:$0xff] %vm862, -inf
          %864 = vst.msk [vmem:[#allocation3] sm:$0xff] %vm862, 0.0
          %vm865 = vcmask 261120
          %866 = vst.msk [vmem:[#allocation4] sm:$0xff] %vm865, 0.0
        $region168: #{tpu_custom_call.1} parent=91 // pred_fallthru
          _
        %v867 = vld [vmem:[%s727] sm:$0xf]
        %v868 = vld [vmem:[%s727 + $0x4] sm:$0xf]
        %v869 = vld [vmem:[%s727 + $0x8] sm:$0xf]
        %v870 = vld [vmem:[%s727 + $0xc] sm:$0xf]
        %v871 = vld [vmem:[%s727 + $0x10] sm:$0xf]
        %v872 = vld [vmem:[%s727 + $0x14] sm:$0xf]
        %v873 = vld [vmem:[%s727 + $0x18] sm:$0xf]
        %v874 = vld [vmem:[%s727 + $0x1c] sm:$0xf]
        %v875 = vld [vmem:[%s727 + $0x20] sm:$0xf]
        %v876 = vld [vmem:[%s727 + $0x24] sm:$0xf]
        %v877 = vld [vmem:[%s727 + $0x28] sm:$0xf]
        %v878 = vld [vmem:[%s727 + $0x2c] sm:$0xf]
        %v879 = vld [vmem:[%s727 + $0x30] sm:$0xf]
        %v880 = vld [vmem:[%s727 + $0x34] sm:$0xf]
        %v881 = vld [vmem:[%s727 + $0x38] sm:$0xf]
        %v882 = vld [vmem:[%s727 + $0x3c] sm:$0xf]
        %v883 = vunpack.c.l.bf16 %v867
        %v884 = vunpack.c.l.bf16 %v868
        %v885 = vunpack.c.l.bf16 %v869
        %v886 = vunpack.c.l.bf16 %v870
        %v887 = vunpack.c.l.bf16 %v871
        %v888 = vunpack.c.l.bf16 %v872
        %v889 = vunpack.c.l.bf16 %v873
        %v890 = vunpack.c.l.bf16 %v874
        %v891 = vunpack.c.l.bf16 %v875
        %v892 = vunpack.c.l.bf16 %v876
        %v893 = vunpack.c.l.bf16 %v877
        %v894 = vunpack.c.l.bf16 %v878
        %v895 = vunpack.c.l.bf16 %v879
        %v896 = vunpack.c.l.bf16 %v880
        %v897 = vunpack.c.l.bf16 %v881
        %v898 = vunpack.c.l.bf16 %v882
        %v899 = vld [vmem:[%s735] sm:$0x1]
        %v900 = vld [vmem:[#allocation10] sm:$0x1]
        %v901 = vld [vmem:[#allocation11] sm:$0x1]
        %902 = vadd.xlane.f32.xlu0 %v883
        %v903 = vpop.xlane.xlu0 %902
        %904 = vadd.xlane.f32.xlu0 %v884
        %v905 = vpop.xlane.xlu0 %904
        %906 = vadd.xlane.f32.xlu0 %v885
        %v907 = vpop.xlane.xlu0 %906
        %908 = vadd.xlane.f32.xlu0 %v886
        %v909 = vpop.xlane.xlu0 %908
        %910 = vadd.xlane.f32.xlu0 %v887
        %v911 = vpop.xlane.xlu0 %910
        %912 = vadd.xlane.f32.xlu0 %v888
        %v913 = vpop.xlane.xlu0 %912
        %914 = vadd.xlane.f32.xlu0 %v889
        %v915 = vpop.xlane.xlu0 %914
        %916 = vadd.xlane.f32.xlu0 %v890
        %v917 = vpop.xlane.xlu0 %916
        %918 = vadd.xlane.f32.xlu0 %v891
        %v919 = vpop.xlane.xlu0 %918
        %920 = vadd.xlane.f32.xlu0 %v892
        %v921 = vpop.xlane.xlu0 %920
        %922 = vadd.xlane.f32.xlu0 %v893
        %v923 = vpop.xlane.xlu0 %922
        %924 = vadd.xlane.f32.xlu0 %v894
        %v925 = vpop.xlane.xlu0 %924
        %926 = vadd.xlane.f32.xlu0 %v895
        %v927 = vpop.xlane.xlu0 %926
        %928 = vadd.xlane.f32.xlu0 %v896
        %v929 = vpop.xlane.xlu0 %928
        %930 = vadd.xlane.f32.xlu0 %v897
        %v931 = vpop.xlane.xlu0 %930
        %932 = vadd.xlane.f32.xlu0 %v898
        %v933 = vpop.xlane.xlu0 %932
        %v934 = vrcp.pop 128.0
        %v935 = vmul.f32 %v903, %v934
        %v936 = vmul.f32 %v905, %v934
        %v937 = vmul.f32 %v907, %v934
        %v938 = vmul.f32 %v909, %v934
        %v939 = vmul.f32 %v911, %v934
        %v940 = vmul.f32 %v913, %v934
        %v941 = vmul.f32 %v915, %v934
        %v942 = vmul.f32 %v917, %v934
        %v943 = vmul.f32 %v919, %v934
        %v944 = vmul.f32 %v921, %v934
        %v945 = vmul.f32 %v923, %v934
        %v946 = vmul.f32 %v925, %v934
        %v947 = vmul.f32 %v927, %v934
        %v948 = vmul.f32 %v929, %v934
        %v949 = vmul.f32 %v931, %v934
        %v950 = vmul.f32 %v933, %v934
        %v951 = vmul.f32 %v883, %v883
        %v952 = vmul.f32 %v884, %v884
        %v953 = vmul.f32 %v885, %v885
        %v954 = vmul.f32 %v886, %v886
        %v955 = vmul.f32 %v887, %v887
        %v956 = vmul.f32 %v888, %v888
        %v957 = vmul.f32 %v889, %v889
        %v958 = vmul.f32 %v890, %v890
        %v959 = vmul.f32 %v891, %v891
        %v960 = vmul.f32 %v892, %v892
        %v961 = vmul.f32 %v893, %v893
        %v962 = vmul.f32 %v894, %v894
        %v963 = vmul.f32 %v895, %v895
        %v964 = vmul.f32 %v896, %v896
        %v965 = vmul.f32 %v897, %v897
        %v966 = vmul.f32 %v898, %v898
        %967 = vadd.xlane.f32.xlu0 %v951
        %v968 = vpop.xlane.xlu0 %967
        %969 = vadd.xlane.f32.xlu0 %v952
        %v970 = vpop.xlane.xlu0 %969
        %971 = vadd.xlane.f32.xlu0 %v953
        %v972 = vpop.xlane.xlu0 %971
        %973 = vadd.xlane.f32.xlu0 %v954
        %v974 = vpop.xlane.xlu0 %973
        %975 = vadd.xlane.f32.xlu0 %v955
        %v976 = vpop.xlane.xlu0 %975
        %977 = vadd.xlane.f32.xlu0 %v956
        %v978 = vpop.xlane.xlu0 %977
        %979 = vadd.xlane.f32.xlu0 %v957
        %v980 = vpop.xlane.xlu0 %979
        %981 = vadd.xlane.f32.xlu0 %v958
        %v982 = vpop.xlane.xlu0 %981
        %983 = vadd.xlane.f32.xlu0 %v959
        %v984 = vpop.xlane.xlu0 %983
        %985 = vadd.xlane.f32.xlu0 %v960
        %v986 = vpop.xlane.xlu0 %985
        %987 = vadd.xlane.f32.xlu0 %v961
        %v988 = vpop.xlane.xlu0 %987
        %989 = vadd.xlane.f32.xlu0 %v962
        %v990 = vpop.xlane.xlu0 %989
        %991 = vadd.xlane.f32.xlu0 %v963
        %v992 = vpop.xlane.xlu0 %991
        %993 = vadd.xlane.f32.xlu0 %v964
        %v994 = vpop.xlane.xlu0 %993
        %995 = vadd.xlane.f32.xlu0 %v965
        %v996 = vpop.xlane.xlu0 %995
        %997 = vadd.xlane.f32.xlu0 %v966
        %v998 = vpop.xlane.xlu0 %997
        %v999 = vmul.f32 %v968, %v934
        %v1000 = vmul.f32 %v970, %v934
        %v1001 = vmul.f32 %v972, %v934
        %v1002 = vmul.f32 %v974, %v934
        %v1003 = vmul.f32 %v976, %v934
        %v1004 = vmul.f32 %v978, %v934
        %v1005 = vmul.f32 %v980, %v934
        %v1006 = vmul.f32 %v982, %v934
        %v1007 = vmul.f32 %v984, %v934
        %v1008 = vmul.f32 %v986, %v934
        %v1009 = vmul.f32 %v988, %v934
        %v1010 = vmul.f32 %v990, %v934
        %v1011 = vmul.f32 %v992, %v934
        %v1012 = vmul.f32 %v994, %v934
        %v1013 = vmul.f32 %v996, %v934
        %v1014 = vmul.f32 %v998, %v934
        %v1015 = vmul.f32 %v935, %v935
        %v1016 = vmul.f32 %v936, %v936
        %v1017 = vmul.f32 %v937, %v937
        %v1018 = vmul.f32 %v938, %v938
        %v1019 = vmul.f32 %v939, %v939
        %v1020 = vmul.f32 %v940, %v940
        %v1021 = vmul.f32 %v941, %v941
        %v1022 = vmul.f32 %v942, %v942
        %v1023 = vmul.f32 %v943, %v943
        %v1024 = vmul.f32 %v944, %v944
        %v1025 = vmul.f32 %v945, %v945
        %v1026 = vmul.f32 %v946, %v946
        %v1027 = vmul.f32 %v947, %v947
        %v1028 = vmul.f32 %v948, %v948
        %v1029 = vmul.f32 %v949, %v949
        %v1030 = vmul.f32 %v950, %v950
        %v1031 = vsub.f32 %v999, %v1015
        %v1032 = vsub.f32 %v1000, %v1016
        %v1033 = vsub.f32 %v1001, %v1017
        %v1034 = vsub.f32 %v1002, %v1018
        %v1035 = vsub.f32 %v1003, %v1019
        %v1036 = vsub.f32 %v1004, %v1020
        %v1037 = vsub.f32 %v1005, %v1021
        %v1038 = vsub.f32 %v1006, %v1022
        %v1039 = vsub.f32 %v1007, %v1023
        %v1040 = vsub.f32 %v1008, %v1024
        %v1041 = vsub.f32 %v1009, %v1025
        %v1042 = vsub.f32 %v1010, %v1026
        %v1043 = vsub.f32 %v1011, %v1027
        %v1044 = vsub.f32 %v1012, %v1028
        %v1045 = vsub.f32 %v1013, %v1029
        %v1046 = vsub.f32 %v1014, %v1030
        %v1047 = vmax.f32 %v1031, 0.0
        %v1048 = vmax.f32 %v1032, 0.0
        %v1049 = vmax.f32 %v1033, 0.0
        %v1050 = vmax.f32 %v1034, 0.0
        %v1051 = vmax.f32 %v1035, 0.0
        %v1052 = vmax.f32 %v1036, 0.0
        %v1053 = vmax.f32 %v1037, 0.0
        %v1054 = vmax.f32 %v1038, 0.0
        %v1055 = vmax.f32 %v1039, 0.0
        %v1056 = vmax.f32 %v1040, 0.0
        %v1057 = vmax.f32 %v1041, 0.0
        %v1058 = vmax.f32 %v1042, 0.0
        %v1059 = vmax.f32 %v1043, 0.0
        %v1060 = vmax.f32 %v1044, 0.0
        %v1061 = vmax.f32 %v1045, 0.0
        %v1062 = vmax.f32 %v1046, 0.0
        %v1063 = vsub.f32 %v883, %v935
        %v1064 = vsub.f32 %v884, %v936
        %v1065 = vsub.f32 %v885, %v937
        %v1066 = vsub.f32 %v886, %v938
        %v1067 = vsub.f32 %v887, %v939
        %v1068 = vsub.f32 %v888, %v940
        %v1069 = vsub.f32 %v889, %v941
        %v1070 = vsub.f32 %v890, %v942
        %v1071 = vsub.f32 %v891, %v943
        %v1072 = vsub.f32 %v892, %v944
        %v1073 = vsub.f32 %v893, %v945
        %v1074 = vsub.f32 %v894, %v946
        %v1075 = vsub.f32 %v895, %v947
        %v1076 = vsub.f32 %v896, %v948
        %v1077 = vsub.f32 %v897, %v949
        %v1078 = vsub.f32 %v898, %v950
        %v1079 = vadd.f32 %v1047, 1e-06
        %v1080 = vadd.f32 %v1048, 1e-06
        %v1081 = vadd.f32 %v1049, 1e-06
        %v1082 = vadd.f32 %v1050, 1e-06
        %v1083 = vadd.f32 %v1051, 1e-06
        %v1084 = vadd.f32 %v1052, 1e-06
        %v1085 = vadd.f32 %v1053, 1e-06
        %v1086 = vadd.f32 %v1054, 1e-06
        %v1087 = vadd.f32 %v1055, 1e-06
        %v1088 = vadd.f32 %v1056, 1e-06
        %v1089 = vadd.f32 %v1057, 1e-06
        %v1090 = vadd.f32 %v1058, 1e-06
        %v1091 = vadd.f32 %v1059, 1e-06
        %v1092 = vadd.f32 %v1060, 1e-06
        %v1093 = vadd.f32 %v1061, 1e-06
        %v1094 = vadd.f32 %v1062, 1e-06
        %v1095 = vrsqrt.pop %v1079
        %v1096 = vrsqrt.pop %v1080
        %v1097 = vrsqrt.pop %v1081
        %v1098 = vrsqrt.pop %v1082
        %v1099 = vrsqrt.pop %v1083
        %v1100 = vrsqrt.pop %v1084
        %v1101 = vrsqrt.pop %v1085
        %v1102 = vrsqrt.pop %v1086
        %v1103 = vrsqrt.pop %v1087
        %v1104 = vrsqrt.pop %v1088
        %v1105 = vrsqrt.pop %v1089
        %v1106 = vrsqrt.pop %v1090
        %v1107 = vrsqrt.pop %v1091
        %v1108 = vrsqrt.pop %v1092
        %v1109 = vrsqrt.pop %v1093
        %v1110 = vrsqrt.pop %v1094
        %v1111 = vmul.f32 %v1063, %v1095
        %v1112 = vmul.f32 %v1064, %v1096
        %v1113 = vmul.f32 %v1065, %v1097
        %v1114 = vmul.f32 %v1066, %v1098
        %v1115 = vmul.f32 %v1067, %v1099
        %v1116 = vmul.f32 %v1068, %v1100
        %v1117 = vmul.f32 %v1069, %v1101
        %v1118 = vmul.f32 %v1070, %v1102
        %v1119 = vmul.f32 %v1071, %v1103
        %v1120 = vmul.f32 %v1072, %v1104
        %v1121 = vmul.f32 %v1073, %v1105
        %v1122 = vmul.f32 %v1074, %v1106
        %v1123 = vmul.f32 %v1075, %v1107
        %v1124 = vmul.f32 %v1076, %v1108
        %v1125 = vmul.f32 %v1077, %v1109
        %v1126 = vmul.f32 %v1078, %v1110
        %v1128 = vlaneseq
        %v1129 = vshrl.u32 %v1128, 7
        %v1130 = vsub.s32 0, %v1129
        %v1131 = vrot.slane %v900, %v1130
        %v1133 = vmul.f32 %v1111, %v1131
        %v1134 = vmul.f32 %v1112, %v1131
        %v1135 = vmul.f32 %v1113, %v1131
        %v1136 = vmul.f32 %v1114, %v1131
        %v1137 = vmul.f32 %v1115, %v1131
        %v1138 = vmul.f32 %v1116, %v1131
        %v1139 = vmul.f32 %v1117, %v1131
        %v1140 = vmul.f32 %v1118, %v1131
        %v1141 = vmul.f32 %v1119, %v1131
        %v1142 = vmul.f32 %v1120, %v1131
        %v1143 = vmul.f32 %v1121, %v1131
        %v1144 = vmul.f32 %v1122, %v1131
        %v1145 = vmul.f32 %v1123, %v1131
        %v1146 = vmul.f32 %v1124, %v1131
        %v1147 = vmul.f32 %v1125, %v1131
        %v1148 = vmul.f32 %v1126, %v1131
        %v1150 = vlaneseq
        %v1151 = vshrl.u32 %v1150, 7
        %v1152 = vsub.s32 0, %v1151
        %v1153 = vrot.slane %v901, %v1152
        %v1155 = vadd.f32 %v1133, %v1153
        %v1156 = vadd.f32 %v1134, %v1153
        %v1157 = vadd.f32 %v1135, %v1153
        %v1158 = vadd.f32 %v1136, %v1153
        %v1159 = vadd.f32 %v1137, %v1153
        %v1160 = vadd.f32 %v1138, %v1153
        %v1161 = vadd.f32 %v1139, %v1153
        %v1162 = vadd.f32 %v1140, %v1153
        %v1163 = vadd.f32 %v1141, %v1153
        %v1164 = vadd.f32 %v1142, %v1153
        %v1165 = vadd.f32 %v1143, %v1153
        %v1166 = vadd.f32 %v1144, %v1153
        %v1167 = vadd.f32 %v1145, %v1153
        %v1168 = vadd.f32 %v1146, %v1153
        %v1169 = vadd.f32 %v1147, %v1153
        %v1170 = vadd.f32 %v1148, %v1153
        %v1171 = vpack.c.bf16 %v1156, %v1155
        %v1172 = vpack.c.bf16 %v1158, %v1157
        %v1173 = vpack.c.bf16 %v1160, %v1159
        %v1174 = vpack.c.bf16 %v1162, %v1161
        %v1175 = vpack.c.bf16 %v1164, %v1163
        %v1176 = vpack.c.bf16 %v1166, %v1165
        %v1177 = vpack.c.bf16 %v1168, %v1167
        %v1178 = vpack.c.bf16 %v1170, %v1169
        %v1179 = vld [vmem:[#allocation13] sm:$0xf]
        %v1180 = vld [vmem:[#allocation13 + $0x4] sm:$0xf]
        %v1181 = vld [vmem:[#allocation13 + $0x8] sm:$0xf]
        %v1182 = vld [vmem:[#allocation13 + $0xc] sm:$0xf]
        %v1183 = vld [vmem:[#allocation13 + $0x10] sm:$0xf]
        %v1184 = vld [vmem:[#allocation13 + $0x14] sm:$0xf]
        %v1185 = vld [vmem:[#allocation13 + $0x18] sm:$0xf]
        %v1186 = vld [vmem:[#allocation13 + $0x1c] sm:$0xf]
        %v1187 = vld [vmem:[#allocation13 + $0x20] sm:$0xf]
        %v1188 = vld [vmem:[#allocation13 + $0x24] sm:$0xf]
        %v1189 = vld [vmem:[#allocation13 + $0x28] sm:$0xf]
        %v1190 = vld [vmem:[#allocation13 + $0x2c] sm:$0xf]
        %v1191 = vld [vmem:[#allocation13 + $0x30] sm:$0xf]
        %v1192 = vld [vmem:[#allocation13 + $0x34] sm:$0xf]
        %v1193 = vld [vmem:[#allocation13 + $0x38] sm:$0xf]
        %v1194 = vld [vmem:[#allocation13 + $0x3c] sm:$0xf]
        %v1195 = vld [vmem:[#allocation14] sm:$0x1]
        %v1197 = vlaneseq
        %v1198 = vshrl.u32 %v1197, 7
        %v1199 = vsub.s32 0, %v1198
        %v1200 = vrot.slane %v1195, %v1199
        %v1218 = vunpack.c.l.b16 %v1179
        %v1219 = vunpack.c.l.b16 %v1180
        %v1220 = vunpack.c.l.b16 %v1181
        %v1221 = vunpack.c.l.b16 %v1182
        %v1222 = vunpack.c.l.b16 %v1183
        %v1223 = vunpack.c.l.b16 %v1184
        %v1224 = vunpack.c.l.b16 %v1185
        %v1225 = vunpack.c.l.b16 %v1186
        %v1226 = vunpack.c.l.b16 %v1187
        %v1227 = vunpack.c.l.b16 %v1188
        %v1228 = vunpack.c.l.b16 %v1189
        %v1229 = vunpack.c.l.b16 %v1190
        %v1230 = vunpack.c.l.b16 %v1191
        %v1231 = vunpack.c.l.b16 %v1192
        %v1232 = vunpack.c.l.b16 %v1193
        %v1233 = vunpack.c.l.b16 %v1194
        %v1234 = vpack.c.b16 %v1219, %v1218
        %v1235 = vpack.c.b16 %v1221, %v1220
        %v1236 = vpack.c.b16 %v1223, %v1222
        %v1237 = vpack.c.b16 %v1225, %v1224
        %v1238 = vpack.c.b16 %v1227, %v1226
        %v1239 = vpack.c.b16 %v1229, %v1228
        %v1240 = vpack.c.b16 %v1231, %v1230
        %v1241 = vpack.c.b16 %v1233, %v1232
        %1250 = vmatprep.subr.bf16.mxu0 0
        %1251 = vmatpush1.bf16.msra.mxu0 %v1234
        %1252 = vmatprep.subr.bf16.mxu0 0
        %1253 = vmatpush1.bf16.msra.mxu0 %v1235
        %1254 = vmatprep.subr.bf16.mxu0 0
        %1255 = vmatpush1.bf16.msra.mxu0 %v1236
        %1256 = vmatprep.subr.bf16.mxu0 0
        %1257 = vmatpush1.bf16.msra.mxu0 %v1237
        %1258 = vmatprep.subr.bf16.mxu0 0
        %1259 = vmatpush1.bf16.msra.mxu0 %v1238
        %1260 = vmatprep.subr.bf16.mxu0 0
        %1261 = vmatpush1.bf16.msra.mxu0 %v1239
        %1262 = vmatprep.subr.bf16.mxu0 0
        %1263 = vmatpush1.bf16.msra.mxu0 %v1240
        %1264 = vmatprep.subr.bf16.mxu0 0
        %1265 = vmatpush1.bf16.msra.mxu0 %v1241
        %1266 = vmatprep.subr.bf16.mxu0 0
        %1267 = vmatpush1.bf16.msra.mxu0 0
        %1268 = vmatprep.subr.bf16.mxu0 0
        %1269 = vmatpush1.bf16.msra.mxu0 0
        %1270 = vmatprep.subr.bf16.mxu0 0
        %1271 = vmatpush1.bf16.msra.mxu0 0
        %1272 = vmatprep.subr.bf16.mxu0 0
        %1273 = vmatpush1.bf16.msra.mxu0 0
        %1274 = vmatprep.subr.bf16.mxu0 0
        %1275 = vmatpush1.bf16.msra.mxu0 0
        %1276 = vmatprep.subr.bf16.mxu0 0
        %1277 = vmatpush1.bf16.msra.mxu0 0
        %1278 = vmatprep.subr.bf16.mxu0 0
        %1279 = vmatpush1.bf16.msra.mxu0 0
        %1280 = vmatprep.subr.bf16.mxu0 0
        %1281 = vmatpush1.bf16.msra.mxu0 0
        %1282 = vmatprep.mubr.bf16.mxu0 0
        %1283 = vmatmul.mubr.bf16.gmra.mrb[0].mxu0 %v1171
        %v1284 = vpop.f32.mrb[0].mxu0
        %v1285 = vadd.f32 %v1200, %v1284
        %v1286 = vpop.f32.mrb[0].mxu0
        %v1287 = vpop.f32.mrb[0].mxu0
        %v1288 = vadd.f32 %v1200, %v1287
        %v1289 = vpop.f32.mrb[0].mxu0
        %1290 = vmatprep.mubr.bf16.mxu0 0
        %1291 = vmatmul.mubr.bf16.gmra.mrb[0].mxu0 %v1172
        %v1292 = vpop.f32.mrb[0].mxu0
        %v1293 = vadd.f32 %v1200, %v1292
        %v1294 = vpop.f32.mrb[0].mxu0
        %v1295 = vpop.f32.mrb[0].mxu0
        %v1296 = vadd.f32 %v1200, %v1295
        %v1297 = vpop.f32.mrb[0].mxu0
        %1298 = vmatprep.mubr.bf16.mxu0 0
        %1299 = vmatmul.mubr.bf16.gmra.mrb[0].mxu0 %v1173
        %v1300 = vpop.f32.mrb[0].mxu0
        %v1301 = vadd.f32 %v1200, %v1300
        %v1302 = vpop.f32.mrb[0].mxu0
        %v1303 = vpop.f32.mrb[0].mxu0
        %v1304 = vadd.f32 %v1200, %v1303
        %v1305 = vpop.f32.mrb[0].mxu0
        %1306 = vmatprep.mubr.bf16.mxu0 0
        %1307 = vmatmul.mubr.bf16.gmra.mrb[0].mxu0 %v1174
        %v1308 = vpop.f32.mrb[0].mxu0
        %v1309 = vadd.f32 %v1200, %v1308
        %v1310 = vpop.f32.mrb[0].mxu0
        %v1311 = vpop.f32.mrb[0].mxu0
        %v1312 = vadd.f32 %v1200, %v1311
        %v1313 = vpop.f32.mrb[0].mxu0
        %1314 = vmatprep.mubr.bf16.mxu0 0
        %1315 = vmatmul.mubr.bf16.gmra.mrb[0].mxu0 %v1175
        %v1316 = vpop.f32.mrb[0].mxu0
        %v1317 = vadd.f32 %v1200, %v1316
        %v1318 = vpop.f32.mrb[0].mxu0
        %v1319 = vpop.f32.mrb[0].mxu0
        %v1320 = vadd.f32 %v1200, %v1319
        %v1321 = vpop.f32.mrb[0].mxu0
        %1322 = vmatprep.mubr.bf16.mxu0 0
        %1323 = vmatmul.mubr.bf16.gmra.mrb[0].mxu0 %v1176
        %v1324 = vpop.f32.mrb[0].mxu0
        %v1325 = vadd.f32 %v1200, %v1324
        %v1326 = vpop.f32.mrb[0].mxu0
        %v1327 = vpop.f32.mrb[0].mxu0
        %v1328 = vadd.f32 %v1200, %v1327
        %v1329 = vpop.f32.mrb[0].mxu0
        %1330 = vmatprep.mubr.bf16.mxu0 0
        %1331 = vmatmul.mubr.bf16.gmra.mrb[0].mxu0 %v1177
        %v1332 = vpop.f32.mrb[0].mxu0
        %v1333 = vadd.f32 %v1200, %v1332
        %v1334 = vpop.f32.mrb[0].mxu0
        %v1335 = vpop.f32.mrb[0].mxu0
        %v1336 = vadd.f32 %v1200, %v1335
        %v1337 = vpop.f32.mrb[0].mxu0
        %1338 = vmatprep.mubr.bf16.mxu0 0
        %1339 = vmatmul.mubr.bf16.gmra.mrb[0].mxu0 %v1178
        %v1340 = vpop.f32.mrb[0].mxu0
        %v1341 = vadd.f32 %v1200, %v1340
        %v1342 = vpop.f32.mrb[0].mxu0
        %v1343 = vpop.f32.mrb[0].mxu0
        %v1344 = vadd.f32 %v1200, %v1343
        %v1345 = vpop.f32.mrb[0].mxu0
        %1346 = vdwg.mxu0
        %vm1347 = vcmp.gt.f32.partialorder %v1285, 0.0
        %vm1348 = vcmp.gt.f32.partialorder %v1288, 0.0
        %vm1349 = vcmp.gt.f32.partialorder %v1293, 0.0
        %vm1350 = vcmp.gt.f32.partialorder %v1296, 0.0
        %vm1351 = vcmp.gt.f32.partialorder %v1301, 0.0
        %vm1352 = vcmp.gt.f32.partialorder %v1304, 0.0
        %vm1353 = vcmp.gt.f32.partialorder %v1309, 0.0
        %vm1354 = vcmp.gt.f32.partialorder %v1312, 0.0
        %vm1355 = vcmp.gt.f32.partialorder %v1317, 0.0
        %vm1356 = vcmp.gt.f32.partialorder %v1320, 0.0
        %vm1357 = vcmp.gt.f32.partialorder %v1325, 0.0
        %vm1358 = vcmp.gt.f32.partialorder %v1328, 0.0
        %vm1359 = vcmp.gt.f32.partialorder %v1333, 0.0
        %vm1360 = vcmp.gt.f32.partialorder %v1336, 0.0
        %vm1361 = vcmp.gt.f32.partialorder %v1341, 0.0
        %vm1362 = vcmp.gt.f32.partialorder %v1344, 0.0
        %v1363 = vmul.f32 %v1285, 0.01
        %v1364 = vmul.f32 %v1288, 0.01
        %v1365 = vmul.f32 %v1293, 0.01
        %v1366 = vmul.f32 %v1296, 0.01
        %v1367 = vmul.f32 %v1301, 0.01
        %v1368 = vmul.f32 %v1304, 0.01
        %v1369 = vmul.f32 %v1309, 0.01
        %v1370 = vmul.f32 %v1312, 0.01
        %v1371 = vmul.f32 %v1317, 0.01
        %v1372 = vmul.f32 %v1320, 0.01
        %v1373 = vmul.f32 %v1325, 0.01
        %v1374 = vmul.f32 %v1328, 0.01
        %v1375 = vmul.f32 %v1333, 0.01
        %v1376 = vmul.f32 %v1336, 0.01
        %v1377 = vmul.f32 %v1341, 0.01
        %v1378 = vmul.f32 %v1344, 0.01
        %v1379 = vsel %vm1347, %v1285, %v1363
        %v1380 = vsel %vm1348, %v1288, %v1364
        %v1381 = vsel %vm1349, %v1293, %v1365
        %v1382 = vsel %vm1350, %v1296, %v1366
        %v1383 = vsel %vm1351, %v1301, %v1367
        %v1384 = vsel %vm1352, %v1304, %v1368
        %v1385 = vsel %vm1353, %v1309, %v1369
        %v1386 = vsel %vm1354, %v1312, %v1370
        %v1387 = vsel %vm1355, %v1317, %v1371
        %v1388 = vsel %vm1356, %v1320, %v1372
        %v1389 = vsel %vm1357, %v1325, %v1373
        %v1390 = vsel %vm1358, %v1328, %v1374
        %v1391 = vsel %vm1359, %v1333, %v1375
        %v1392 = vsel %vm1360, %v1336, %v1376
        %v1393 = vsel %vm1361, %v1341, %v1377
        %v1394 = vsel %vm1362, %v1344, %v1378
        %v1395 = vld [vmem:[#allocation16] sm:$0x1]
        %v1396 = vld [vmem:[#allocation17] sm:$0x1]
        %vm1397 = vcmask 261120
        %v1398 = vsel %vm1397, %v1379, 0.0
        %1399 = vadd.xlane.f32.xlu0 %v1398
        %v1400 = vpop.xlane.xlu0 %1399
        %v1401 = vsel %vm1397, %v1380, 0.0
        %1402 = vadd.xlane.f32.xlu0 %v1401
        %v1403 = vpop.xlane.xlu0 %1402
        %v1404 = vsel %vm1397, %v1381, 0.0
        %1405 = vadd.xlane.f32.xlu0 %v1404
        %v1406 = vpop.xlane.xlu0 %1405
        %v1407 = vsel %vm1397, %v1382, 0.0
        %1408 = vadd.xlane.f32.xlu0 %v1407
        %v1409 = vpop.xlane.xlu0 %1408
        %v1410 = vsel %vm1397, %v1383, 0.0
        %1411 = vadd.xlane.f32.xlu0 %v1410
        %v1412 = vpop.xlane.xlu0 %1411
        %v1413 = vsel %vm1397, %v1384, 0.0
        %1414 = vadd.xlane.f32.xlu0 %v1413
        %v1415 = vpop.xlane.xlu0 %1414
        %v1416 = vsel %vm1397, %v1385, 0.0
        %1417 = vadd.xlane.f32.xlu0 %v1416
        %v1418 = vpop.xlane.xlu0 %1417
        %v1419 = vsel %vm1397, %v1386, 0.0
        %1420 = vadd.xlane.f32.xlu0 %v1419
        %v1421 = vpop.xlane.xlu0 %1420
        %v1422 = vsel %vm1397, %v1387, 0.0
        %1423 = vadd.xlane.f32.xlu0 %v1422
        %v1424 = vpop.xlane.xlu0 %1423
        %v1425 = vsel %vm1397, %v1388, 0.0
        %1426 = vadd.xlane.f32.xlu0 %v1425
        %v1427 = vpop.xlane.xlu0 %1426
        %v1428 = vsel %vm1397, %v1389, 0.0
        %1429 = vadd.xlane.f32.xlu0 %v1428
        %v1430 = vpop.xlane.xlu0 %1429
        %v1431 = vsel %vm1397, %v1390, 0.0
        %1432 = vadd.xlane.f32.xlu0 %v1431
        %v1433 = vpop.xlane.xlu0 %1432
        %v1434 = vsel %vm1397, %v1391, 0.0
        %1435 = vadd.xlane.f32.xlu0 %v1434
        %v1436 = vpop.xlane.xlu0 %1435
        %v1437 = vsel %vm1397, %v1392, 0.0
        %1438 = vadd.xlane.f32.xlu0 %v1437
        %v1439 = vpop.xlane.xlu0 %1438
        %v1440 = vsel %vm1397, %v1393, 0.0
        %1441 = vadd.xlane.f32.xlu0 %v1440
        %v1442 = vpop.xlane.xlu0 %1441
        %v1443 = vsel %vm1397, %v1394, 0.0
        %1444 = vadd.xlane.f32.xlu0 %v1443
        %v1445 = vpop.xlane.xlu0 %1444
        %v1446 = vrcp.pop 32.0
        %v1447 = vmul.f32 %v1400, %v1446
        %v1448 = vmul.f32 %v1403, %v1446
        %v1449 = vmul.f32 %v1406, %v1446
        %v1450 = vmul.f32 %v1409, %v1446
        %v1451 = vmul.f32 %v1412, %v1446
        %v1452 = vmul.f32 %v1415, %v1446
        %v1453 = vmul.f32 %v1418, %v1446
        %v1454 = vmul.f32 %v1421, %v1446
        %v1455 = vmul.f32 %v1424, %v1446
        %v1456 = vmul.f32 %v1427, %v1446
        %v1457 = vmul.f32 %v1430, %v1446
        %v1458 = vmul.f32 %v1433, %v1446
        %v1459 = vmul.f32 %v1436, %v1446
        %v1460 = vmul.f32 %v1439, %v1446
        %v1461 = vmul.f32 %v1442, %v1446
        %v1462 = vmul.f32 %v1445, %v1446
        %v1463 = vmul.f32 %v1379, %v1379
        %v1464 = vmul.f32 %v1380, %v1380
        %v1465 = vmul.f32 %v1381, %v1381
        %v1466 = vmul.f32 %v1382, %v1382
        %v1467 = vmul.f32 %v1383, %v1383
        %v1468 = vmul.f32 %v1384, %v1384
        %v1469 = vmul.f32 %v1385, %v1385
        %v1470 = vmul.f32 %v1386, %v1386
        %v1471 = vmul.f32 %v1387, %v1387
        %v1472 = vmul.f32 %v1388, %v1388
        %v1473 = vmul.f32 %v1389, %v1389
        %v1474 = vmul.f32 %v1390, %v1390
        %v1475 = vmul.f32 %v1391, %v1391
        %v1476 = vmul.f32 %v1392, %v1392
        %v1477 = vmul.f32 %v1393, %v1393
        %v1478 = vmul.f32 %v1394, %v1394
        %v1479 = vsel %vm1397, %v1463, 0.0
        %1480 = vadd.xlane.f32.xlu0 %v1479
        %v1481 = vpop.xlane.xlu0 %1480
        %v1482 = vsel %vm1397, %v1464, 0.0
        %1483 = vadd.xlane.f32.xlu0 %v1482
        %v1484 = vpop.xlane.xlu0 %1483
        %v1485 = vsel %vm1397, %v1465, 0.0
        %1486 = vadd.xlane.f32.xlu0 %v1485
        %v1487 = vpop.xlane.xlu0 %1486
        %v1488 = vsel %vm1397, %v1466, 0.0
        %1489 = vadd.xlane.f32.xlu0 %v1488
        %v1490 = vpop.xlane.xlu0 %1489
        %v1491 = vsel %vm1397, %v1467, 0.0
        %1492 = vadd.xlane.f32.xlu0 %v1491
        %v1493 = vpop.xlane.xlu0 %1492
        %v1494 = vsel %vm1397, %v1468, 0.0
        %1495 = vadd.xlane.f32.xlu0 %v1494
        %v1496 = vpop.xlane.xlu0 %1495
        %v1497 = vsel %vm1397, %v1469, 0.0
        %1498 = vadd.xlane.f32.xlu0 %v1497
        %v1499 = vpop.xlane.xlu0 %1498
        %v1500 = vsel %vm1397, %v1470, 0.0
        %1501 = vadd.xlane.f32.xlu0 %v1500
        %v1502 = vpop.xlane.xlu0 %1501
        %v1503 = vsel %vm1397, %v1471, 0.0
        %1504 = vadd.xlane.f32.xlu0 %v1503
        %v1505 = vpop.xlane.xlu0 %1504
        %v1506 = vsel %vm1397, %v1472, 0.0
        %1507 = vadd.xlane.f32.xlu0 %v1506
        %v1508 = vpop.xlane.xlu0 %1507
        %v1509 = vsel %vm1397, %v1473, 0.0
        %1510 = vadd.xlane.f32.xlu0 %v1509
        %v1511 = vpop.xlane.xlu0 %1510
        %v1512 = vsel %vm1397, %v1474, 0.0
        %1513 = vadd.xlane.f32.xlu0 %v1512
        %v1514 = vpop.xlane.xlu0 %1513
        %v1515 = vsel %vm1397, %v1475, 0.0
        %1516 = vadd.xlane.f32.xlu0 %v1515
        %v1517 = vpop.xlane.xlu0 %1516
        %v1518 = vsel %vm1397, %v1476, 0.0
        %1519 = vadd.xlane.f32.xlu0 %v1518
        %v1520 = vpop.xlane.xlu0 %1519
        %v1521 = vsel %vm1397, %v1477, 0.0
        %1522 = vadd.xlane.f32.xlu0 %v1521
        %v1523 = vpop.xlane.xlu0 %1522
        %v1524 = vsel %vm1397, %v1478, 0.0
        %1525 = vadd.xlane.f32.xlu0 %v1524
        %v1526 = vpop.xlane.xlu0 %1525
        %v1527 = vmul.f32 %v1481, %v1446
        %v1528 = vmul.f32 %v1484, %v1446
        %v1529 = vmul.f32 %v1487, %v1446
        %v1530 = vmul.f32 %v1490, %v1446
        %v1531 = vmul.f32 %v1493, %v1446
        %v1532 = vmul.f32 %v1496, %v1446
        %v1533 = vmul.f32 %v1499, %v1446
        %v1534 = vmul.f32 %v1502, %v1446
        %v1535 = vmul.f32 %v1505, %v1446
        %v1536 = vmul.f32 %v1508, %v1446
        %v1537 = vmul.f32 %v1511, %v1446
        %v1538 = vmul.f32 %v1514, %v1446
        %v1539 = vmul.f32 %v1517, %v1446
        %v1540 = vmul.f32 %v1520, %v1446
        %v1541 = vmul.f32 %v1523, %v1446
        %v1542 = vmul.f32 %v1526, %v1446
        %v1543 = vmul.f32 %v1447, %v1447
        %v1544 = vmul.f32 %v1448, %v1448
        %v1545 = vmul.f32 %v1449, %v1449
        %v1546 = vmul.f32 %v1450, %v1450
        %v1547 = vmul.f32 %v1451, %v1451
        %v1548 = vmul.f32 %v1452, %v1452
        %v1549 = vmul.f32 %v1453, %v1453
        %v1550 = vmul.f32 %v1454, %v1454
        %v1551 = vmul.f32 %v1455, %v1455
        %v1552 = vmul.f32 %v1456, %v1456
        %v1553 = vmul.f32 %v1457, %v1457
        %v1554 = vmul.f32 %v1458, %v1458
        %v1555 = vmul.f32 %v1459, %v1459
        %v1556 = vmul.f32 %v1460, %v1460
        %v1557 = vmul.f32 %v1461, %v1461
        %v1558 = vmul.f32 %v1462, %v1462
        %v1559 = vsub.f32 %v1527, %v1543
        %v1560 = vsub.f32 %v1528, %v1544
        %v1561 = vsub.f32 %v1529, %v1545
        %v1562 = vsub.f32 %v1530, %v1546
        %v1563 = vsub.f32 %v1531, %v1547
        %v1564 = vsub.f32 %v1532, %v1548
        %v1565 = vsub.f32 %v1533, %v1549
        %v1566 = vsub.f32 %v1534, %v1550
        %v1567 = vsub.f32 %v1535, %v1551
        %v1568 = vsub.f32 %v1536, %v1552
        %v1569 = vsub.f32 %v1537, %v1553
        %v1570 = vsub.f32 %v1538, %v1554
        %v1571 = vsub.f32 %v1539, %v1555
        %v1572 = vsub.f32 %v1540, %v1556
        %v1573 = vsub.f32 %v1541, %v1557
        %v1574 = vsub.f32 %v1542, %v1558
        %v1575 = vmax.f32 %v1559, 0.0
        %v1576 = vmax.f32 %v1560, 0.0
        %v1577 = vmax.f32 %v1561, 0.0
        %v1578 = vmax.f32 %v1562, 0.0
        %v1579 = vmax.f32 %v1563, 0.0
        %v1580 = vmax.f32 %v1564, 0.0
        %v1581 = vmax.f32 %v1565, 0.0
        %v1582 = vmax.f32 %v1566, 0.0
        %v1583 = vmax.f32 %v1567, 0.0
        %v1584 = vmax.f32 %v1568, 0.0
        %v1585 = vmax.f32 %v1569, 0.0
        %v1586 = vmax.f32 %v1570, 0.0
        %v1587 = vmax.f32 %v1571, 0.0
        %v1588 = vmax.f32 %v1572, 0.0
        %v1589 = vmax.f32 %v1573, 0.0
        %v1590 = vmax.f32 %v1574, 0.0
        %v1591 = vsub.f32 %v1379, %v1447
        %v1592 = vsub.f32 %v1380, %v1448
        %v1593 = vsub.f32 %v1381, %v1449
        %v1594 = vsub.f32 %v1382, %v1450
        %v1595 = vsub.f32 %v1383, %v1451
        %v1596 = vsub.f32 %v1384, %v1452
        %v1597 = vsub.f32 %v1385, %v1453
        %v1598 = vsub.f32 %v1386, %v1454
        %v1599 = vsub.f32 %v1387, %v1455
        %v1600 = vsub.f32 %v1388, %v1456
        %v1601 = vsub.f32 %v1389, %v1457
        %v1602 = vsub.f32 %v1390, %v1458
        %v1603 = vsub.f32 %v1391, %v1459
        %v1604 = vsub.f32 %v1392, %v1460
        %v1605 = vsub.f32 %v1393, %v1461
        %v1606 = vsub.f32 %v1394, %v1462
        %v1607 = vadd.f32 %v1575, 1e-06
        %v1608 = vadd.f32 %v1576, 1e-06
        %v1609 = vadd.f32 %v1577, 1e-06
        %v1610 = vadd.f32 %v1578, 1e-06
        %v1611 = vadd.f32 %v1579, 1e-06
        %v1612 = vadd.f32 %v1580, 1e-06
        %v1613 = vadd.f32 %v1581, 1e-06
        %v1614 = vadd.f32 %v1582, 1e-06
        %v1615 = vadd.f32 %v1583, 1e-06
        %v1616 = vadd.f32 %v1584, 1e-06
        %v1617 = vadd.f32 %v1585, 1e-06
        %v1618 = vadd.f32 %v1586, 1e-06
        %v1619 = vadd.f32 %v1587, 1e-06
        %v1620 = vadd.f32 %v1588, 1e-06
        %v1621 = vadd.f32 %v1589, 1e-06
        %v1622 = vadd.f32 %v1590, 1e-06
        %v1623 = vrsqrt.pop %v1607
        %v1624 = vrsqrt.pop %v1608
        %v1625 = vrsqrt.pop %v1609
        %v1626 = vrsqrt.pop %v1610
        %v1627 = vrsqrt.pop %v1611
        %v1628 = vrsqrt.pop %v1612
        %v1629 = vrsqrt.pop %v1613
        %v1630 = vrsqrt.pop %v1614
        %v1631 = vrsqrt.pop %v1615
        %v1632 = vrsqrt.pop %v1616
        %v1633 = vrsqrt.pop %v1617
        %v1634 = vrsqrt.pop %v1618
        %v1635 = vrsqrt.pop %v1619
        %v1636 = vrsqrt.pop %v1620
        %v1637 = vrsqrt.pop %v1621
        %v1638 = vrsqrt.pop %v1622
        %v1639 = vmul.f32 %v1591, %v1623
        %v1640 = vmul.f32 %v1592, %v1624
        %v1641 = vmul.f32 %v1593, %v1625
        %v1642 = vmul.f32 %v1594, %v1626
        %v1643 = vmul.f32 %v1595, %v1627
        %v1644 = vmul.f32 %v1596, %v1628
        %v1645 = vmul.f32 %v1597, %v1629
        %v1646 = vmul.f32 %v1598, %v1630
        %v1647 = vmul.f32 %v1599, %v1631
        %v1648 = vmul.f32 %v1600, %v1632
        %v1649 = vmul.f32 %v1601, %v1633
        %v1650 = vmul.f32 %v1602, %v1634
        %v1651 = vmul.f32 %v1603, %v1635
        %v1652 = vmul.f32 %v1604, %v1636
        %v1653 = vmul.f32 %v1605, %v1637
        %v1654 = vmul.f32 %v1606, %v1638
        %v1656 = vlaneseq
        %v1657 = vshrl.u32 %v1656, 7
        %v1658 = vsub.s32 0, %v1657
        %v1659 = vrot.slane %v1395, %v1658
        %v1661 = vmul.f32 %v1639, %v1659
        %v1662 = vmul.f32 %v1640, %v1659
        %v1663 = vmul.f32 %v1641, %v1659
        %v1664 = vmul.f32 %v1642, %v1659
        %v1665 = vmul.f32 %v1643, %v1659
        %v1666 = vmul.f32 %v1644, %v1659
        %v1667 = vmul.f32 %v1645, %v1659
        %v1668 = vmul.f32 %v1646, %v1659
        %v1669 = vmul.f32 %v1647, %v1659
        %v1670 = vmul.f32 %v1648, %v1659
        %v1671 = vmul.f32 %v1649, %v1659
        %v1672 = vmul.f32 %v1650, %v1659
        %v1673 = vmul.f32 %v1651, %v1659
        %v1674 = vmul.f32 %v1652, %v1659
        %v1675 = vmul.f32 %v1653, %v1659
        %v1676 = vmul.f32 %v1654, %v1659
        %v1678 = vlaneseq
        %v1679 = vshrl.u32 %v1678, 7
        %v1680 = vsub.s32 0, %v1679
        %v1681 = vrot.slane %v1396, %v1680
        %v1683 = vadd.f32 %v1661, %v1681
        %v1684 = vadd.f32 %v1662, %v1681
        %v1685 = vadd.f32 %v1663, %v1681
        %v1686 = vadd.f32 %v1664, %v1681
        %v1687 = vadd.f32 %v1665, %v1681
        %v1688 = vadd.f32 %v1666, %v1681
        %v1689 = vadd.f32 %v1667, %v1681
        %v1690 = vadd.f32 %v1668, %v1681
        %v1691 = vadd.f32 %v1669, %v1681
        %v1692 = vadd.f32 %v1670, %v1681
        %v1693 = vadd.f32 %v1671, %v1681
        %v1694 = vadd.f32 %v1672, %v1681
        %v1695 = vadd.f32 %v1673, %v1681
        %v1696 = vadd.f32 %v1674, %v1681
        %v1697 = vadd.f32 %v1675, %v1681
        %v1698 = vadd.f32 %v1676, %v1681
        %v1699 = vpack.c.bf16 %v1684, %v1683
        %v1700 = vpack.c.bf16 %v1686, %v1685
        %v1701 = vpack.c.bf16 %v1688, %v1687
        %v1702 = vpack.c.bf16 %v1690, %v1689
        %v1703 = vpack.c.bf16 %v1692, %v1691
        %v1704 = vpack.c.bf16 %v1694, %v1693
        %v1705 = vpack.c.bf16 %v1696, %v1695
        %v1706 = vpack.c.bf16 %v1698, %v1697
        %v1707 = vld [vmem:[#allocation19] sm:$0xf]
        %v1708 = vld [vmem:[#allocation19 + $0x4] sm:$0xf]
        %v1709 = vld [vmem:[#allocation19 + $0x8] sm:$0xf]
        %v1710 = vld [vmem:[#allocation19 + $0xc] sm:$0xf]
        %v1711 = vld [vmem:[#allocation20] sm:$0x1]
        %v1713 = vlaneseq
        %v1714 = vshrl.u32 %v1713, 7
        %v1715 = vsub.s32 0, %v1714
        %v1716 = vrot.slane %v1711, %v1715
        %v1722 = vunpack.c.l.b16 %v1707
        %v1723 = vunpack.c.l.b16 %v1708
        %v1724 = vunpack.c.l.b16 %v1709
        %v1725 = vunpack.c.l.b16 %v1710
        %v1726 = vpack.c.b16 %v1723, %v1722
        %v1727 = vpack.c.b16 %v1725, %v1724
        %v1731 = vsel %vm1397, %v1699, 0
        %v1734 = vsel %vm1397, %v1700, 0
        %v1737 = vsel %vm1397, %v1701, 0
        %v1740 = vsel %vm1397, %v1702, 0
        %v1743 = vsel %vm1397, %v1703, 0
        %v1746 = vsel %vm1397, %v1704, 0
        %v1749 = vsel %vm1397, %v1705, 0
        %v1752 = vsel %vm1397, %v1706, 0
        %1754 = vmatprep.subr.bf16.mxu0 0
        %1755 = vmatpush1.bf16.msra.mxu0 %v1726
        %1756 = vmatprep.subr.bf16.mxu0 0
        %1757 = vmatpush1.bf16.msra.mxu0 %v1727
        %1758 = vmatprep.subr.bf16.mxu0 0
        %1759 = vmatpush1.bf16.msra.mxu0 0
        %1760 = vmatprep.subr.bf16.mxu0 0
        %1761 = vmatpush1.bf16.msra.mxu0 0
        %1762 = vmatprep.subr.bf16.mxu0 0
        %1763 = vmatpush1.bf16.msra.mxu0 0
        %1764 = vmatprep.subr.bf16.mxu0 0
        %1765 = vmatpush1.bf16.msra.mxu0 0
        %1766 = vmatprep.subr.bf16.mxu0 0
        %1767 = vmatpush1.bf16.msra.mxu0 0
        %1768 = vmatprep.subr.bf16.mxu0 0
        %1769 = vmatpush1.bf16.msra.mxu0 0
        %1770 = vmatprep.subr.bf16.mxu0 0
        %1771 = vmatpush1.bf16.msra.mxu0 0
        %1772 = vmatprep.subr.bf16.mxu0 0
        %1773 = vmatpush1.bf16.msra.mxu0 0
        %1774 = vmatprep.subr.bf16.mxu0 0
        %1775 = vmatpush1.bf16.msra.mxu0 0
        %1776 = vmatprep.subr.bf16.mxu0 0
        %1777 = vmatpush1.bf16.msra.mxu0 0
        %1778 = vmatprep.subr.bf16.mxu0 0
        %1779 = vmatpush1.bf16.msra.mxu0 0
        %1780 = vmatprep.subr.bf16.mxu0 0
        %1781 = vmatpush1.bf16.msra.mxu0 0
        %1782 = vmatprep.subr.bf16.mxu0 0
        %1783 = vmatpush1.bf16.msra.mxu0 0
        %1784 = vmatprep.subr.bf16.mxu0 0
        %1785 = vmatpush1.bf16.msra.mxu0 0
        %1786 = vmatprep.mubr.bf16.mxu0 0
        %1787 = vmatmul.mubr.bf16.gmra.mrb[0].mxu0 %v1731
        %v1788 = vpop.f32.mrb[0].mxu0
        %v1789 = vadd.f32 %v1716, %v1788
        %v1790 = vpop.f32.mrb[0].mxu0
        %v1791 = vpop.f32.mrb[0].mxu0
        %v1792 = vadd.f32 %v1716, %v1791
        %v1793 = vpop.f32.mrb[0].mxu0
        %1794 = vmatprep.mubr.bf16.mxu0 0
        %1795 = vmatmul.mubr.bf16.gmra.mrb[0].mxu0 %v1734
        %v1796 = vpop.f32.mrb[0].mxu0
        %v1797 = vadd.f32 %v1716, %v1796
        %v1798 = vpop.f32.mrb[0].mxu0
        %v1799 = vpop.f32.mrb[0].mxu0
        %v1800 = vadd.f32 %v1716, %v1799
        %v1801 = vpop.f32.mrb[0].mxu0
        %1802 = vmatprep.mubr.bf16.mxu0 0
        %1803 = vmatmul.mubr.bf16.gmra.mrb[0].mxu0 %v1737
        %v1804 = vpop.f32.mrb[0].mxu0
        %v1805 = vadd.f32 %v1716, %v1804
        %v1806 = vpop.f32.mrb[0].mxu0
        %v1807 = vpop.f32.mrb[0].mxu0
        %v1808 = vadd.f32 %v1716, %v1807
        %v1809 = vpop.f32.mrb[0].mxu0
        %1810 = vmatprep.mubr.bf16.mxu0 0
        %1811 = vmatmul.mubr.bf16.gmra.mrb[0].mxu0 %v1740
        %v1812 = vpop.f32.mrb[0].mxu0
        %v1813 = vadd.f32 %v1716, %v1812
        %v1814 = vpop.f32.mrb[0].mxu0
        %v1815 = vpop.f32.mrb[0].mxu0
        %v1816 = vadd.f32 %v1716, %v1815
        %v1817 = vpop.f32.mrb[0].mxu0
        %1818 = vmatprep.mubr.bf16.mxu0 0
        %1819 = vmatmul.mubr.bf16.gmra.mrb[0].mxu0 %v1743
        %v1820 = vpop.f32.mrb[0].mxu0
        %v1821 = vadd.f32 %v1716, %v1820
        %v1822 = vpop.f32.mrb[0].mxu0
        %v1823 = vpop.f32.mrb[0].mxu0
        %v1824 = vadd.f32 %v1716, %v1823
        %v1825 = vpop.f32.mrb[0].mxu0
        %1826 = vmatprep.mubr.bf16.mxu0 0
        %1827 = vmatmul.mubr.bf16.gmra.mrb[0].mxu0 %v1746
        %v1828 = vpop.f32.mrb[0].mxu0
        %v1829 = vadd.f32 %v1716, %v1828
        %v1830 = vpop.f32.mrb[0].mxu0
        %v1831 = vpop.f32.mrb[0].mxu0
        %v1832 = vadd.f32 %v1716, %v1831
        %v1833 = vpop.f32.mrb[0].mxu0
        %1834 = vmatprep.mubr.bf16.mxu0 0
        %1835 = vmatmul.mubr.bf16.gmra.mrb[0].mxu0 %v1749
        %v1836 = vpop.f32.mrb[0].mxu0
        %v1837 = vadd.f32 %v1716, %v1836
        %v1838 = vpop.f32.mrb[0].mxu0
        %v1839 = vpop.f32.mrb[0].mxu0
        %v1840 = vadd.f32 %v1716, %v1839
        %v1841 = vpop.f32.mrb[0].mxu0
        %1842 = vmatprep.mubr.bf16.mxu0 0
        %1843 = vmatmul.mubr.bf16.gmra.mrb[0].mxu0 %v1752
        %v1844 = vpop.f32.mrb[0].mxu0
        %v1845 = vadd.f32 %v1716, %v1844
        %v1846 = vpop.f32.mrb[0].mxu0
        %v1847 = vpop.f32.mrb[0].mxu0
        %v1848 = vadd.f32 %v1716, %v1847
        %v1849 = vpop.f32.mrb[0].mxu0
        %1850 = vdwg.mxu0
        %vm1851 = vcmp.gt.f32.partialorder %v1789, 0.0
        %vm1852 = vcmp.gt.f32.partialorder %v1792, 0.0
        %vm1853 = vcmp.gt.f32.partialorder %v1797, 0.0
        %vm1854 = vcmp.gt.f32.partialorder %v1800, 0.0
        %vm1855 = vcmp.gt.f32.partialorder %v1805, 0.0
        %vm1856 = vcmp.gt.f32.partialorder %v1808, 0.0
        %vm1857 = vcmp.gt.f32.partialorder %v1813, 0.0
        %vm1858 = vcmp.gt.f32.partialorder %v1816, 0.0
        %vm1859 = vcmp.gt.f32.partialorder %v1821, 0.0
        %vm1860 = vcmp.gt.f32.partialorder %v1824, 0.0
        %vm1861 = vcmp.gt.f32.partialorder %v1829, 0.0
        %vm1862 = vcmp.gt.f32.partialorder %v1832, 0.0
        %vm1863 = vcmp.gt.f32.partialorder %v1837, 0.0
        %vm1864 = vcmp.gt.f32.partialorder %v1840, 0.0
        %vm1865 = vcmp.gt.f32.partialorder %v1845, 0.0
        %vm1866 = vcmp.gt.f32.partialorder %v1848, 0.0
        %v1867 = vmul.f32 %v1789, 0.01
        %v1868 = vmul.f32 %v1792, 0.01
        %v1869 = vmul.f32 %v1797, 0.01
        %v1870 = vmul.f32 %v1800, 0.01
        %v1871 = vmul.f32 %v1805, 0.01
        %v1872 = vmul.f32 %v1808, 0.01
        %v1873 = vmul.f32 %v1813, 0.01
        %v1874 = vmul.f32 %v1816, 0.01
        %v1875 = vmul.f32 %v1821, 0.01
        %v1876 = vmul.f32 %v1824, 0.01
        %v1877 = vmul.f32 %v1829, 0.01
        %v1878 = vmul.f32 %v1832, 0.01
        %v1879 = vmul.f32 %v1837, 0.01
        %v1880 = vmul.f32 %v1840, 0.01
        %v1881 = vmul.f32 %v1845, 0.01
        %v1882 = vmul.f32 %v1848, 0.01
        %v1883 = vsel %vm1851, %v1789, %v1867
        %v1884 = vsel %vm1852, %v1792, %v1868
        %v1885 = vsel %vm1853, %v1797, %v1869
        %v1886 = vsel %vm1854, %v1800, %v1870
        %v1887 = vsel %vm1855, %v1805, %v1871
        %v1888 = vsel %vm1856, %v1808, %v1872
        %v1889 = vsel %vm1857, %v1813, %v1873
        %v1890 = vsel %vm1858, %v1816, %v1874
        %v1891 = vsel %vm1859, %v1821, %v1875
        %v1892 = vsel %vm1860, %v1824, %v1876
        %v1893 = vsel %vm1861, %v1829, %v1877
        %v1894 = vsel %vm1862, %v1832, %v1878
        %v1895 = vsel %vm1863, %v1837, %v1879
        %v1896 = vsel %vm1864, %v1840, %v1880
        %v1897 = vsel %vm1865, %v1845, %v1881
        %v1898 = vsel %vm1866, %v1848, %v1882
        %v1899 = vld [vmem:[#allocation22] sm:$0x1]
        %v1900 = vld [vmem:[#allocation23] sm:$0x1]
        %v1901 = vsel %vm1397, %v1883, 0.0
        %1902 = vadd.xlane.f32.xlu0 %v1901
        %v1903 = vpop.xlane.xlu0 %1902
        %v1904 = vsel %vm1397, %v1884, 0.0
        %1905 = vadd.xlane.f32.xlu0 %v1904
        %v1906 = vpop.xlane.xlu0 %1905
        %v1907 = vsel %vm1397, %v1885, 0.0
        %1908 = vadd.xlane.f32.xlu0 %v1907
        %v1909 = vpop.xlane.xlu0 %1908
        %v1910 = vsel %vm1397, %v1886, 0.0
        %1911 = vadd.xlane.f32.xlu0 %v1910
        %v1912 = vpop.xlane.xlu0 %1911
        %v1913 = vsel %vm1397, %v1887, 0.0
        %1914 = vadd.xlane.f32.xlu0 %v1913
        %v1915 = vpop.xlane.xlu0 %1914
        %v1916 = vsel %vm1397, %v1888, 0.0
        %1917 = vadd.xlane.f32.xlu0 %v1916
        %v1918 = vpop.xlane.xlu0 %1917
        %v1919 = vsel %vm1397, %v1889, 0.0
        %1920 = vadd.xlane.f32.xlu0 %v1919
        %v1921 = vpop.xlane.xlu0 %1920
        %v1922 = vsel %vm1397, %v1890, 0.0
        %1923 = vadd.xlane.f32.xlu0 %v1922
        %v1924 = vpop.xlane.xlu0 %1923
        %v1925 = vsel %vm1397, %v1891, 0.0
        %1926 = vadd.xlane.f32.xlu0 %v1925
        %v1927 = vpop.xlane.xlu0 %1926
        %v1928 = vsel %vm1397, %v1892, 0.0
        %1929 = vadd.xlane.f32.xlu0 %v1928
        %v1930 = vpop.xlane.xlu0 %1929
        %v1931 = vsel %vm1397, %v1893, 0.0
        %1932 = vadd.xlane.f32.xlu0 %v1931
        %v1933 = vpop.xlane.xlu0 %1932
        %v1934 = vsel %vm1397, %v1894, 0.0
        %1935 = vadd.xlane.f32.xlu0 %v1934
        %v1936 = vpop.xlane.xlu0 %1935
        %v1937 = vsel %vm1397, %v1895, 0.0
        %1938 = vadd.xlane.f32.xlu0 %v1937
        %v1939 = vpop.xlane.xlu0 %1938
        %v1940 = vsel %vm1397, %v1896, 0.0
        %1941 = vadd.xlane.f32.xlu0 %v1940
        %v1942 = vpop.xlane.xlu0 %1941
        %v1943 = vsel %vm1397, %v1897, 0.0
        %1944 = vadd.xlane.f32.xlu0 %v1943
        %v1945 = vpop.xlane.xlu0 %1944
        %v1946 = vsel %vm1397, %v1898, 0.0
        %1947 = vadd.xlane.f32.xlu0 %v1946
        %v1948 = vpop.xlane.xlu0 %1947
        %v1949 = vmul.f32 %v1903, %v1446
        %v1950 = vmul.f32 %v1906, %v1446
        %v1951 = vmul.f32 %v1909, %v1446
        %v1952 = vmul.f32 %v1912, %v1446
        %v1953 = vmul.f32 %v1915, %v1446
        %v1954 = vmul.f32 %v1918, %v1446
        %v1955 = vmul.f32 %v1921, %v1446
        %v1956 = vmul.f32 %v1924, %v1446
        %v1957 = vmul.f32 %v1927, %v1446
        %v1958 = vmul.f32 %v1930, %v1446
        %v1959 = vmul.f32 %v1933, %v1446
        %v1960 = vmul.f32 %v1936, %v1446
        %v1961 = vmul.f32 %v1939, %v1446
        %v1962 = vmul.f32 %v1942, %v1446
        %v1963 = vmul.f32 %v1945, %v1446
        %v1964 = vmul.f32 %v1948, %v1446
        %v1965 = vmul.f32 %v1883, %v1883
        %v1966 = vmul.f32 %v1884, %v1884
        %v1967 = vmul.f32 %v1885, %v1885
        %v1968 = vmul.f32 %v1886, %v1886
        %v1969 = vmul.f32 %v1887, %v1887
        %v1970 = vmul.f32 %v1888, %v1888
        %v1971 = vmul.f32 %v1889, %v1889
        %v1972 = vmul.f32 %v1890, %v1890
        %v1973 = vmul.f32 %v1891, %v1891
        %v1974 = vmul.f32 %v1892, %v1892
        %v1975 = vmul.f32 %v1893, %v1893
        %v1976 = vmul.f32 %v1894, %v1894
        %v1977 = vmul.f32 %v1895, %v1895
        %v1978 = vmul.f32 %v1896, %v1896
        %v1979 = vmul.f32 %v1897, %v1897
        %v1980 = vmul.f32 %v1898, %v1898
        %v1981 = vsel %vm1397, %v1965, 0.0
        %1982 = vadd.xlane.f32.xlu0 %v1981
        %v1983 = vpop.xlane.xlu0 %1982
        %v1984 = vsel %vm1397, %v1966, 0.0
        %1985 = vadd.xlane.f32.xlu0 %v1984
        %v1986 = vpop.xlane.xlu0 %1985
        %v1987 = vsel %vm1397, %v1967, 0.0
        %1988 = vadd.xlane.f32.xlu0 %v1987
        %v1989 = vpop.xlane.xlu0 %1988
        %v1990 = vsel %vm1397, %v1968, 0.0
        %1991 = vadd.xlane.f32.xlu0 %v1990
        %v1992 = vpop.xlane.xlu0 %1991
        %v1993 = vsel %vm1397, %v1969, 0.0
        %1994 = vadd.xlane.f32.xlu0 %v1993
        %v1995 = vpop.xlane.xlu0 %1994
        %v1996 = vsel %vm1397, %v1970, 0.0
        %1997 = vadd.xlane.f32.xlu0 %v1996
        %v1998 = vpop.xlane.xlu0 %1997
        %v1999 = vsel %vm1397, %v1971, 0.0
        %2000 = vadd.xlane.f32.xlu0 %v1999
        %v2001 = vpop.xlane.xlu0 %2000
        %v2002 = vsel %vm1397, %v1972, 0.0
        %2003 = vadd.xlane.f32.xlu0 %v2002
        %v2004 = vpop.xlane.xlu0 %2003
        %v2005 = vsel %vm1397, %v1973, 0.0
        %2006 = vadd.xlane.f32.xlu0 %v2005
        %v2007 = vpop.xlane.xlu0 %2006
        %v2008 = vsel %vm1397, %v1974, 0.0
        %2009 = vadd.xlane.f32.xlu0 %v2008
        %v2010 = vpop.xlane.xlu0 %2009
        %v2011 = vsel %vm1397, %v1975, 0.0
        %2012 = vadd.xlane.f32.xlu0 %v2011
        %v2013 = vpop.xlane.xlu0 %2012
        %v2014 = vsel %vm1397, %v1976, 0.0
        %2015 = vadd.xlane.f32.xlu0 %v2014
        %v2016 = vpop.xlane.xlu0 %2015
        %v2017 = vsel %vm1397, %v1977, 0.0
        %2018 = vadd.xlane.f32.xlu0 %v2017
        %v2019 = vpop.xlane.xlu0 %2018
        %v2020 = vsel %vm1397, %v1978, 0.0
        %2021 = vadd.xlane.f32.xlu0 %v2020
        %v2022 = vpop.xlane.xlu0 %2021
        %v2023 = vsel %vm1397, %v1979, 0.0
        %2024 = vadd.xlane.f32.xlu0 %v2023
        %v2025 = vpop.xlane.xlu0 %2024
        %v2026 = vsel %vm1397, %v1980, 0.0
        %2027 = vadd.xlane.f32.xlu0 %v2026
        %v2028 = vpop.xlane.xlu0 %2027
        %v2029 = vmul.f32 %v1983, %v1446
        %v2030 = vmul.f32 %v1986, %v1446
        %v2031 = vmul.f32 %v1989, %v1446
        %v2032 = vmul.f32 %v1992, %v1446
        %v2033 = vmul.f32 %v1995, %v1446
        %v2034 = vmul.f32 %v1998, %v1446
        %v2035 = vmul.f32 %v2001, %v1446
        %v2036 = vmul.f32 %v2004, %v1446
        %v2037 = vmul.f32 %v2007, %v1446
        %v2038 = vmul.f32 %v2010, %v1446
        %v2039 = vmul.f32 %v2013, %v1446
        %v2040 = vmul.f32 %v2016, %v1446
        %v2041 = vmul.f32 %v2019, %v1446
        %v2042 = vmul.f32 %v2022, %v1446
        %v2043 = vmul.f32 %v2025, %v1446
        %v2044 = vmul.f32 %v2028, %v1446
        %v2045 = vmul.f32 %v1949, %v1949
        %v2046 = vmul.f32 %v1950, %v1950
        %v2047 = vmul.f32 %v1951, %v1951
        %v2048 = vmul.f32 %v1952, %v1952
        %v2049 = vmul.f32 %v1953, %v1953
        %v2050 = vmul.f32 %v1954, %v1954
        %v2051 = vmul.f32 %v1955, %v1955
        %v2052 = vmul.f32 %v1956, %v1956
        %v2053 = vmul.f32 %v1957, %v1957
        %v2054 = vmul.f32 %v1958, %v1958
        %v2055 = vmul.f32 %v1959, %v1959
        %v2056 = vmul.f32 %v1960, %v1960
        %v2057 = vmul.f32 %v1961, %v1961
        %v2058 = vmul.f32 %v1962, %v1962
        %v2059 = vmul.f32 %v1963, %v1963
        %v2060 = vmul.f32 %v1964, %v1964
        %v2061 = vsub.f32 %v2029, %v2045
        %v2062 = vsub.f32 %v2030, %v2046
        %v2063 = vsub.f32 %v2031, %v2047
        %v2064 = vsub.f32 %v2032, %v2048
        %v2065 = vsub.f32 %v2033, %v2049
        %v2066 = vsub.f32 %v2034, %v2050
        %v2067 = vsub.f32 %v2035, %v2051
        %v2068 = vsub.f32 %v2036, %v2052
        %v2069 = vsub.f32 %v2037, %v2053
        %v2070 = vsub.f32 %v2038, %v2054
        %v2071 = vsub.f32 %v2039, %v2055
        %v2072 = vsub.f32 %v2040, %v2056
        %v2073 = vsub.f32 %v2041, %v2057
        %v2074 = vsub.f32 %v2042, %v2058
        %v2075 = vsub.f32 %v2043, %v2059
        %v2076 = vsub.f32 %v2044, %v2060
        %v2077 = vmax.f32 %v2061, 0.0
        %v2078 = vmax.f32 %v2062, 0.0
        %v2079 = vmax.f32 %v2063, 0.0
        %v2080 = vmax.f32 %v2064, 0.0
        %v2081 = vmax.f32 %v2065, 0.0
        %v2082 = vmax.f32 %v2066, 0.0
        %v2083 = vmax.f32 %v2067, 0.0
        %v2084 = vmax.f32 %v2068, 0.0
        %v2085 = vmax.f32 %v2069, 0.0
        %v2086 = vmax.f32 %v2070, 0.0
        %v2087 = vmax.f32 %v2071, 0.0
        %v2088 = vmax.f32 %v2072, 0.0
        %v2089 = vmax.f32 %v2073, 0.0
        %v2090 = vmax.f32 %v2074, 0.0
        %v2091 = vmax.f32 %v2075, 0.0
        %v2092 = vmax.f32 %v2076, 0.0
        %v2093 = vsub.f32 %v1883, %v1949
        %v2094 = vsub.f32 %v1884, %v1950
        %v2095 = vsub.f32 %v1885, %v1951
        %v2096 = vsub.f32 %v1886, %v1952
        %v2097 = vsub.f32 %v1887, %v1953
        %v2098 = vsub.f32 %v1888, %v1954
        %v2099 = vsub.f32 %v1889, %v1955
        %v2100 = vsub.f32 %v1890, %v1956
        %v2101 = vsub.f32 %v1891, %v1957
        %v2102 = vsub.f32 %v1892, %v1958
        %v2103 = vsub.f32 %v1893, %v1959
        %v2104 = vsub.f32 %v1894, %v1960
        %v2105 = vsub.f32 %v1895, %v1961
        %v2106 = vsub.f32 %v1896, %v1962
        %v2107 = vsub.f32 %v1897, %v1963
        %v2108 = vsub.f32 %v1898, %v1964
        %v2109 = vadd.f32 %v2077, 1e-06
        %v2110 = vadd.f32 %v2078, 1e-06
        %v2111 = vadd.f32 %v2079, 1e-06
        %v2112 = vadd.f32 %v2080, 1e-06
        %v2113 = vadd.f32 %v2081, 1e-06
        %v2114 = vadd.f32 %v2082, 1e-06
        %v2115 = vadd.f32 %v2083, 1e-06
        %v2116 = vadd.f32 %v2084, 1e-06
        %v2117 = vadd.f32 %v2085, 1e-06
        %v2118 = vadd.f32 %v2086, 1e-06
        %v2119 = vadd.f32 %v2087, 1e-06
        %v2120 = vadd.f32 %v2088, 1e-06
        %v2121 = vadd.f32 %v2089, 1e-06
        %v2122 = vadd.f32 %v2090, 1e-06
        %v2123 = vadd.f32 %v2091, 1e-06
        %v2124 = vadd.f32 %v2092, 1e-06
        %v2125 = vrsqrt.pop %v2109
        %v2126 = vrsqrt.pop %v2110
        %v2127 = vrsqrt.pop %v2111
        %v2128 = vrsqrt.pop %v2112
        %v2129 = vrsqrt.pop %v2113
        %v2130 = vrsqrt.pop %v2114
        %v2131 = vrsqrt.pop %v2115
        %v2132 = vrsqrt.pop %v2116
        %v2133 = vrsqrt.pop %v2117
        %v2134 = vrsqrt.pop %v2118
        %v2135 = vrsqrt.pop %v2119
        %v2136 = vrsqrt.pop %v2120
        %v2137 = vrsqrt.pop %v2121
        %v2138 = vrsqrt.pop %v2122
        %v2139 = vrsqrt.pop %v2123
        %v2140 = vrsqrt.pop %v2124
        %v2141 = vmul.f32 %v2093, %v2125
        %v2142 = vmul.f32 %v2094, %v2126
        %v2143 = vmul.f32 %v2095, %v2127
        %v2144 = vmul.f32 %v2096, %v2128
        %v2145 = vmul.f32 %v2097, %v2129
        %v2146 = vmul.f32 %v2098, %v2130
        %v2147 = vmul.f32 %v2099, %v2131
        %v2148 = vmul.f32 %v2100, %v2132
        %v2149 = vmul.f32 %v2101, %v2133
        %v2150 = vmul.f32 %v2102, %v2134
        %v2151 = vmul.f32 %v2103, %v2135
        %v2152 = vmul.f32 %v2104, %v2136
        %v2153 = vmul.f32 %v2105, %v2137
        %v2154 = vmul.f32 %v2106, %v2138
        %v2155 = vmul.f32 %v2107, %v2139
        %v2156 = vmul.f32 %v2108, %v2140
        %v2158 = vlaneseq
        %v2159 = vshrl.u32 %v2158, 7
        %v2160 = vsub.s32 0, %v2159
        %v2161 = vrot.slane %v1899, %v2160
        %v2163 = vmul.f32 %v2141, %v2161
        %v2164 = vmul.f32 %v2142, %v2161
        %v2165 = vmul.f32 %v2143, %v2161
        %v2166 = vmul.f32 %v2144, %v2161
        %v2167 = vmul.f32 %v2145, %v2161
        %v2168 = vmul.f32 %v2146, %v2161
        %v2169 = vmul.f32 %v2147, %v2161
        %v2170 = vmul.f32 %v2148, %v2161
        %v2171 = vmul.f32 %v2149, %v2161
        %v2172 = vmul.f32 %v2150, %v2161
        %v2173 = vmul.f32 %v2151, %v2161
        %v2174 = vmul.f32 %v2152, %v2161
        %v2175 = vmul.f32 %v2153, %v2161
        %v2176 = vmul.f32 %v2154, %v2161
        %v2177 = vmul.f32 %v2155, %v2161
        %v2178 = vmul.f32 %v2156, %v2161
        %v2180 = vlaneseq
        %v2181 = vshrl.u32 %v2180, 7
        %v2182 = vsub.s32 0, %v2181
        %v2183 = vrot.slane %v1900, %v2182
        %v2185 = vadd.f32 %v2163, %v2183
        %v2186 = vadd.f32 %v2164, %v2183
        %v2187 = vadd.f32 %v2165, %v2183
        %v2188 = vadd.f32 %v2166, %v2183
        %v2189 = vadd.f32 %v2167, %v2183
        %v2190 = vadd.f32 %v2168, %v2183
        %v2191 = vadd.f32 %v2169, %v2183
        %v2192 = vadd.f32 %v2170, %v2183
        %v2193 = vadd.f32 %v2171, %v2183
        %v2194 = vadd.f32 %v2172, %v2183
        %v2195 = vadd.f32 %v2173, %v2183
        %v2196 = vadd.f32 %v2174, %v2183
        %v2197 = vadd.f32 %v2175, %v2183
        %v2198 = vadd.f32 %v2176, %v2183
        %v2199 = vadd.f32 %v2177, %v2183
        %v2200 = vadd.f32 %v2178, %v2183
        %v2201 = vpack.c.bf16 %v2186, %v2185
        %v2202 = vpack.c.bf16 %v2188, %v2187
        %v2203 = vpack.c.bf16 %v2190, %v2189
        %v2204 = vpack.c.bf16 %v2192, %v2191
        %v2205 = vpack.c.bf16 %v2194, %v2193
        %v2206 = vpack.c.bf16 %v2196, %v2195
        %v2207 = vpack.c.bf16 %v2198, %v2197
        %v2208 = vpack.c.bf16 %v2200, %v2199
        %v2209 = vld [vmem:[#allocation25] sm:$0xf]
        %v2210 = vld [vmem:[#allocation25 + $0x4] sm:$0xf]
        %v2211 = vld [vmem:[#allocation25 + $0x8] sm:$0xf]
        %v2212 = vld [vmem:[#allocation25 + $0xc] sm:$0xf]
        %v2213 = vld [vmem:[#allocation26] sm:$0x1]
        %v2215 = vlaneseq
        %v2216 = vshrl.u32 %v2215, 7
        %v2217 = vsub.s32 0, %v2216
        %v2218 = vrot.slane %v2213, %v2217
        %v2224 = vunpack.c.l.b16 %v2209
        %v2225 = vunpack.c.l.b16 %v2210
        %v2226 = vunpack.c.l.b16 %v2211
        %v2227 = vunpack.c.l.b16 %v2212
        %v2228 = vpack.c.b16 %v2225, %v2224
        %v2229 = vpack.c.b16 %v2227, %v2226
        %v2233 = vsel %vm1397, %v2201, 0
        %v2236 = vsel %vm1397, %v2202, 0
        %v2239 = vsel %vm1397, %v2203, 0
        %v2242 = vsel %vm1397, %v2204, 0
        %v2245 = vsel %vm1397, %v2205, 0
        %v2248 = vsel %vm1397, %v2206, 0
        %v2251 = vsel %vm1397, %v2207, 0
        %v2254 = vsel %vm1397, %v2208, 0
        %2256 = vmatprep.subr.bf16.mxu0 0
        %2257 = vmatpush1.bf16.msra.mxu0 %v2228
        %2258 = vmatprep.subr.bf16.mxu0 0
        %2259 = vmatpush1.bf16.msra.mxu0 %v2229
        %2260 = vmatprep.subr.bf16.mxu0 0
        %2261 = vmatpush1.bf16.msra.mxu0 0
        %2262 = vmatprep.subr.bf16.mxu0 0
        %2263 = vmatpush1.bf16.msra.mxu0 0
        %2264 = vmatprep.subr.bf16.mxu0 0
        %2265 = vmatpush1.bf16.msra.mxu0 0
        %2266 = vmatprep.subr.bf16.mxu0 0
        %2267 = vmatpush1.bf16.msra.mxu0 0
        %2268 = vmatprep.subr.bf16.mxu0 0
        %2269 = vmatpush1.bf16.msra.mxu0 0
        %2270 = vmatprep.subr.bf16.mxu0 0
        %2271 = vmatpush1.bf16.msra.mxu0 0
        %2272 = vmatprep.subr.bf16.mxu0 0
        %2273 = vmatpush1.bf16.msra.mxu0 0
        %2274 = vmatprep.subr.bf16.mxu0 0
        %2275 = vmatpush1.bf16.msra.mxu0 0
        %2276 = vmatprep.subr.bf16.mxu0 0
        %2277 = vmatpush1.bf16.msra.mxu0 0
        %2278 = vmatprep.subr.bf16.mxu0 0
        %2279 = vmatpush1.bf16.msra.mxu0 0
        %2280 = vmatprep.subr.bf16.mxu0 0
        %2281 = vmatpush1.bf16.msra.mxu0 0
        %2282 = vmatprep.subr.bf16.mxu0 0
        %2283 = vmatpush1.bf16.msra.mxu0 0
        %2284 = vmatprep.subr.bf16.mxu0 0
        %2285 = vmatpush1.bf16.msra.mxu0 0
        %2286 = vmatprep.subr.bf16.mxu0 0
        %2287 = vmatpush1.bf16.msra.mxu0 0
        %2288 = vmatprep.mubr.bf16.mxu0 0
        %2289 = vmatmul.mubr.bf16.gmra.mrb[0].mxu0 %v2233
        %v2290 = vpop.f32.mrb[0].mxu0
        %v2291 = vadd.f32 %v2218, %v2290
        %v2292 = vpop.f32.mrb[0].mxu0
        %v2293 = vpop.f32.mrb[0].mxu0
        %v2294 = vadd.f32 %v2218, %v2293
        %v2295 = vpop.f32.mrb[0].mxu0
        %2296 = vmatprep.mubr.bf16.mxu0 0
        %2297 = vmatmul.mubr.bf16.gmra.mrb[0].mxu0 %v2236
        %v2298 = vpop.f32.mrb[0].mxu0
        %v2299 = vadd.f32 %v2218, %v2298
        %v2300 = vpop.f32.mrb[0].mxu0
        %v2301 = vpop.f32.mrb[0].mxu0
        %v2302 = vadd.f32 %v2218, %v2301
        %v2303 = vpop.f32.mrb[0].mxu0
        %2304 = vmatprep.mubr.bf16.mxu0 0
        %2305 = vmatmul.mubr.bf16.gmra.mrb[0].mxu0 %v2239
        %v2306 = vpop.f32.mrb[0].mxu0
        %v2307 = vadd.f32 %v2218, %v2306
        %v2308 = vpop.f32.mrb[0].mxu0
        %v2309 = vpop.f32.mrb[0].mxu0
        %v2310 = vadd.f32 %v2218, %v2309
        %v2311 = vpop.f32.mrb[0].mxu0
        %2312 = vmatprep.mubr.bf16.mxu0 0
        %2313 = vmatmul.mubr.bf16.gmra.mrb[0].mxu0 %v2242
        %v2314 = vpop.f32.mrb[0].mxu0
        %v2315 = vadd.f32 %v2218, %v2314
        %v2316 = vpop.f32.mrb[0].mxu0
        %v2317 = vpop.f32.mrb[0].mxu0
        %v2318 = vadd.f32 %v2218, %v2317
        %v2319 = vpop.f32.mrb[0].mxu0
        %2320 = vmatprep.mubr.bf16.mxu0 0
        %2321 = vmatmul.mubr.bf16.gmra.mrb[0].mxu0 %v2245
        %v2322 = vpop.f32.mrb[0].mxu0
        %v2323 = vadd.f32 %v2218, %v2322
        %v2324 = vpop.f32.mrb[0].mxu0
        %v2325 = vpop.f32.mrb[0].mxu0
        %v2326 = vadd.f32 %v2218, %v2325
        %v2327 = vpop.f32.mrb[0].mxu0
        %2328 = vmatprep.mubr.bf16.mxu0 0
        %2329 = vmatmul.mubr.bf16.gmra.mrb[0].mxu0 %v2248
        %v2330 = vpop.f32.mrb[0].mxu0
        %v2331 = vadd.f32 %v2218, %v2330
        %v2332 = vpop.f32.mrb[0].mxu0
        %v2333 = vpop.f32.mrb[0].mxu0
        %v2334 = vadd.f32 %v2218, %v2333
        %v2335 = vpop.f32.mrb[0].mxu0
        %2336 = vmatprep.mubr.bf16.mxu0 0
        %2337 = vmatmul.mubr.bf16.gmra.mrb[0].mxu0 %v2251
        %v2338 = vpop.f32.mrb[0].mxu0
        %v2339 = vadd.f32 %v2218, %v2338
        %v2340 = vpop.f32.mrb[0].mxu0
        %v2341 = vpop.f32.mrb[0].mxu0
        %v2342 = vadd.f32 %v2218, %v2341
        %v2343 = vpop.f32.mrb[0].mxu0
        %2344 = vmatprep.mubr.bf16.mxu0 0
        %2345 = vmatmul.mubr.bf16.gmra.mrb[0].mxu0 %v2254
        %v2346 = vpop.f32.mrb[0].mxu0
        %v2347 = vadd.f32 %v2218, %v2346
        %v2348 = vpop.f32.mrb[0].mxu0
        %v2349 = vpop.f32.mrb[0].mxu0
        %v2350 = vadd.f32 %v2218, %v2349
        %v2351 = vpop.f32.mrb[0].mxu0
        %2352 = vdwg.mxu0
        %vm2353 = vcmp.gt.f32.partialorder %v2291, 0.0
        %vm2354 = vcmp.gt.f32.partialorder %v2294, 0.0
        %vm2355 = vcmp.gt.f32.partialorder %v2299, 0.0
        %vm2356 = vcmp.gt.f32.partialorder %v2302, 0.0
        %vm2357 = vcmp.gt.f32.partialorder %v2307, 0.0
        %vm2358 = vcmp.gt.f32.partialorder %v2310, 0.0
        %vm2359 = vcmp.gt.f32.partialorder %v2315, 0.0
        %vm2360 = vcmp.gt.f32.partialorder %v2318, 0.0
        %vm2361 = vcmp.gt.f32.partialorder %v2323, 0.0
        %vm2362 = vcmp.gt.f32.partialorder %v2326, 0.0
        %vm2363 = vcmp.gt.f32.partialorder %v2331, 0.0
        %vm2364 = vcmp.gt.f32.partialorder %v2334, 0.0
        %vm2365 = vcmp.gt.f32.partialorder %v2339, 0.0
        %vm2366 = vcmp.gt.f32.partialorder %v2342, 0.0
        %vm2367 = vcmp.gt.f32.partialorder %v2347, 0.0
        %vm2368 = vcmp.gt.f32.partialorder %v2350, 0.0
        %v2369 = vmul.f32 %v2291, 0.01
        %v2370 = vmul.f32 %v2294, 0.01
        %v2371 = vmul.f32 %v2299, 0.01
        %v2372 = vmul.f32 %v2302, 0.01
        %v2373 = vmul.f32 %v2307, 0.01
        %v2374 = vmul.f32 %v2310, 0.01
        %v2375 = vmul.f32 %v2315, 0.01
        %v2376 = vmul.f32 %v2318, 0.01
        %v2377 = vmul.f32 %v2323, 0.01
        %v2378 = vmul.f32 %v2326, 0.01
        %v2379 = vmul.f32 %v2331, 0.01
        %v2380 = vmul.f32 %v2334, 0.01
        %v2381 = vmul.f32 %v2339, 0.01
        %v2382 = vmul.f32 %v2342, 0.01
        %v2383 = vmul.f32 %v2347, 0.01
        %v2384 = vmul.f32 %v2350, 0.01
        %v2385 = vsel %vm2353, %v2291, %v2369
        %v2386 = vsel %vm2354, %v2294, %v2370
        %v2387 = vsel %vm2355, %v2299, %v2371
        %v2388 = vsel %vm2356, %v2302, %v2372
        %v2389 = vsel %vm2357, %v2307, %v2373
        %v2390 = vsel %vm2358, %v2310, %v2374
        %v2391 = vsel %vm2359, %v2315, %v2375
        %v2392 = vsel %vm2360, %v2318, %v2376
        %v2393 = vsel %vm2361, %v2323, %v2377
        %v2394 = vsel %vm2362, %v2326, %v2378
        %v2395 = vsel %vm2363, %v2331, %v2379
        %v2396 = vsel %vm2364, %v2334, %v2380
        %v2397 = vsel %vm2365, %v2339, %v2381
        %v2398 = vsel %vm2366, %v2342, %v2382
        %v2399 = vsel %vm2367, %v2347, %v2383
        %v2400 = vsel %vm2368, %v2350, %v2384
        %v2401 = vld [vmem:[#allocation28] sm:$0x1]
        %v2402 = vld [vmem:[#allocation29] sm:$0x1]
        %vm2403 = vcmask 523264
        %v2404 = vsel %vm2403, %v2385, 0.0
        %2405 = vadd.xlane.f32.xlu0 %v2404
        %v2406 = vpop.xlane.xlu0 %2405
        %v2407 = vsel %vm2403, %v2386, 0.0
        %2408 = vadd.xlane.f32.xlu0 %v2407
        %v2409 = vpop.xlane.xlu0 %2408
        %v2410 = vsel %vm2403, %v2387, 0.0
        %2411 = vadd.xlane.f32.xlu0 %v2410
        %v2412 = vpop.xlane.xlu0 %2411
        %v2413 = vsel %vm2403, %v2388, 0.0
        %2414 = vadd.xlane.f32.xlu0 %v2413
        %v2415 = vpop.xlane.xlu0 %2414
        %v2416 = vsel %vm2403, %v2389, 0.0
        %2417 = vadd.xlane.f32.xlu0 %v2416
        %v2418 = vpop.xlane.xlu0 %2417
        %v2419 = vsel %vm2403, %v2390, 0.0
        %2420 = vadd.xlane.f32.xlu0 %v2419
        %v2421 = vpop.xlane.xlu0 %2420
        %v2422 = vsel %vm2403, %v2391, 0.0
        %2423 = vadd.xlane.f32.xlu0 %v2422
        %v2424 = vpop.xlane.xlu0 %2423
        %v2425 = vsel %vm2403, %v2392, 0.0
        %2426 = vadd.xlane.f32.xlu0 %v2425
        %v2427 = vpop.xlane.xlu0 %2426
        %v2428 = vsel %vm2403, %v2393, 0.0
        %2429 = vadd.xlane.f32.xlu0 %v2428
        %v2430 = vpop.xlane.xlu0 %2429
        %v2431 = vsel %vm2403, %v2394, 0.0
        %2432 = vadd.xlane.f32.xlu0 %v2431
        %v2433 = vpop.xlane.xlu0 %2432
        %v2434 = vsel %vm2403, %v2395, 0.0
        %2435 = vadd.xlane.f32.xlu0 %v2434
        %v2436 = vpop.xlane.xlu0 %2435
        %v2437 = vsel %vm2403, %v2396, 0.0
        %2438 = vadd.xlane.f32.xlu0 %v2437
        %v2439 = vpop.xlane.xlu0 %2438
        %v2440 = vsel %vm2403, %v2397, 0.0
        %2441 = vadd.xlane.f32.xlu0 %v2440
        %v2442 = vpop.xlane.xlu0 %2441
        %v2443 = vsel %vm2403, %v2398, 0.0
        %2444 = vadd.xlane.f32.xlu0 %v2443
        %v2445 = vpop.xlane.xlu0 %2444
        %v2446 = vsel %vm2403, %v2399, 0.0
        %2447 = vadd.xlane.f32.xlu0 %v2446
        %v2448 = vpop.xlane.xlu0 %2447
        %v2449 = vsel %vm2403, %v2400, 0.0
        %2450 = vadd.xlane.f32.xlu0 %v2449
        %v2451 = vpop.xlane.xlu0 %2450
        %v2452 = vrcp.pop 64.0
        %v2453 = vmul.f32 %v2406, %v2452
        %v2454 = vmul.f32 %v2409, %v2452
        %v2455 = vmul.f32 %v2412, %v2452
        %v2456 = vmul.f32 %v2415, %v2452
        %v2457 = vmul.f32 %v2418, %v2452
        %v2458 = vmul.f32 %v2421, %v2452
        %v2459 = vmul.f32 %v2424, %v2452
        %v2460 = vmul.f32 %v2427, %v2452
        %v2461 = vmul.f32 %v2430, %v2452
        %v2462 = vmul.f32 %v2433, %v2452
        %v2463 = vmul.f32 %v2436, %v2452
        %v2464 = vmul.f32 %v2439, %v2452
        %v2465 = vmul.f32 %v2442, %v2452
        %v2466 = vmul.f32 %v2445, %v2452
        %v2467 = vmul.f32 %v2448, %v2452
        %v2468 = vmul.f32 %v2451, %v2452
        %v2469 = vmul.f32 %v2385, %v2385
        %v2470 = vmul.f32 %v2386, %v2386
        %v2471 = vmul.f32 %v2387, %v2387
        %v2472 = vmul.f32 %v2388, %v2388
        %v2473 = vmul.f32 %v2389, %v2389
        %v2474 = vmul.f32 %v2390, %v2390
        %v2475 = vmul.f32 %v2391, %v2391
        %v2476 = vmul.f32 %v2392, %v2392
        %v2477 = vmul.f32 %v2393, %v2393
        %v2478 = vmul.f32 %v2394, %v2394
        %v2479 = vmul.f32 %v2395, %v2395
        %v2480 = vmul.f32 %v2396, %v2396
        %v2481 = vmul.f32 %v2397, %v2397
        %v2482 = vmul.f32 %v2398, %v2398
        %v2483 = vmul.f32 %v2399, %v2399
        %v2484 = vmul.f32 %v2400, %v2400
        %v2485 = vsel %vm2403, %v2469, 0.0
        %2486 = vadd.xlane.f32.xlu0 %v2485
        %v2487 = vpop.xlane.xlu0 %2486
        %v2488 = vsel %vm2403, %v2470, 0.0
        %2489 = vadd.xlane.f32.xlu0 %v2488
        %v2490 = vpop.xlane.xlu0 %2489
        %v2491 = vsel %vm2403, %v2471, 0.0
        %2492 = vadd.xlane.f32.xlu0 %v2491
        %v2493 = vpop.xlane.xlu0 %2492
        %v2494 = vsel %vm2403, %v2472, 0.0
        %2495 = vadd.xlane.f32.xlu0 %v2494
        %v2496 = vpop.xlane.xlu0 %2495
        %v2497 = vsel %vm2403, %v2473, 0.0
        %2498 = vadd.xlane.f32.xlu0 %v2497
        %v2499 = vpop.xlane.xlu0 %2498
        %v2500 = vsel %vm2403, %v2474, 0.0
        %2501 = vadd.xlane.f32.xlu0 %v2500
        %v2502 = vpop.xlane.xlu0 %2501
        %v2503 = vsel %vm2403, %v2475, 0.0
        %2504 = vadd.xlane.f32.xlu0 %v2503
        %v2505 = vpop.xlane.xlu0 %2504
        %v2506 = vsel %vm2403, %v2476, 0.0
        %2507 = vadd.xlane.f32.xlu0 %v2506
        %v2508 = vpop.xlane.xlu0 %2507
        %v2509 = vsel %vm2403, %v2477, 0.0
        %2510 = vadd.xlane.f32.xlu0 %v2509
        %v2511 = vpop.xlane.xlu0 %2510
        %v2512 = vsel %vm2403, %v2478, 0.0
        %2513 = vadd.xlane.f32.xlu0 %v2512
        %v2514 = vpop.xlane.xlu0 %2513
        %v2515 = vsel %vm2403, %v2479, 0.0
        %2516 = vadd.xlane.f32.xlu0 %v2515
        %v2517 = vpop.xlane.xlu0 %2516
        %v2518 = vsel %vm2403, %v2480, 0.0
        %2519 = vadd.xlane.f32.xlu0 %v2518
        %v2520 = vpop.xlane.xlu0 %2519
        %v2521 = vsel %vm2403, %v2481, 0.0
        %2522 = vadd.xlane.f32.xlu0 %v2521
        %v2523 = vpop.xlane.xlu0 %2522
        %v2524 = vsel %vm2403, %v2482, 0.0
        %2525 = vadd.xlane.f32.xlu0 %v2524
        %v2526 = vpop.xlane.xlu0 %2525
        %v2527 = vsel %vm2403, %v2483, 0.0
        %2528 = vadd.xlane.f32.xlu0 %v2527
        %v2529 = vpop.xlane.xlu0 %2528
        %v2530 = vsel %vm2403, %v2484, 0.0
        %2531 = vadd.xlane.f32.xlu0 %v2530
        %v2532 = vpop.xlane.xlu0 %2531
        %v2533 = vmul.f32 %v2487, %v2452
        %v2534 = vmul.f32 %v2490, %v2452
        %v2535 = vmul.f32 %v2493, %v2452
        %v2536 = vmul.f32 %v2496, %v2452
        %v2537 = vmul.f32 %v2499, %v2452
        %v2538 = vmul.f32 %v2502, %v2452
        %v2539 = vmul.f32 %v2505, %v2452
        %v2540 = vmul.f32 %v2508, %v2452
        %v2541 = vmul.f32 %v2511, %v2452
        %v2542 = vmul.f32 %v2514, %v2452
        %v2543 = vmul.f32 %v2517, %v2452
        %v2544 = vmul.f32 %v2520, %v2452
        %v2545 = vmul.f32 %v2523, %v2452
        %v2546 = vmul.f32 %v2526, %v2452
        %v2547 = vmul.f32 %v2529, %v2452
        %v2548 = vmul.f32 %v2532, %v2452
        %v2549 = vmul.f32 %v2453, %v2453
        %v2550 = vmul.f32 %v2454, %v2454
        %v2551 = vmul.f32 %v2455, %v2455
        %v2552 = vmul.f32 %v2456, %v2456
        %v2553 = vmul.f32 %v2457, %v2457
        %v2554 = vmul.f32 %v2458, %v2458
        %v2555 = vmul.f32 %v2459, %v2459
        %v2556 = vmul.f32 %v2460, %v2460
        %v2557 = vmul.f32 %v2461, %v2461
        %v2558 = vmul.f32 %v2462, %v2462
        %v2559 = vmul.f32 %v2463, %v2463
        %v2560 = vmul.f32 %v2464, %v2464
        %v2561 = vmul.f32 %v2465, %v2465
        %v2562 = vmul.f32 %v2466, %v2466
        %v2563 = vmul.f32 %v2467, %v2467
        %v2564 = vmul.f32 %v2468, %v2468
        %v2565 = vsub.f32 %v2533, %v2549
        %v2566 = vsub.f32 %v2534, %v2550
        %v2567 = vsub.f32 %v2535, %v2551
        %v2568 = vsub.f32 %v2536, %v2552
        %v2569 = vsub.f32 %v2537, %v2553
        %v2570 = vsub.f32 %v2538, %v2554
        %v2571 = vsub.f32 %v2539, %v2555
        %v2572 = vsub.f32 %v2540, %v2556
        %v2573 = vsub.f32 %v2541, %v2557
        %v2574 = vsub.f32 %v2542, %v2558
        %v2575 = vsub.f32 %v2543, %v2559
        %v2576 = vsub.f32 %v2544, %v2560
        %v2577 = vsub.f32 %v2545, %v2561
        %v2578 = vsub.f32 %v2546, %v2562
        %v2579 = vsub.f32 %v2547, %v2563
        %v2580 = vsub.f32 %v2548, %v2564
        %v2581 = vmax.f32 %v2565, 0.0
        %v2582 = vmax.f32 %v2566, 0.0
        %v2583 = vmax.f32 %v2567, 0.0
        %v2584 = vmax.f32 %v2568, 0.0
        %v2585 = vmax.f32 %v2569, 0.0
        %v2586 = vmax.f32 %v2570, 0.0
        %v2587 = vmax.f32 %v2571, 0.0
        %v2588 = vmax.f32 %v2572, 0.0
        %v2589 = vmax.f32 %v2573, 0.0
        %v2590 = vmax.f32 %v2574, 0.0
        %v2591 = vmax.f32 %v2575, 0.0
        %v2592 = vmax.f32 %v2576, 0.0
        %v2593 = vmax.f32 %v2577, 0.0
        %v2594 = vmax.f32 %v2578, 0.0
        %v2595 = vmax.f32 %v2579, 0.0
        %v2596 = vmax.f32 %v2580, 0.0
        %v2597 = vsub.f32 %v2385, %v2453
        %v2598 = vsub.f32 %v2386, %v2454
        %v2599 = vsub.f32 %v2387, %v2455
        %v2600 = vsub.f32 %v2388, %v2456
        %v2601 = vsub.f32 %v2389, %v2457
        %v2602 = vsub.f32 %v2390, %v2458
        %v2603 = vsub.f32 %v2391, %v2459
        %v2604 = vsub.f32 %v2392, %v2460
        %v2605 = vsub.f32 %v2393, %v2461
        %v2606 = vsub.f32 %v2394, %v2462
        %v2607 = vsub.f32 %v2395, %v2463
        %v2608 = vsub.f32 %v2396, %v2464
        %v2609 = vsub.f32 %v2397, %v2465
        %v2610 = vsub.f32 %v2398, %v2466
        %v2611 = vsub.f32 %v2399, %v2467
        %v2612 = vsub.f32 %v2400, %v2468
        %v2613 = vadd.f32 %v2581, 1e-06
        %v2614 = vadd.f32 %v2582, 1e-06
        %v2615 = vadd.f32 %v2583, 1e-06
        %v2616 = vadd.f32 %v2584, 1e-06
        %v2617 = vadd.f32 %v2585, 1e-06
        %v2618 = vadd.f32 %v2586, 1e-06
        %v2619 = vadd.f32 %v2587, 1e-06
        %v2620 = vadd.f32 %v2588, 1e-06
        %v2621 = vadd.f32 %v2589, 1e-06
        %v2622 = vadd.f32 %v2590, 1e-06
        %v2623 = vadd.f32 %v2591, 1e-06
        %v2624 = vadd.f32 %v2592, 1e-06
        %v2625 = vadd.f32 %v2593, 1e-06
        %v2626 = vadd.f32 %v2594, 1e-06
        %v2627 = vadd.f32 %v2595, 1e-06
        %v2628 = vadd.f32 %v2596, 1e-06
        %v2629 = vrsqrt.pop %v2613
        %v2630 = vrsqrt.pop %v2614
        %v2631 = vrsqrt.pop %v2615
        %v2632 = vrsqrt.pop %v2616
        %v2633 = vrsqrt.pop %v2617
        %v2634 = vrsqrt.pop %v2618
        %v2635 = vrsqrt.pop %v2619
        %v2636 = vrsqrt.pop %v2620
        %v2637 = vrsqrt.pop %v2621
        %v2638 = vrsqrt.pop %v2622
        %v2639 = vrsqrt.pop %v2623
        %v2640 = vrsqrt.pop %v2624
        %v2641 = vrsqrt.pop %v2625
        %v2642 = vrsqrt.pop %v2626
        %v2643 = vrsqrt.pop %v2627
        %v2644 = vrsqrt.pop %v2628
        %v2645 = vmul.f32 %v2597, %v2629
        %v2646 = vmul.f32 %v2598, %v2630
        %v2647 = vmul.f32 %v2599, %v2631
        %v2648 = vmul.f32 %v2600, %v2632
        %v2649 = vmul.f32 %v2601, %v2633
        %v2650 = vmul.f32 %v2602, %v2634
        %v2651 = vmul.f32 %v2603, %v2635
        %v2652 = vmul.f32 %v2604, %v2636
        %v2653 = vmul.f32 %v2605, %v2637
        %v2654 = vmul.f32 %v2606, %v2638
        %v2655 = vmul.f32 %v2607, %v2639
        %v2656 = vmul.f32 %v2608, %v2640
        %v2657 = vmul.f32 %v2609, %v2641
        %v2658 = vmul.f32 %v2610, %v2642
        %v2659 = vmul.f32 %v2611, %v2643
        %v2660 = vmul.f32 %v2612, %v2644
        %v2662 = vlaneseq
        %v2663 = vshrl.u32 %v2662, 7
        %v2664 = vsub.s32 0, %v2663
        %v2665 = vrot.slane %v2401, %v2664
        %v2667 = vmul.f32 %v2645, %v2665
        %v2668 = vmul.f32 %v2646, %v2665
        %v2669 = vmul.f32 %v2647, %v2665
        %v2670 = vmul.f32 %v2648, %v2665
        %v2671 = vmul.f32 %v2649, %v2665
        %v2672 = vmul.f32 %v2650, %v2665
        %v2673 = vmul.f32 %v2651, %v2665
        %v2674 = vmul.f32 %v2652, %v2665
        %v2675 = vmul.f32 %v2653, %v2665
        %v2676 = vmul.f32 %v2654, %v2665
        %v2677 = vmul.f32 %v2655, %v2665
        %v2678 = vmul.f32 %v2656, %v2665
        %v2679 = vmul.f32 %v2657, %v2665
        %v2680 = vmul.f32 %v2658, %v2665
        %v2681 = vmul.f32 %v2659, %v2665
        %v2682 = vmul.f32 %v2660, %v2665
        %v2684 = vlaneseq
        %v2685 = vshrl.u32 %v2684, 7
        %v2686 = vsub.s32 0, %v2685
        %v2687 = vrot.slane %v2402, %v2686
        %v2689 = vadd.f32 %v2667, %v2687
        %v2690 = vadd.f32 %v2668, %v2687
        %v2691 = vadd.f32 %v2669, %v2687
        %v2692 = vadd.f32 %v2670, %v2687
        %v2693 = vadd.f32 %v2671, %v2687
        %v2694 = vadd.f32 %v2672, %v2687
        %v2695 = vadd.f32 %v2673, %v2687
        %v2696 = vadd.f32 %v2674, %v2687
        %v2697 = vadd.f32 %v2675, %v2687
        %v2698 = vadd.f32 %v2676, %v2687
        %v2699 = vadd.f32 %v2677, %v2687
        %v2700 = vadd.f32 %v2678, %v2687
        %v2701 = vadd.f32 %v2679, %v2687
        %v2702 = vadd.f32 %v2680, %v2687
        %v2703 = vadd.f32 %v2681, %v2687
        %v2704 = vadd.f32 %v2682, %v2687
        %v2705 = vld [vmem:[#allocation31] sm:$0xf]
        %v2706 = vld [vmem:[#allocation31 + $0x4] sm:$0xf]
        %v2707 = vld [vmem:[#allocation31 + $0x8] sm:$0xf]
        %v2708 = vld [vmem:[#allocation31 + $0xc] sm:$0xf]
        %v2709 = vld [vmem:[#allocation31 + $0x10] sm:$0xf]
        %v2710 = vld [vmem:[#allocation31 + $0x14] sm:$0xf]
        %v2711 = vld [vmem:[#allocation31 + $0x18] sm:$0xf]
        %v2712 = vld [vmem:[#allocation31 + $0x1c] sm:$0xf]
        %v2713 = vpack.c.bf16 %v2690, %v2689
        %v2714 = vpack.c.bf16 %v2692, %v2691
        %v2715 = vpack.c.bf16 %v2694, %v2693
        %v2716 = vpack.c.bf16 %v2696, %v2695
        %v2717 = vpack.c.bf16 %v2698, %v2697
        %v2718 = vpack.c.bf16 %v2700, %v2699
        %v2719 = vpack.c.bf16 %v2702, %v2701
        %v2720 = vpack.c.bf16 %v2704, %v2703
        %v2721 = vld [vmem:[#allocation32] sm:$0xff]
        %2723 = vset.pattern.permute.xlu0 0
        %2724 = vperm.xlu0 %2723, %v2721
        %v2725 = vpop.permute.xlu0 %2724
        %v2735 = vunpack.c.l.b16 %v2705
        %v2736 = vunpack.c.l.b16 %v2706
        %v2737 = vunpack.c.l.b16 %v2707
        %v2738 = vunpack.c.l.b16 %v2708
        %v2739 = vunpack.c.l.b16 %v2709
        %v2740 = vunpack.c.l.b16 %v2710
        %v2741 = vunpack.c.l.b16 %v2711
        %v2742 = vunpack.c.l.b16 %v2712
        %v2743 = vpack.c.b16 %v2736, %v2735
        %v2744 = vpack.c.b16 %v2738, %v2737
        %v2745 = vpack.c.b16 %v2740, %v2739
        %v2746 = vpack.c.b16 %v2742, %v2741
        %2751 = vxpose.xlu0.c.b16.start [1/8] %v2743, 128
        %2752 = vxpose.xlu0.c.b16.cont [2/8] %v2744, 128
        %2753 = vxpose.xlu0.c.b16.cont [3/8] %v2745, 128
        %2754 = vxpose.xlu0.c.b16.cont [4/8] %v2746, 128
        %2755 = vxpose.xlu0.c.b16.cont [5/8] 0, 128
        %2756 = vxpose.xlu0.c.b16.cont [6/8] 0, 128
        %2757 = vxpose.xlu0.c.b16.cont [7/8] 0, 128
        %2758 = vxpose.xlu0.c.b16.end [8/8] 0, 128
        %v2759 = vpop.trf.xlu0
        %v2760 = vpop.trf.xlu0
        %v2761 = vpop.trf.xlu0
        %v2762 = vpop.trf.xlu0
        %v2763 = vpop.trf.xlu0
        %v2764 = vpop.trf.xlu0
        %v2765 = vpop.trf.xlu0
        %v2766 = vpop.trf.xlu0
        %v2768 = vsel %vm2403, %v2759, 0
        %v2771 = vsel %vm2403, %v2713, 0
        %v2774 = vsel %vm2403, %v2714, 0
        %v2777 = vsel %vm2403, %v2715, 0
        %v2780 = vsel %vm2403, %v2716, 0
        %v2783 = vsel %vm2403, %v2717, 0
        %v2786 = vsel %vm2403, %v2718, 0
        %v2789 = vsel %vm2403, %v2719, 0
        %v2792 = vsel %vm2403, %v2720, 0
        %2794 = vmatprep.subr.bf16.mxu0 0
        %2795 = vmatpush1.bf16.xpose.msra.mxu0 %v2771
        %2796 = vmatprep.subr.bf16.mxu0 0
        %2797 = vmatpush1.bf16.xpose.msra.mxu0 %v2774
        %2798 = vmatprep.subr.bf16.mxu0 0
        %2799 = vmatpush1.bf16.xpose.msra.mxu0 %v2777
        %2800 = vmatprep.subr.bf16.mxu0 0
        %2801 = vmatpush1.bf16.xpose.msra.mxu0 %v2780
        %2802 = vmatprep.subr.bf16.mxu0 0
        %2803 = vmatpush1.bf16.xpose.msra.mxu0 %v2783
        %2804 = vmatprep.subr.bf16.mxu0 0
        %2805 = vmatpush1.bf16.xpose.msra.mxu0 %v2786
        %2806 = vmatprep.subr.bf16.mxu0 0
        %2807 = vmatpush1.bf16.xpose.msra.mxu0 %v2789
        %2808 = vmatprep.subr.bf16.mxu0 0
        %2809 = vmatpush1.bf16.xpose.msra.mxu0 %v2792
        %2810 = vmatprep.subr.bf16.mxu0 0
        %2811 = vmatpush1.bf16.xpose.msra.mxu0 0
        %2812 = vmatprep.subr.bf16.mxu0 0
        %2813 = vmatpush1.bf16.xpose.msra.mxu0 0
        %2814 = vmatprep.subr.bf16.mxu0 0
        %2815 = vmatpush1.bf16.xpose.msra.mxu0 0
        %2816 = vmatprep.subr.bf16.mxu0 0
        %2817 = vmatpush1.bf16.xpose.msra.mxu0 0
        %2818 = vmatprep.subr.bf16.mxu0 0
        %2819 = vmatpush1.bf16.xpose.msra.mxu0 0
        %2820 = vmatprep.subr.bf16.mxu0 0
        %2821 = vmatpush1.bf16.xpose.msra.mxu0 0
        %2822 = vmatprep.subr.bf16.mxu0 0
        %2823 = vmatpush1.bf16.xpose.msra.mxu0 0
        %2824 = vmatprep.subr.bf16.mxu0 0
        %2825 = vmatpush1.bf16.xpose.msra.mxu0 0
        %2826 = vmatprep.mubr.bf16.mxu0 0
        %2827 = vmatmul.mubr.bf16.gmra.mrb[0].mxu0 %v2768
        %v2828 = vpop.f32.mrb[0].mxu0
        %v2829 = vadd.f32 %v2725, %v2828
        %v2830 = vpop.f32.mrb[0].mxu0
        %v2831 = vpop.f32.mrb[0].mxu0
        %v2832 = vpop.f32.mrb[0].mxu0
        %2833 = vdwg.mxu0
        %vm2834 = vcmp.eq.f32.partialorder %v899, 0.0
        %v2835 = vsel %vm2834, 1, 0
        %v2836 = vlaneseq
        %v2837 = vshrl.u32 %v2836, 7
        %v2838 = vsub.s32 0, %v2837
        %v2839 = vrot.slane %v2835, %v2838
        %vm2840 = vcmp.eq.s32.totalorder %v2839, 1
        %v2841 = vsel %vm2840, -1e+09, %v2829
        %v2842 = vld [vmem:[#allocation2] sm:$0xff]
        %2843 = vmax.xlane.f32.xlu0 %v2841
        %v2844 = vpop.xlane.xlu0 %2843
        %v2845 = vmax.f32 %v2842, %v2844
        %v2846 = vsub.f32 %v2842, %v2845
        %v2847 = vmul.f32 %v2846, 1.442695
        %v2848 = vpow.pop %v2847
        %2850 = vset.pattern.permute.xlu0 0
        %2851 = vperm.xlu0 %2850, %v2845
        %v2852 = vpop.permute.xlu0 %2851
        %v2854 = vsub.f32 %v2841, %v2852
        %v2855 = vmul.f32 %v2854, 1.442695
        %v2856 = vpow.pop %v2855
        %v2857 = vld [vmem:[#allocation3] sm:$0xff]
        %v2858 = vmul.f32 %v2848, %v2857
        %2859 = vadd.xlane.f32.xlu0 %v2856
        %v2860 = vpop.xlane.xlu0 %2859
        %v2861 = vadd.f32 %v2858, %v2860
        %vm2862 = vcmask 7168
        %2863 = vst.msk [vmem:[#allocation3] sm:$0xff] %vm2862, %v2861
        %v2864 = vld [vmem:[#allocation4] sm:$0xff]
        %2866 = vset.pattern.permute.xlu0 0
        %2867 = vperm.xlu0 %2866, %v2848
        %v2868 = vpop.permute.xlu0 %2867
        %v2870 = vmul.f32 %v2868, %v2864
        %v2871 = vpack.c.bf16 %v2856, %v2856
        %2872 = vmatprep.subr.bf16.mxu0 0
        %2873 = vmatpush1.bf16.msra.mxu0 %v2201
        %2874 = vmatprep.subr.bf16.mxu0 0
        %2875 = vmatpush1.bf16.msra.mxu0 %v2202
        %2876 = vmatprep.subr.bf16.mxu0 0
        %2877 = vmatpush1.bf16.msra.mxu0 %v2203
        %2878 = vmatprep.subr.bf16.mxu0 0
        %2879 = vmatpush1.bf16.msra.mxu0 %v2204
        %2880 = vmatprep.subr.bf16.mxu0 0
        %2881 = vmatpush1.bf16.msra.mxu0 %v2205
        %2882 = vmatprep.subr.bf16.mxu0 0
        %2883 = vmatpush1.bf16.msra.mxu0 %v2206
        %2884 = vmatprep.subr.bf16.mxu0 0
        %2885 = vmatpush1.bf16.msra.mxu0 %v2207
        %2886 = vmatprep.subr.bf16.mxu0 0
        %2887 = vmatpush1.bf16.msra.mxu0 %v2208
        %2888 = vmatprep.subr.bf16.mxu0 0
        %2889 = vmatpush1.bf16.msra.mxu0 0
        %2890 = vmatprep.subr.bf16.mxu0 0
        %2891 = vmatpush1.bf16.msra.mxu0 0
        %2892 = vmatprep.subr.bf16.mxu0 0
        %2893 = vmatpush1.bf16.msra.mxu0 0
        %2894 = vmatprep.subr.bf16.mxu0 0
        %2895 = vmatpush1.bf16.msra.mxu0 0
        %2896 = vmatprep.subr.bf16.mxu0 0
        %2897 = vmatpush1.bf16.msra.mxu0 0
        %2898 = vmatprep.subr.bf16.mxu0 0
        %2899 = vmatpush1.bf16.msra.mxu0 0
        %2900 = vmatprep.subr.bf16.mxu0 0
        %2901 = vmatpush1.bf16.msra.mxu0 0
        %2902 = vmatprep.subr.bf16.mxu0 0
        %2903 = vmatpush1.bf16.msra.mxu0 0
        %2904 = vmatprep.mubr.bf16.mxu0 0
        %2905 = vmatmul.mubr.bf16.gmra.mrb[0].mxu0 %v2871
        %v2906 = vpop.f32.mrb[0].mxu0
        %v2907 = vadd.f32 0.0, %v2906
        %v2908 = vpop.f32.mrb[0].mxu0
        %v2909 = vpop.f32.mrb[0].mxu0
        %v2910 = vpop.f32.mrb[0].mxu0
        %2911 = vdwg.mxu0
        %v2912 = vadd.f32 %v2870, %v2907
        %2913 = vst.msk [vmem:[#allocation4] sm:$0xff] %vm1397, %v2912
        %2914 = vst.msk [vmem:[#allocation2] sm:$0xff] %vm2862, %v2845
        %p2915 = scmp.eq.s32.totalorder %s51, 1
        // Predicated region
        $region169: #{tpu_custom_call.1} parent=91 // pred_check
          %p2916 = pneg %p2915
        $region170: #{tpu_custom_call.1} parent=91 // pred_check_branch
          %2918 = sbr.rel (%p2916) target = $region172
        $region171: #{tpu_custom_call.1} parent=91 // pred_region
          %v2919 = vld [vmem:[#allocation4] sm:$0xff]
          %v2920 = vld [vmem:[#allocation3] sm:$0xff]
          %2922 = vset.pattern.permute.xlu0 0
          %2923 = vperm.xlu0 %2922, %v2920
          %v2924 = vpop.permute.xlu0 %2923
          %v2926 = vrcp.pop %v2924
          %v2927 = vmul.f32 %v2919, %v2926
          %v2928 = vpack.c.bf16 %v2927, %v2927
          %vm2929 = vcmask 257024
          %2930 = vst.msk [vmem:[%s855] sm:$0xf] %vm2929, %v2928
        $region172: #{tpu_custom_call.1} parent=91 // pred_fallthru
          _
        %s2931 = sand.u32 %s458, 1
        %s2932 = scalar_lea.sflag [#allocation7], %s2931
        %s2933 = sand.u32 %s458, 1
        %s2934 = smul.addr %s2933, 4
        %s2935 = scalar_lea.vmem [#allocation34], %s2934
        // Predicated region
        $region173: #{tpu_custom_call.1} parent=91 // pred_check
          %p2936 = pneg %p468
        $region174: #{tpu_custom_call.1} parent=91 // pred_check_branch
          %2938 = sbr.rel (%p2936) target = $region176
        $region175: #{tpu_custom_call.1} parent=91 // pred_region
          %s2940 = ssub.s32 64, 64
          %2941 = vsyncadd %s2932, %s2940
          %s2942 = smul.addr %s50, 64
          %s2943 = scalar_lea.hbm %s18, %s2942
          %s2945 = sshll.u32 %s2935, 4
          %s2946 = int_to_ptr.vmem [resolvable:$true] %s2945
          %2948 = dma.vmem_to_hbm [thread:$0]  %s2946, 64, %s2943, %s2932
        $region176: #{tpu_custom_call.1} parent=91 // pred_fallthru
          _
      $region92: #{tpu_custom_call.1} parent=5 // pred_fallthru
        _
      %p2949 = scmp.le.s32.totalorder 2, %s41
      // Predicated region
      $region177: #{tpu_custom_call.1} parent=5 // pred_check
        %p2950 = pneg %p2949
      $region178: #{tpu_custom_call.1} parent=5 // pred_check_branch
        %2952 = sbr.rel (%p2950) target = $region180
      $region179: #{tpu_custom_call.1} parent=5 // pred_region
        %s2953 = ssub.s32 %s41, 2
        // Predicated region
        $region181: #{tpu_custom_call.1} parent=179 // pred_check
          %p2954 = pneg %p474
        $region182: #{tpu_custom_call.1} parent=179 // pred_check_branch
          %2956 = sbr.rel (%p2954) target = $region184
        $region183: #{tpu_custom_call.1} parent=179 // pred_region
          %s2957 = sand.u32 %s459, 1
          %s2958 = scalar_lea.sflag [#allocation7], %s2957
          %s2959 = sand.u32 %s459, 1
          %s2960 = smul.addr %s2959, 4
          %s2961 = scalar_lea.vmem [#allocation34], %s2960
          %2962 = dma.done %s2958, 64
        $region184: #{tpu_custom_call.1} parent=179 // pred_fallthru
          _
      $region180: #{tpu_custom_call.1} parent=5 // pred_fallthru
        _
    $region6: #{tpu_custom_call.1} parent=1 // loop_footer
      %s45 = sadd.s32 1, %s41
    $region7: #{tpu_custom_call.1} parent=1 // loop_footer_branch
      %40 = sbr.rel target = $region3
    $region8: #{tpu_custom_call.1} parent=1 // loop_exit
      _
    %2963 = vsyncpa [#allocation6], 1
    %s2964 = scalar_lea.sflag [#allocation6], 1
    %2965 = vsyncpa %s2964, 1
    %2966 = vsyncpa [#allocation9], 1
    %s2967 = scalar_lea.sflag [#allocation9], 1
    %2968 = vsyncpa %s2967, 1
    %2969 = vsyncpa [#allocation12], 1
    %2970 = vsyncpa [#allocation15], 1
    %2971 = vsyncpa [#allocation18], 1
    %2972 = vsyncpa [#allocation21], 1
    %2973 = vsyncpa [#allocation24], 1
    %2974 = vsyncpa [#allocation27], 1
    %2975 = vsyncpa [#allocation30], 1
    %2976 = vsyncpa [#allocation33], 1
    %2977 = vsyncpa [#allocation7], 1
    %s2978 = scalar_lea.sflag [#allocation7], 1
    %2979 = vsyncpa %s2978, 1

</llo_original>
